<compile_context>
chip_gen: v7x
topology: tpu7x:2x2x1
jax: 0.10.0
libtpu: 0.0.40
codegen_flags: <defaults>
</compile_context>

<pallas_src>
import math
import functools

import jax
import jax.numpy as jnp
import numpy as np
from jax.experimental import pallas as pl
from jax.experimental.pallas import tpu as pltpu


# ----------------------------- small config ---------------------------------
class SmallConfig:
    bs = 2
    seq_len = 8
    d_model = 32
    d_embed = 32
    n_heads = 4
    d_head = d_embed // n_heads      # 8
    d_c = 16
    d_c_ = 16
    d_rotate = 8
    dropout = 0.1                    # eval-mode -> identity


# ----------------------------- helpers ---------------------------------------
def _layernorm(v, g, b, eps=1e-5):
    mu = jnp.mean(v, axis=-1, keepdims=True)
    var = jnp.mean((v - mu) ** 2, axis=-1, keepdims=True)
    return (v - mu) * jax.lax.rsqrt(var + eps) * g + b


def _gelu_tanh(v):
    c = math.sqrt(2.0 / math.pi)
    return 0.5 * v * (1.0 + jnp.tanh(c * (v + 0.044715 * v * v * v)))


def _softmax_ref(a):
    m = jnp.max(a, axis=-1, keepdims=True)
    e = jnp.exp(a - m)
    return e / jnp.sum(e, axis=-1, keepdims=True)


def _rope_interleaved(v, cos, sin):
    # reference-only interleaved RoPE (matches torch view_as_complex path)
    half = v.shape[-1] // 2
    vr = v.reshape(v.shape[:-1] + (half, 2))
    v0, v1 = vr[..., 0], vr[..., 1]
    o0 = v0 * cos - v1 * sin
    o1 = v0 * sin + v1 * cos
    return jnp.stack([o0, o1], axis=-1).reshape(v.shape)


# ----------------------------- Pallas kernel ---------------------------------
def block_kernel(x_ref, w_attn_ref, w_out_ref, vec_ref, rope_ref, out_ref,
                 *, S, D, H, DH, DR, DC, DCq, DE):
    """One grid step == one batch element's (S, D) slab."""
    f32 = jnp.float32
    half = DR // 2
    Hh = H * half
    WA = w_attn_ref.shape[1]          # padded fused-attention width
    WQ = DE + H * DR                  # [uq | qr] width
    WKV = 2 * DE                      # [uk | uv] width

    x = x_ref[...]                    # (S, D)

    # ---- packed per-row params (all at lane offset 0) -----------------------
    ln1_g = vec_ref[0:1, :D]
    ln1_b = vec_ref[1:2, :D]
    b_h   = vec_ref[2:3, :WA]
    b_q   = vec_ref[3:4, :WQ]
    b_kv  = vec_ref[4:5, :WKV]
    o_b   = vec_ref[5:6, :D]
    ln2_g = vec_ref[6:7, :D]
    ln2_b = vec_ref[7:8, :D]
    fc_b  = vec_ref[8:9, :4 * DE]
    pj_b  = vec_ref[9:10, :D]

    # ---- packed weights (sublane row slices, 8-aligned offsets) -------------
    w_h  = w_attn_ref[0:D, :]                          # (D, WA) zero-padded
    w_q  = w_attn_ref[D:D + DCq, :WQ]                  # (DCq, DE + H*DR)
    w_kv = w_attn_ref[D + DCq:D + DCq + DC, :WKV]      # (DC, 2*DE)
    o_w  = w_out_ref[0:DE, :D]                         # (DE, D)
    fc_w = w_out_ref[DE:2 * DE, :4 * DE]               # (DE, 4*DE)
    pj_w = w_out_ref[2 * DE:6 * DE, :D]                # (4*DE, D)

    # ---- ln1 + fused down/up projections ------------------------------------
    h = _layernorm(x, ln1_g, ln1_b)
    hp = jnp.dot(h, w_h, preferred_element_type=f32) + b_h      # (S, WA)
    c_q  = hp[:, :DCq]
    c_kv = hp[:, DCq:DCq + DC]
    k_r  = hp[:, DCq + DC:DCq + DC + DR]                         # [e|o] layout

    qp  = jnp.dot(c_q, w_q, preferred_element_type=f32) + b_q    # (S, DE+H*DR)
    kvp = jnp.dot(c_kv, w_kv, preferred_element_type=f32) + b_kv # (S, 2*DE)

    q_c = qp[:, :DE].reshape(S, H, DH)            # pre-scaled by 1/sqrt(DH+DR)
    k_c = kvp[:, :DE].reshape(S, H, DH)
    v_c = kvp[:, DE:].reshape(S, H, DH)

    # ---- flat RoPE (pure 2-D elementwise; cos/sin pre-tiled per head) -------
    cos_t = rope_ref[:, :Hh]                      # (S, H*half)
    sin_t = rope_ref[:, Hh:]
    q_e = qp[:, DE:DE + Hh]                       # all heads, even components
    q_o = qp[:, DE + Hh:]                         # all heads, odd components
    qe = q_e * cos_t - q_o * sin_t
    qo = q_o * cos_t + q_e * sin_t
    cos_k = cos_t[:, :half]                       # head-0 tile == raw cos/sin
    sin_k = sin_t[:, :half]
    k_e = k_r[:, :half]
    k_o = k_r[:, half:]
    ke = k_e * cos_k - k_o * sin_k
    ko = k_o * cos_k + k_e * sin_k

    # ---- attention: decomposed score, single d=DR rotary contraction --------
    q_rot = jnp.concatenate([qe.reshape(S, H, half),
                             qo.reshape(S, H, half)], axis=-1)   # (S, H, DR)
    k_rot = jnp.concatenate([ke, ko], axis=-1)                   # (S, DR)

    s = jnp.einsum('qhd,khd->hqk', q_c, k_c, preferred_element_type=f32)
    s = s + jnp.einsum('qhd,kd->hqk', q_rot, k_rot, preferred_element_type=f32)
    # TODO(synk): optional additive mask path (mask=None in this demo) goes
    # here: s = s + mask, before the softmax / running-max update.

    m = jnp.max(s, axis=-1, keepdims=True)
    e = jnp.exp(s - m)
    p = e * pl.reciprocal(jnp.sum(e, axis=-1, keepdims=True), approx=True)

    ctx = jnp.einsum('hqk,khd->qhd', p, v_c,
                     preferred_element_type=f32).reshape(S, H * DH)
    attn_out = jnp.dot(ctx, o_w, preferred_element_type=f32) + o_b
    x1 = x + attn_out

    # ---- ln2 + MLP -----------------------------------------------------------
    h2 = _layernorm(x1, ln2_g, ln2_b)
    mlp = jnp.dot(h2, fc_w, preferred_element_type=f32) + fc_b
    mlp = _gelu_tanh(mlp)
    mlp = jnp.dot(mlp, pj_w, preferred_element_type=f32) + pj_b

    # TODO(synk): dropout omitted (eval-mode identity); training-mode dropout
    # would use pltpu.prng_seed + pltpu.prng_random_bits.
    out_ref[...] = x1 + mlp                       # natural (S, D) store


# ----------------------------- wrapper ---------------------------------------
def _pad_cols(a, width):
    return jnp.pad(a, ((0, 0), (0, width - a.shape[1])))


def run_block(x, params, cos, sin, cfg):
    (ln1_g, ln1_b, dkv_w, dkv_b, dq_w, dq_b, uk_w, uk_b, uv_w, uv_b,
     uq_w, uq_b, qr_w, qr_b, kr_w, kr_b, o_w, o_b, ln2_g, ln2_b,
     fc_w, fc_b, pj_w, pj_b) = params
    B, S, D = x.shape
    H, DH, DR = cfg.n_heads, cfg.d_head, cfg.d_rotate
    DC, DCq, DE = cfg.d_c, cfg.d_c_, cfg.d_embed
    half = DR // 2
    Hh = H * half
    scale = 1.0 / math.sqrt(DH + DR)

    # ---- wrapper-side weight plumbing ---------------------------------------
    # kr: split-half column permutation ([even dims | odd dims]).
    perm_k = np.concatenate([np.arange(0, DR, 2), np.arange(1, DR, 2)])
    # qr: [all heads' even dims | all heads' odd dims], head-major within each.
    perm_q = np.concatenate([
        np.array([h * DR + 2 * j for h in range(H) for j in range(half)]),
        np.array([h * DR + 2 * j + 1 for h in range(H) for j in range(half)])])

    w_h = jnp.concatenate([dq_w, dkv_w, kr_w[:, perm_k]], axis=1)   # (D, DCq+DC+DR)
    b_h = jnp.concatenate([dq_b, dkv_b, kr_b[:, perm_k]], axis=1)
    w_qf = jnp.concatenate([uq_w, qr_w[:, perm_q]], axis=1) * scale  # (DCq, DE+H*DR)
    b_qf = jnp.concatenate([uq_b, qr_b[:, perm_q]], axis=1) * scale
    w_kvf = jnp.concatenate([uk_w, uv_w], axis=1)                    # (DC, 2*DE)
    b_kvf = jnp.concatenate([uk_b, uv_b], axis=1)

    # Pack all attention projection weights into one grid-invariant operand.
    WA = max(DCq + DC + DR, DE + H * DR, 2 * DE)                     # 64
    w_attn = jnp.concatenate([_pad_cols(w_h, WA),
                              _pad_cols(w_qf, WA),
                              _pad_cols(w_kvf, WA)], axis=0)         # (D+DCq+DC, WA)

    # Pack o_proj / c_fc / c_proj into a second grid-invariant operand.
    WO = max(4 * DE, D)                                              # 128
    w_out = jnp.concatenate([_pad_cols(o_w, WO),
                             _pad_cols(fc_w, WO),
                             _pad_cols(pj_w, WO)], axis=0)           # (6*DE, WO)

    # Pack every gain/bias into one (10, 128) row-packed array.
    VW = max(WO, WA, D)
    vec_rows = [ln1_g, ln1_b, b_h, b_qf, b_kvf, o_b, ln2_g, ln2_b, fc_b, pj_b]
    vec_pack = jnp.concatenate([_pad_cols(r, VW) for r in vec_rows], axis=0)

    # cos/sin pre-tiled per head, lane-dense: (S, 2*H*half).
    rope_pack = jnp.concatenate([jnp.tile(cos, (1, H)),
                                 jnp.tile(sin, (1, H))], axis=1)

    x_flat = x.reshape(B * S, D)

    kernel = functools.partial(block_kernel, S=S, D=D, H=H, DH=DH,
                               DR=DR, DC=DC, DCq=DCq, DE=DE)

    out = pl.pallas_call(
        kernel,
        out_shape=jax.ShapeDtypeStruct((B * S, D), jnp.float32),
        grid=(B,),                                # batch grid axis
        in_specs=[
            pl.BlockSpec((S, D), lambda b: (b, 0)),                   # x slab
            pl.BlockSpec(w_attn.shape, lambda b: (0, 0)),             # resident
            pl.BlockSpec(w_out.shape, lambda b: (0, 0)),              # resident
            pl.BlockSpec(vec_pack.shape, lambda b: (0, 0)),           # resident
            pl.BlockSpec(rope_pack.shape, lambda b: (0, 0)),          # resident
        ],
        out_specs=pl.BlockSpec((S, D), lambda b: (b, 0)),
        compiler_params=pltpu.CompilerParams(
            dimension_semantics=("parallel",),     # shards steps over v7x TCs
            vmem_limit_bytes=32 * 1024 * 1024),
    )(x_flat, w_attn, w_out, vec_pack, rope_pack)
    return out.reshape(B, S, D)


# ----------------------------- pure-JAX reference ----------------------------
def block_ref(x, params, cos, sin, cfg):
    (ln1_g, ln1_b, dkv_w, dkv_b, dq_w, dq_b, uk_w, uk_b, uv_w, uv_b,
     uq_w, uq_b, qr_w, qr_b, kr_w, kr_b, o_w, o_b, ln2_g, ln2_b,
     fc_w, fc_b, pj_w, pj_b) = params
    B, S, D = x.shape
    H, DH, DR = cfg.n_heads, cfg.d_head, cfg.d_rotate

    h = _layernorm(x, ln1_g, ln1_b)
    c_q = h @ dq_w + dq_b
    c_kv = h @ dkv_w + dkv_b
    k_r = h @ kr_w + kr_b
    q_c = (c_q @ uq_w + uq_b).reshape(B, S, H, DH)
    k_c = (c_kv @ uk_w + uk_b).reshape(B, S, H, DH)
    v_c = (c_kv @ uv_w + uv_b).reshape(B, S, H, DH)
    q_r = (c_q @ qr_w + qr_b).reshape(B, S, H, DR)
    q_r = _rope_interleaved(q_r, cos[None, :, None, :], sin[None, :, None, :])
    k_r = _rope_interleaved(k_r, cos[None, :, :], sin[None, :, :])
    k_r = jnp.broadcast_to(k_r[:, :, None, :], (B, S, H, DR))
    q_t = jnp.concatenate([q_c, q_r], axis=-1)
    k_t = jnp.concatenate([k_c, k_r], axis=-1)
    attn = jnp.einsum('bqhd,bkhd->bhqk', q_t, k_t) / math.sqrt(DH + DR)
    attn = _softmax_ref(attn)
    ctx = jnp.einsum('bhqk,bkhd->bqhd', attn, v_c).reshape(B, S, H * DH)
    x1 = x + (ctx @ o_w + o_b)
    h2 = _layernorm(x1, ln2_g, ln2_b)
    m = _gelu_tanh(h2 @ fc_w + fc_b) @ pj_w + pj_b
    return x1 + m


# ----------------------------- param init ------------------------------------
def init_params(key, cfg):
    D, DE, DC, DC_, DR, H = (cfg.d_model, cfg.d_embed, cfg.d_c, cfg.d_c_,
                             cfg.d_rotate, cfg.n_heads)

    def lin(k, n_in, n_out):
        return (0.02 * jax.random.normal(k, (n_in, n_out), jnp.float32),
                jnp.zeros((1, n_out), jnp.float32))

    keys = jax.random.split(key, 11)
    params = []
    params += [jnp.ones((1, D), jnp.float32), jnp.zeros((1, D), jnp.float32)]   # ln1
    params += lin(keys[0], D, DC)            # dkv_proj
    params += lin(keys[1], D, DC_)           # dq_proj
    params += lin(keys[2], DC, DE)           # uk_proj
    params += lin(keys[3], DC, DE)           # uv_proj
    params += lin(keys[4], DC_, DE)          # uq_proj
    params += lin(keys[5], DC_, DR * H)      # qr_proj
    params += lin(keys[6], D, DR)            # kr_proj
    params += lin(keys[7], DE, D)            # o_proj
    params += [jnp.ones((1, D), jnp.float32), jnp.zeros((1, D), jnp.float32)]   # ln2
    params += lin(keys[8], DE, 4 * DE)       # c_fc
    params += lin(keys[9], 4 * DE, D)        # c_proj
    return params


def precompute_cos_sin(dim, end, theta=10000.0):
    freqs = 1.0 / theta ** (np.arange(0, dim, 2)[: dim // 2].astype(np.float32) / dim)
    t = np.arange(end, dtype=np.float32)
    f = np.outer(t, freqs).astype(np.float32)            # (end, dim//2)
    return jnp.asarray(np.cos(f)), jnp.asarray(np.sin(f))


# ----------------------------- main -------------------------------------------
if __name__ == "__main__":
    cfg = SmallConfig()
    key = jax.random.PRNGKey(0)
    kx, kp = jax.random.split(key)

    x = jax.random.normal(kx, (cfg.bs, cfg.seq_len, cfg.d_model), jnp.float32)
    params = init_params(kp, cfg)
    cos_full, sin_full = precompute_cos_sin(cfg.d_rotate, cfg.seq_len * 2)
    cos, sin = cos_full[: cfg.seq_len], sin_full[: cfg.seq_len]

    out = run_block(x, params, cos, sin, cfg)
    out = jax.block_until_ready(out)

    ref = block_ref(x, params, cos, sin, cfg)
    np.testing.assert_allclose(np.asarray(out), np.asarray(ref),
                               rtol=1e-4, atol=1e-4)

    print("KERNEL_OK")
</pallas_src>

<mosaic_0001>
module attributes {stable_mosaic.version = 11 : i64} {
  func.func @block_kernel(%arg0: i32, %arg1: memref<8x32xf32, #tpu.memory_space<vmem>>, %arg2: memref<64x64xf32, #tpu.memory_space<vmem>>, %arg3: memref<192x128xf32, #tpu.memory_space<vmem>>, %arg4: memref<10x128xf32, #tpu.memory_space<vmem>>, %arg5: memref<8x32xf32, #tpu.memory_space<vmem>>, %arg6: memref<8x32xf32, #tpu.memory_space<vmem>>) attributes {dimension_semantics = [#tpu.dimension_semantics<parallel>], iteration_bounds = array<i64: 2>, scalar_prefetch = 0 : i64, scratch_operands = 0 : i64, tpu.core_type = #tpu.core_type<tc>, window_params = [{transform_indices = @transform_0, window_bounds = array<i64: 8, 32>}, {pipeline_mode = #tpu.pipeline_mode<synchronous>, transform_indices = @transform_1, window_bounds = array<i64: 64, 64>}, {pipeline_mode = #tpu.pipeline_mode<synchronous>, transform_indices = @transform_2, window_bounds = array<i64: 192, 128>}, {pipeline_mode = #tpu.pipeline_mode<synchronous>, transform_indices = @transform_3, window_bounds = array<i64: 10, 128>}, {pipeline_mode = #tpu.pipeline_mode<synchronous>, transform_indices = @transform_4, window_bounds = array<i64: 8, 32>}, {transform_indices = @transform_5, window_bounds = array<i64: 8, 32>}]} {
    %c0 = arith.constant 0 : index
    %c0_0 = arith.constant 0 : index
    %0 = vector.load %arg1[%c0, %c0_0] : memref<8x32xf32, #tpu.memory_space<vmem>>, vector<8x32xf32>
    %c0_1 = arith.constant 0 : index
    %c0_2 = arith.constant 0 : index
    %1 = vector.load %arg4[%c0_1, %c0_2] : memref<10x128xf32, #tpu.memory_space<vmem>>, vector<1x32xf32>
    %c1 = arith.constant 1 : index
    %c0_3 = arith.constant 0 : index
    %2 = vector.load %arg4[%c1, %c0_3] : memref<10x128xf32, #tpu.memory_space<vmem>>, vector<1x32xf32>
    %c2 = arith.constant 2 : index
    %c0_4 = arith.constant 0 : index
    %3 = vector.load %arg4[%c2, %c0_4] : memref<10x128xf32, #tpu.memory_space<vmem>>, vector<1x64xf32>
    %c3 = arith.constant 3 : index
    %c0_5 = arith.constant 0 : index
    %4 = vector.load %arg4[%c3, %c0_5] : memref<10x128xf32, #tpu.memory_space<vmem>>, vector<1x64xf32>
    %c4 = arith.constant 4 : index
    %c0_6 = arith.constant 0 : index
    %5 = vector.load %arg4[%c4, %c0_6] : memref<10x128xf32, #tpu.memory_space<vmem>>, vector<1x64xf32>
    %c5 = arith.constant 5 : index
    %c0_7 = arith.constant 0 : index
    %6 = vector.load %arg4[%c5, %c0_7] : memref<10x128xf32, #tpu.memory_space<vmem>>, vector<1x32xf32>
    %c6 = arith.constant 6 : index
    %c0_8 = arith.constant 0 : index
    %7 = vector.load %arg4[%c6, %c0_8] : memref<10x128xf32, #tpu.memory_space<vmem>>, vector<1x32xf32>
    %c7 = arith.constant 7 : index
    %c0_9 = arith.constant 0 : index
    %8 = vector.load %arg4[%c7, %c0_9] : memref<10x128xf32, #tpu.memory_space<vmem>>, vector<1x32xf32>
    %c8 = arith.constant 8 : index
    %c0_10 = arith.constant 0 : index
    %9 = vector.load %arg4[%c8, %c0_10] : memref<10x128xf32, #tpu.memory_space<vmem>>, vector<1x128xf32>
    %c9 = arith.constant 9 : index
    %c0_11 = arith.constant 0 : index
    %10 = vector.load %arg4[%c9, %c0_11] : memref<10x128xf32, #tpu.memory_space<vmem>>, vector<1x32xf32>
    %c0_12 = arith.constant 0 : index
    %c0_13 = arith.constant 0 : index
    %11 = vector.load %arg2[%c0_12, %c0_13] : memref<64x64xf32, #tpu.memory_space<vmem>>, vector<32x64xf32>
    %c32 = arith.constant 32 : index
    %c0_14 = arith.constant 0 : index
    %12 = vector.load %arg2[%c32, %c0_14] : memref<64x64xf32, #tpu.memory_space<vmem>>, vector<16x64xf32>
    %c48 = arith.constant 48 : index
    %c0_15 = arith.constant 0 : index
    %13 = vector.load %arg2[%c48, %c0_15] : memref<64x64xf32, #tpu.memory_space<vmem>>, vector<16x64xf32>
    %c0_16 = arith.constant 0 : index
    %c0_17 = arith.constant 0 : index
    %14 = vector.load %arg3[%c0_16, %c0_17] : memref<192x128xf32, #tpu.memory_space<vmem>>, vector<32x32xf32>
    %c32_18 = arith.constant 32 : index
    %c0_19 = arith.constant 0 : index
    %15 = vector.load %arg3[%c32_18, %c0_19] : memref<192x128xf32, #tpu.memory_space<vmem>>, vector<32x128xf32>
    %c64 = arith.constant 64 : index
    %c0_20 = arith.constant 0 : index
    %16 = vector.load %arg3[%c64, %c0_20] : memref<192x128xf32, #tpu.memory_space<vmem>>, vector<128x32xf32>
    %cst = arith.constant dense<0.000000e+00> : vector<8xf32>
    %17 = vector.multi_reduction <add>, %0, %cst [1] : vector<8x32xf32> to vector<8xf32>
    %18 = vector.shape_cast %17 : vector<8xf32> to vector<8x1xf32>
    %cst_21 = arith.constant 3.200000e+01 : f32
    %19 = vector.broadcast %cst_21 : f32 to vector<8x1xf32>
    %20 = arith.divf %18, %19 : vector<8x1xf32>
    %21 = vector.broadcast %20 : vector<8x1xf32> to vector<8x32xf32>
    %22 = arith.subf %0, %21 : vector<8x32xf32>
    %23 = arith.mulf %22, %22 : vector<8x32xf32>
    %cst_22 = arith.constant dense<0.000000e+00> : vector<8xf32>
    %24 = vector.multi_reduction <add>, %23, %cst_22 [1] : vector<8x32xf32> to vector<8xf32>
    %25 = vector.shape_cast %24 : vector<8xf32> to vector<8x1xf32>
    %cst_23 = arith.constant 3.200000e+01 : f32
    %26 = vector.broadcast %cst_23 : f32 to vector<8x1xf32>
    %27 = arith.divf %25, %26 : vector<8x1xf32>
    %28 = vector.broadcast %20 : vector<8x1xf32> to vector<8x32xf32>
    %29 = arith.subf %0, %28 : vector<8x32xf32>
    %cst_24 = arith.constant 9.99999974E-6 : f32
    %30 = vector.broadcast %cst_24 : f32 to vector<8x1xf32>
    %31 = arith.addf %27, %30 : vector<8x1xf32>
    %32 = math.rsqrt %31 : vector<8x1xf32>
    %33 = vector.broadcast %32 : vector<8x1xf32> to vector<8x32xf32>
    %34 = arith.mulf %29, %33 : vector<8x32xf32>
    %35 = vector.broadcast %1 : vector<1x32xf32> to vector<8x32xf32>
    %36 = arith.mulf %34, %35 : vector<8x32xf32>
    %37 = vector.broadcast %2 : vector<1x32xf32> to vector<8x32xf32>
    %38 = arith.addf %36, %37 : vector<8x32xf32>
    %cst_25 = arith.constant dense<0.000000e+00> : vector<8x64xf32>
    %39 = tpu.matmul %38, %11, %cst_25 {dimension_numbers = #tpu.dot_dimension_numbers<[1], [0], [0], [1], [0, 0, 1, 1], [], []>} : vector<8x32xf32>, vector<32x64xf32>, vector<8x64xf32> -> vector<8x64xf32>
    %40 = vector.broadcast %3 : vector<1x64xf32> to vector<8x64xf32>
    %41 = arith.addf %39, %40 : vector<8x64xf32>
    %42 = vector.extract_strided_slice %41 {offsets = [0, 0], sizes = [8, 16], strides = [1, 1]} : vector<8x64xf32> to vector<8x16xf32>
    %43 = vector.extract_strided_slice %41 {offsets = [0, 16], sizes = [8, 16], strides = [1, 1]} : vector<8x64xf32> to vector<8x16xf32>
    %44 = vector.extract_strided_slice %41 {offsets = [0, 32], sizes = [8, 8], strides = [1, 1]} : vector<8x64xf32> to vector<8x8xf32>
    %cst_26 = arith.constant dense<0.000000e+00> : vector<8x64xf32>
    %45 = tpu.matmul %42, %12, %cst_26 {dimension_numbers = #tpu.dot_dimension_numbers<[1], [0], [0], [1], [0, 0, 1, 1], [], []>} : vector<8x16xf32>, vector<16x64xf32>, vector<8x64xf32> -> vector<8x64xf32>
    %46 = vector.broadcast %4 : vector<1x64xf32> to vector<8x64xf32>
    %47 = arith.addf %45, %46 : vector<8x64xf32>
    %cst_27 = arith.constant dense<0.000000e+00> : vector<8x64xf32>
    %48 = tpu.matmul %43, %13, %cst_27 {dimension_numbers = #tpu.dot_dimension_numbers<[1], [0], [0], [1], [0, 0, 1, 1], [], []>} : vector<8x16xf32>, vector<16x64xf32>, vector<8x64xf32> -> vector<8x64xf32>
    %49 = vector.broadcast %5 : vector<1x64xf32> to vector<8x64xf32>
    %50 = arith.addf %48, %49 : vector<8x64xf32>
    %51 = vector.extract_strided_slice %47 {offsets = [0, 0], sizes = [8, 32], strides = [1, 1]} : vector<8x64xf32> to vector<8x32xf32>
    %52 = vector.shape_cast %51 : vector<8x32xf32> to vector<8x4x8xf32>
    %53 = vector.extract_strided_slice %50 {offsets = [0, 0], sizes = [8, 32], strides = [1, 1]} : vector<8x64xf32> to vector<8x32xf32>
    %54 = vector.shape_cast %53 : vector<8x32xf32> to vector<8x4x8xf32>
    %55 = vector.extract_strided_slice %50 {offsets = [0, 32], sizes = [8, 32], strides = [1, 1]} : vector<8x64xf32> to vector<8x32xf32>
    %56 = vector.shape_cast %55 : vector<8x32xf32> to vector<8x4x8xf32>
    %c0_28 = arith.constant 0 : index
    %c0_29 = arith.constant 0 : index
    %57 = vector.load %arg5[%c0_28, %c0_29] : memref<8x32xf32, #tpu.memory_space<vmem>>, vector<8x16xf32>
    %c0_30 = arith.constant 0 : index
    %c16 = arith.constant 16 : index
    %58 = vector.load %arg5[%c0_30, %c16] : memref<8x32xf32, #tpu.memory_space<vmem>>, vector<8x16xf32>
    %59 = vector.extract_strided_slice %47 {offsets = [0, 32], sizes = [8, 16], strides = [1, 1]} : vector<8x64xf32> to vector<8x16xf32>
    %60 = vector.extract_strided_slice %47 {offsets = [0, 48], sizes = [8, 16], strides = [1, 1]} : vector<8x64xf32> to vector<8x16xf32>
    %61 = arith.mulf %59, %57 : vector<8x16xf32>
    %62 = arith.mulf %60, %58 : vector<8x16xf32>
    %63 = arith.subf %61, %62 : vector<8x16xf32>
    %64 = arith.mulf %60, %57 : vector<8x16xf32>
    %65 = arith.mulf %59, %58 : vector<8x16xf32>
    %66 = arith.addf %64, %65 : vector<8x16xf32>
    %67 = vector.extract_strided_slice %57 {offsets = [0, 0], sizes = [8, 4], strides = [1, 1]} : vector<8x16xf32> to vector<8x4xf32>
    %68 = vector.extract_strided_slice %58 {offsets = [0, 0], sizes = [8, 4], strides = [1, 1]} : vector<8x16xf32> to vector<8x4xf32>
    %69 = vector.extract_strided_slice %44 {offsets = [0, 0], sizes = [8, 4], strides = [1, 1]} : vector<8x8xf32> to vector<8x4xf32>
    %70 = vector.extract_strided_slice %44 {offsets = [0, 4], sizes = [8, 4], strides = [1, 1]} : vector<8x8xf32> to vector<8x4xf32>
    %71 = arith.mulf %69, %67 : vector<8x4xf32>
    %72 = arith.mulf %70, %68 : vector<8x4xf32>
    %73 = arith.subf %71, %72 : vector<8x4xf32>
    %74 = arith.mulf %70, %67 : vector<8x4xf32>
    %75 = arith.mulf %69, %68 : vector<8x4xf32>
    %76 = arith.addf %74, %75 : vector<8x4xf32>
    %77 = vector.shape_cast %63 : vector<8x16xf32> to vector<8x4x4xf32>
    %78 = vector.shape_cast %66 : vector<8x16xf32> to vector<8x4x4xf32>
    %79 = tpu.concatenate %77, %78 in 2 : vector<8x4x4xf32>, vector<8x4x4xf32> -> vector<8x4x8xf32>
    %80 = tpu.concatenate %73, %76 in 1 : vector<8x4xf32>, vector<8x4xf32> -> vector<8x8xf32>
    "tpu.trace_start"() <{level = 10 : i32, message = "qhd,khd->hqk"}> : () -> ()
    %cst_31 = arith.constant dense<0.000000e+00> : vector<4x8x8xf32>
    %81 = tpu.matmul %52, %54, %cst_31 {dimension_numbers = #tpu.dot_dimension_numbers<[2], [2], [0], [0], [0, 1, 0, 0, 1, 0], [1], [1]>} : vector<8x4x8xf32>, vector<8x4x8xf32>, vector<4x8x8xf32> -> vector<4x8x8xf32>
    "tpu.trace_stop"() : () -> ()
    "tpu.trace_start"() <{level = 10 : i32, message = "qhd,kd->hqk"}> : () -> ()
    %cst_32 = arith.constant dense<0.000000e+00> : vector<8x8x4xf32>
    %82 = tpu.matmul %80, %79, %cst_32 {dimension_numbers = #tpu.dot_dimension_numbers<[1], [2], [0], [0, 1], [0, 0, 1, 0, 1, 1], [], []>} : vector<8x8xf32>, vector<8x4x8xf32>, vector<8x8x4xf32> -> vector<8x8x4xf32>
    %83 = tpu.transpose %82, [2, 1, 0] : vector<8x8x4xf32> -> vector<4x8x8xf32>
    "tpu.trace_stop"() : () -> ()
    %84 = arith.addf %81, %83 : vector<4x8x8xf32>
    %cst_33 = arith.constant dense<0xFF800000> : vector<4x8xf32>
    %85 = vector.multi_reduction <maximumf>, %84, %cst_33 [2] : vector<4x8x8xf32> to vector<4x8xf32>
    %86 = vector.shape_cast %85 : vector<4x8xf32> to vector<4x8x1xf32>
    %87 = vector.broadcast %86 : vector<4x8x1xf32> to vector<4x8x8xf32>
    %88 = arith.subf %84, %87 : vector<4x8x8xf32>
    %89 = math.exp %88 : vector<4x8x8xf32>
    %cst_34 = arith.constant dense<0.000000e+00> : vector<4x8xf32>
    %90 = vector.multi_reduction <add>, %89, %cst_34 [2] : vector<4x8x8xf32> to vector<4x8xf32>
    %91 = vector.shape_cast %90 : vector<4x8xf32> to vector<4x8x1xf32>
    %92 = tpu.reciprocal %91 {approx = true} : vector<4x8x1xf32> -> vector<4x8x1xf32>
    %93 = vector.broadcast %92 : vector<4x8x1xf32> to vector<4x8x8xf32>
    %94 = arith.mulf %89, %93 : vector<4x8x8xf32>
    "tpu.trace_start"() <{level = 10 : i32, message = "hqk,khd->qhd"}> : () -> ()
    %cst_35 = arith.constant dense<0.000000e+00> : vector<4x8x8xf32>
    %95 = tpu.matmul %56, %94, %cst_35 {dimension_numbers = #tpu.dot_dimension_numbers<[0], [2], [2], [1], [0, 1, 0, 2, 1, 1], [1], [0]>} : vector<8x4x8xf32>, vector<4x8x8xf32>, vector<4x8x8xf32> -> vector<4x8x8xf32>
    %96 = tpu.transpose %95, [2, 0, 1] : vector<4x8x8xf32> -> vector<8x4x8xf32>
    "tpu.trace_stop"() : () -> ()
    %97 = vector.shape_cast %96 : vector<8x4x8xf32> to vector<8x32xf32>
    %cst_36 = arith.constant dense<0.000000e+00> : vector<8x32xf32>
    %98 = tpu.matmul %97, %14, %cst_36 {dimension_numbers = #tpu.dot_dimension_numbers<[1], [0], [0], [1], [0, 0, 1, 1], [], []>} : vector<8x32xf32>, vector<32x32xf32>, vector<8x32xf32> -> vector<8x32xf32>
    %99 = vector.broadcast %6 : vector<1x32xf32> to vector<8x32xf32>
    %100 = arith.addf %98, %99 : vector<8x32xf32>
    %101 = arith.addf %0, %100 : vector<8x32xf32>
    %cst_37 = arith.constant dense<0.000000e+00> : vector<8xf32>
    %102 = vector.multi_reduction <add>, %101, %cst_37 [1] : vector<8x32xf32> to vector<8xf32>
    %103 = vector.shape_cast %102 : vector<8xf32> to vector<8x1xf32>
    %cst_38 = arith.constant 3.200000e+01 : f32
    %104 = vector.broadcast %cst_38 : f32 to vector<8x1xf32>
    %105 = arith.divf %103, %104 : vector<8x1xf32>
    %106 = vector.broadcast %105 : vector<8x1xf32> to vector<8x32xf32>
    %107 = arith.subf %101, %106 : vector<8x32xf32>
    %108 = arith.mulf %107, %107 : vector<8x32xf32>
    %cst_39 = arith.constant dense<0.000000e+00> : vector<8xf32>
    %109 = vector.multi_reduction <add>, %108, %cst_39 [1] : vector<8x32xf32> to vector<8xf32>
    %110 = vector.shape_cast %109 : vector<8xf32> to vector<8x1xf32>
    %cst_40 = arith.constant 3.200000e+01 : f32
    %111 = vector.broadcast %cst_40 : f32 to vector<8x1xf32>
    %112 = arith.divf %110, %111 : vector<8x1xf32>
    %113 = vector.broadcast %105 : vector<8x1xf32> to vector<8x32xf32>
    %114 = arith.subf %101, %113 : vector<8x32xf32>
    %cst_41 = arith.constant 9.99999974E-6 : f32
    %115 = vector.broadcast %cst_41 : f32 to vector<8x1xf32>
    %116 = arith.addf %112, %115 : vector<8x1xf32>
    %117 = math.rsqrt %116 : vector<8x1xf32>
    %118 = vector.broadcast %117 : vector<8x1xf32> to vector<8x32xf32>
    %119 = arith.mulf %114, %118 : vector<8x32xf32>
    %120 = vector.broadcast %7 : vector<1x32xf32> to vector<8x32xf32>
    %121 = arith.mulf %119, %120 : vector<8x32xf32>
    %122 = vector.broadcast %8 : vector<1x32xf32> to vector<8x32xf32>
    %123 = arith.addf %121, %122 : vector<8x32xf32>
    %cst_42 = arith.constant dense<0.000000e+00> : vector<8x128xf32>
    %124 = tpu.matmul %123, %15, %cst_42 {dimension_numbers = #tpu.dot_dimension_numbers<[1], [0], [0], [1], [0, 0, 1, 1], [], []>} : vector<8x32xf32>, vector<32x128xf32>, vector<8x128xf32> -> vector<8x128xf32>
    %125 = vector.broadcast %9 : vector<1x128xf32> to vector<8x128xf32>
    %126 = arith.addf %124, %125 : vector<8x128xf32>
    %cst_43 = arith.constant 5.000000e-01 : f32
    %127 = vector.broadcast %cst_43 : f32 to vector<8x128xf32>
    %128 = arith.mulf %127, %126 : vector<8x128xf32>
    %cst_44 = arith.constant 4.471500e-02 : f32
    %129 = vector.broadcast %cst_44 : f32 to vector<8x128xf32>
    %130 = arith.mulf %129, %126 : vector<8x128xf32>
    %131 = arith.mulf %130, %126 : vector<8x128xf32>
    %132 = arith.mulf %131, %126 : vector<8x128xf32>
    %133 = arith.addf %126, %132 : vector<8x128xf32>
    %cst_45 = arith.constant 0.797884583 : f32
    %134 = vector.broadcast %cst_45 : f32 to vector<8x128xf32>
    %135 = arith.mulf %134, %133 : vector<8x128xf32>
    %136 = math.tanh %135 : vector<8x128xf32>
    %cst_46 = arith.constant 1.000000e+00 : f32
    %137 = vector.broadcast %cst_46 : f32 to vector<8x128xf32>
    %138 = arith.addf %137, %136 : vector<8x128xf32>
    %139 = arith.mulf %128, %138 : vector<8x128xf32>
    %cst_47 = arith.constant dense<0.000000e+00> : vector<8x32xf32>
    %140 = tpu.matmul %139, %16, %cst_47 {dimension_numbers = #tpu.dot_dimension_numbers<[1], [0], [0], [1], [0, 0, 1, 1], [], []>} : vector<8x128xf32>, vector<128x32xf32>, vector<8x32xf32> -> vector<8x32xf32>
    %141 = vector.broadcast %10 : vector<1x32xf32> to vector<8x32xf32>
    %142 = arith.addf %140, %141 : vector<8x32xf32>
    %143 = arith.addf %101, %142 : vector<8x32xf32>
    %c0_48 = arith.constant 0 : index
    %c0_49 = arith.constant 0 : index
    %144 = vector.load %arg6[%c0_48, %c0_49] : memref<8x32xf32, #tpu.memory_space<vmem>>, vector<8x32xf32>
    tpu.vector_store %arg6[%c0_48, %c0_49], %143 {strides = array<i32>} : memref<8x32xf32, #tpu.memory_space<vmem>>, vector<8x32xf32>,
    return
  }
  func.func @transform_0(%arg0: i32) -> (i32, i32) {
    %c0_i32 = arith.constant 0 : i32
    %c0_i32_0 = arith.constant 0 : i32
    return %arg0, %c0_i32 : i32, i32
  }
  func.func @transform_1(%arg0: i32) -> (i32, i32) {
    %c0_i32 = arith.constant 0 : i32
    %c0_i32_0 = arith.constant 0 : i32
    %c0_i32_1 = arith.constant 0 : i32
    return %c0_i32, %c0_i32_0 : i32, i32
  }
  func.func @transform_2(%arg0: i32) -> (i32, i32) {
    %c0_i32 = arith.constant 0 : i32
    %c0_i32_0 = arith.constant 0 : i32
    %c0_i32_1 = arith.constant 0 : i32
    return %c0_i32, %c0_i32_0 : i32, i32
  }
  func.func @transform_3(%arg0: i32) -> (i32, i32) {
    %c0_i32 = arith.constant 0 : i32
    %c0_i32_0 = arith.constant 0 : i32
    %c0_i32_1 = arith.constant 0 : i32
    return %c0_i32, %c0_i32_0 : i32, i32
  }
  func.func @transform_4(%arg0: i32) -> (i32, i32) {
    %c0_i32 = arith.constant 0 : i32
    %c0_i32_0 = arith.constant 0 : i32
    %c0_i32_1 = arith.constant 0 : i32
    return %c0_i32, %c0_i32_0 : i32, i32
  }
  func.func @transform_5(%arg0: i32) -> (i32, i32) {
    %c0_i32 = arith.constant 0 : i32
    %c0_i32_0 = arith.constant 0 : i32
    return %arg0, %c0_i32 : i32, i32
  }
}

</mosaic_0001>

<llo_original>
// kernel: tpu_custom_call.1
$region0: #{tpu_custom_call.1}
  #allocation0 [shape = 'u32[]', space=smem, size = 0x4, offset = 0x4, fixed_abs, tag = 'smem constant byte address 0x4 - core index']
  #allocation1 [shape = 'u32[144,128]{1,0:T(1,128)}', space=vmem, size = 0x12000, scoped, tag = 'internal scratch']
  %s0 = inlined_call_operand.hbm [shape: f32[16,32], index: 0, kind: input, shape index: {}]
  %s1 = inlined_call_operand.hbm [shape: f32[64,64], index: 1, kind: input, shape index: {}]
  %s2 = inlined_call_operand.hbm [shape: f32[192,128], index: 2, kind: input, shape index: {}]
  %s3 = inlined_call_operand.hbm [shape: f32[10,128], index: 3, kind: input, shape index: {}]
  %s4 = inlined_call_operand.vmem [shape: f32[8,32], index: 4, kind: input, shape index: {}]
  %s5 = inlined_call_operand.hbm [shape: f32[16,32], index: 5, kind: output, shape index: {}]
  %s6 = sld [smem:[#allocation0]]
  $region69: #{tpu_custom_call.1} parent=0
    _
  %s8 = ssub.s32 1, %s6
  %s9 = scalar_select 0, %s8, %s6
  $region1: #{tpu_custom_call.1} parent=0
    #allocation2 [shape = 'u8[8192]{0}', space=vmem, size = 0x2000, scoped, tag = 'input window, operand 0']
    #allocation3 [shape = 's32[2]{0}', space=sflag, size = 0x8, scoped, tag = 'scoped memory for tpu_custom_call.1']
    #allocation4 [shape = 's32[2]{0}', space=sflag, size = 0x8, scoped, tag = 'scoped memory for tpu_custom_call.1']
    #allocation5 [shape = 'u8[32768]{0}', space=vmem, size = 0x8000, scoped, tag = 'input window, operand 1, single buffered']
    #allocation6 [shape = 's32[1]{0}', space=sflag, size = 0x4, scoped, tag = 'scoped memory for tpu_custom_call.1']
    #allocation7 [shape = 'u8[98304]{0}', space=vmem, size = 0x18000, scoped, tag = 'input window, operand 2, single buffered']
    #allocation8 [shape = 'u8[8192]{0}', space=vmem, size = 0x2000, scoped, tag = 'input window, operand 3, single buffered']
    #allocation9 [shape = 's32[1]{0}', space=sflag, size = 0x4, scoped, tag = 'scoped memory for tpu_custom_call.1']
    #allocation10 [shape = 'u8[8192]{0}', space=vmem, size = 0x2000, scoped, tag = 'output window, operand 0']
    %10 = vsyncpa [#allocation3], 0
    %s11 = scalar_lea.sflag [#allocation3], 1
    %12 = vsyncpa %s11, 0
    %13 = vsyncpa [#allocation6], 0
    %14 = vsyncpa [#allocation9], 0
    %15 = vsyncpa [#allocation4], 0
    %s16 = scalar_lea.sflag [#allocation4], 1
    %17 = vsyncpa %s16, 0
    loop: start=0, step=1, limit=4
    $region2: #{tpu_custom_call.1} parent=1 // loop_pre_header
      _
    $region3: #{tpu_custom_call.1} parent=1 // loop_header
      %s19 = sphi 0, %s23
      %p20 = scmp.ge.s32.totalorder %s19, 4
      %s29 = sphi 0, %s31
      %s32 = sphi 0, %s29
      %s33 = sphi 0, %s32
      %s49 = sphi 0, %s33
      %s53 = sphi 0, %s53
      %s55 = sphi 0, %s53
      %s56 = sphi 0, %s55
      %s70 = sphi 0, %s56
      %s74 = sphi 0, %s74
      %s76 = sphi 0, %s74
      %s77 = sphi 0, %s76
      %s91 = sphi 0, %s77
      %s95 = sphi 0, %s95
      %s97 = sphi 0, %s95
      %s98 = sphi 0, %s97
      %s112 = sphi 0, %s98
      %s116 = sphi 0, %s116
      %s118 = sphi 0, %s116
      %s119 = sphi 0, %s118
      %s133 = sphi 0, %s119
      %s139 = sphi 0, %s141
      %s142 = sphi 0, %s139
      %s143 = sphi 0, %s142
      %s159 = sphi 0, %s143
    $region4: #{tpu_custom_call.1} parent=1 // loop_header_branch
      %22 = sbr.rel (%p20) target = $region8
    $region5: #{tpu_custom_call.1} parent=1 // loop_body
      %s24 = ssub.s32 %s19, 1
      %s25 = ssub.s32 %s19, 2
      %s26 = sadd.s32 %s19, 1
      %s27 = ssub.s32 %s19, %s26
      %p28 = scmp.eq.s32.totalorder %s27, 0
      %s30 = sadd.s32 %s29, 1
      %s31 = scalar_select %p28, %s29, %s30
      %p34 = pneg %p28
      %p35 = scmp.eq.s32.totalorder %s19, 1
      %p36 = por %p34, %p35
      %p37 = scmp.ne.s32.totalorder %s29, %s32
      %p38 = scmp.eq.s32.totalorder %s19, 0
      %p39 = por %p37, %p38
      %p40 = scmp.ne.s32.totalorder %s29, %s32
      %p41 = scmp.eq.s32.totalorder %s24, 1
      %p42 = por %p40, %p41
      %p43 = scmp.ne.s32.totalorder %s32, %s33
      %p44 = scmp.eq.s32.totalorder %s24, 0
      %p45 = por %p43, %p44
      %p46 = scmp.ne.s32.totalorder %s32, %s33
      %p47 = scmp.eq.s32.totalorder %s25, 1
      %p48 = por %p46, %p47
      %p50 = scmp.ne.s32.totalorder %s33, %s49
      %p51 = scmp.eq.s32.totalorder %s25, 0
      %p52 = por %p50, %p51
      %s54 = sadd.s32 %s53, 1
      %p57 = scmp.eq.s32.totalorder %s19, 1
      %p58 = scmp.ne.s32.totalorder %s53, %s55
      %p59 = scmp.eq.s32.totalorder %s19, 0
      %p60 = por %p58, %p59
      %p61 = scmp.ne.s32.totalorder %s53, %s55
      %p62 = scmp.eq.s32.totalorder %s24, 1
      %p63 = por %p61, %p62
      %p64 = scmp.ne.s32.totalorder %s55, %s56
      %p65 = scmp.eq.s32.totalorder %s24, 0
      %p66 = por %p64, %p65
      %p67 = scmp.ne.s32.totalorder %s55, %s56
      %p68 = scmp.eq.s32.totalorder %s25, 1
      %p69 = por %p67, %p68
      %p71 = scmp.ne.s32.totalorder %s56, %s70
      %p72 = scmp.eq.s32.totalorder %s25, 0
      %p73 = por %p71, %p72
      %s75 = sadd.s32 %s74, 1
      %p78 = scmp.eq.s32.totalorder %s19, 1
      %p79 = scmp.ne.s32.totalorder %s74, %s76
      %p80 = scmp.eq.s32.totalorder %s19, 0
      %p81 = por %p79, %p80
      %p82 = scmp.ne.s32.totalorder %s74, %s76
      %p83 = scmp.eq.s32.totalorder %s24, 1
      %p84 = por %p82, %p83
      %p85 = scmp.ne.s32.totalorder %s76, %s77
      %p86 = scmp.eq.s32.totalorder %s24, 0
      %p87 = por %p85, %p86
      %p88 = scmp.ne.s32.totalorder %s76, %s77
      %p89 = scmp.eq.s32.totalorder %s25, 1
      %p90 = por %p88, %p89
      %p92 = scmp.ne.s32.totalorder %s77, %s91
      %p93 = scmp.eq.s32.totalorder %s25, 0
      %p94 = por %p92, %p93
      %s96 = sadd.s32 %s95, 1
      %p99 = scmp.eq.s32.totalorder %s19, 1
      %p100 = scmp.ne.s32.totalorder %s95, %s97
      %p101 = scmp.eq.s32.totalorder %s19, 0
      %p102 = por %p100, %p101
      %p103 = scmp.ne.s32.totalorder %s95, %s97
      %p104 = scmp.eq.s32.totalorder %s24, 1
      %p105 = por %p103, %p104
      %p106 = scmp.ne.s32.totalorder %s97, %s98
      %p107 = scmp.eq.s32.totalorder %s24, 0
      %p108 = por %p106, %p107
      %p109 = scmp.ne.s32.totalorder %s97, %s98
      %p110 = scmp.eq.s32.totalorder %s25, 1
      %p111 = por %p109, %p110
      %p113 = scmp.ne.s32.totalorder %s98, %s112
      %p114 = scmp.eq.s32.totalorder %s25, 0
      %p115 = por %p113, %p114
      %s117 = sadd.s32 %s116, 1
      %p120 = scmp.eq.s32.totalorder %s19, 1
      %p121 = scmp.ne.s32.totalorder %s116, %s118
      %p122 = scmp.eq.s32.totalorder %s19, 0
      %p123 = por %p121, %p122
      %p124 = scmp.ne.s32.totalorder %s116, %s118
      %p125 = scmp.eq.s32.totalorder %s24, 1
      %p126 = por %p124, %p125
      %p127 = scmp.ne.s32.totalorder %s118, %s119
      %p128 = scmp.eq.s32.totalorder %s24, 0
      %p129 = por %p127, %p128
      %p130 = scmp.ne.s32.totalorder %s118, %s119
      %p131 = scmp.eq.s32.totalorder %s25, 1
      %p132 = por %p130, %p131
      %p134 = scmp.ne.s32.totalorder %s119, %s133
      %p135 = scmp.eq.s32.totalorder %s25, 0
      %p136 = por %p134, %p135
      %s137 = ssub.s32 %s19, %s26
      %p138 = scmp.eq.s32.totalorder %s137, 0
      %s140 = sadd.s32 %s139, 1
      %s141 = scalar_select %p138, %s139, %s140
      %p144 = pneg %p138
      %p145 = scmp.eq.s32.totalorder %s19, 1
      %p146 = por %p144, %p145
      %p147 = scmp.ne.s32.totalorder %s139, %s142
      %p148 = scmp.eq.s32.totalorder %s19, 0
      %p149 = por %p147, %p148
      %p150 = scmp.ne.s32.totalorder %s139, %s142
      %p151 = scmp.eq.s32.totalorder %s24, 1
      %p152 = por %p150, %p151
      %p153 = scmp.ne.s32.totalorder %s142, %s143
      %p154 = scmp.eq.s32.totalorder %s24, 0
      %p155 = por %p153, %p154
      %p156 = scmp.ne.s32.totalorder %s142, %s143
      %p157 = scmp.eq.s32.totalorder %s25, 1
      %p158 = por %p156, %p157
      %p160 = scmp.ne.s32.totalorder %s143, %s159
      %p161 = scmp.eq.s32.totalorder %s25, 0
      %p162 = por %p160, %p161
      %p163 = scmp.le.s32.totalorder 1, %s19
      %p164 = scmp.lt.s32.totalorder %s19, 3
      %p165 = pnand %p163, %p164
      %p166 = pneg %p165
      // Predicated region
      $region9: #{tpu_custom_call.1} parent=5 // pred_check
        _
      $region10: #{tpu_custom_call.1} parent=5 // pred_check_branch
        %168 = sbr.rel (%p165) target = $region12
      $region11: #{tpu_custom_call.1} parent=5 // pred_region
        %s169 = ssub.s32 %s19, 1
        // Predicated region
        $region13: #{tpu_custom_call.1} parent=11 // pred_check
          %p170 = pneg %p66
        $region14: #{tpu_custom_call.1} parent=11 // pred_check_branch
          %172 = sbr.rel (%p170) target = $region16
        $region15: #{tpu_custom_call.1} parent=11 // pred_region
          %s174 = ssub.s32 1024, 1024
          %175 = vsyncadd [#allocation6], %s174
          %s176 = sshll.u32 [#allocation5], 4
          %s177 = int_to_ptr.vmem [resolvable:$true] %s176
          %182 = dma.hbm_to_vmem [thread:$0]  %s1, 1024, %s177, [#allocation6], 128, 128, 8
        $region16: #{tpu_custom_call.1} parent=11 // pred_fallthru
          _
        // Predicated region
        $region17: #{tpu_custom_call.1} parent=11 // pred_check
          %p183 = pneg %p87
        $region18: #{tpu_custom_call.1} parent=11 // pred_check_branch
          %185 = sbr.rel (%p183) target = $region20
        $region19: #{tpu_custom_call.1} parent=11 // pred_region
          %s187 = ssub.s32 3072, 3072
          %188 = vsyncadd [#allocation6], %s187
          %s189 = sshll.u32 [#allocation7], 4
          %s190 = int_to_ptr.vmem [resolvable:$true] %s189
          %195 = dma.hbm_to_vmem [thread:$0]  %s2, 3072, %s190, [#allocation6], 128, 128, 8
        $region20: #{tpu_custom_call.1} parent=11 // pred_fallthru
          _
        // Predicated region
        $region21: #{tpu_custom_call.1} parent=11 // pred_check
          %p196 = pneg %p108
        $region22: #{tpu_custom_call.1} parent=11 // pred_check_branch
          %198 = sbr.rel (%p196) target = $region24
        $region23: #{tpu_custom_call.1} parent=11 // pred_region
          %s200 = ssub.s32 256, 256
          %201 = vsyncadd [#allocation9], %s200
          %s202 = sshll.u32 [#allocation8], 4
          %s203 = int_to_ptr.vmem [resolvable:$true] %s202
          %208 = dma.hbm_to_vmem [thread:$0]  %s3, 256, %s203, [#allocation9], 128, 128, 8
        $region24: #{tpu_custom_call.1} parent=11 // pred_fallthru
          _
        // Predicated region
        $region25: #{tpu_custom_call.1} parent=11 // pred_check
          %p209 = pneg %p129
        $region26: #{tpu_custom_call.1} parent=11 // pred_check_branch
          %211 = sbr.rel (%p209) target = $region28
        $region27: #{tpu_custom_call.1} parent=11 // pred_region
          _
        $region28: #{tpu_custom_call.1} parent=11 // pred_fallthru
          _
      $region12: #{tpu_custom_call.1} parent=5 // pred_fallthru
        _
      %p212 = scmp.lt.s32.totalorder %s19, 2
      // Predicated region
      $region29: #{tpu_custom_call.1} parent=5 // pred_check
        %p213 = pneg %p212
      $region30: #{tpu_custom_call.1} parent=5 // pred_check_branch
        %215 = sbr.rel (%p213) target = $region32
      $region31: #{tpu_custom_call.1} parent=5 // pred_region
        // Predicated region
        $region33: #{tpu_custom_call.1} parent=31 // pred_check
          %p216 = pneg %p39
        $region34: #{tpu_custom_call.1} parent=31 // pred_check_branch
          %218 = sbr.rel (%p216) target = $region36
        $region35: #{tpu_custom_call.1} parent=31 // pred_region
          %s219 = sand.u32 %s29, 1
          %s220 = scalar_lea.sflag [#allocation3], %s219
          %s221 = sand.u32 %s29, 1
          %s222 = smul.addr %s221, 8
          %s223 = scalar_lea.vmem [#allocation2], %s222
          %s225 = ssub.s32 128, 128
          %226 = vsyncadd %s220, %s225
          %s227 = smul.addr %s19, 128
          %s228 = scalar_lea.hbm %s0, %s227
          %s230 = sshll.u32 %s223, 4
          %s231 = int_to_ptr.vmem [resolvable:$true] %s230
          %233 = dma.hbm_to_vmem [thread:$0]  %s228, 128, %s231, %s220
        $region36: #{tpu_custom_call.1} parent=31 // pred_fallthru
          _
      $region32: #{tpu_custom_call.1} parent=5 // pred_fallthru
        _
      %p234 = scmp.le.s32.totalorder 1, %s19
      %p235 = scmp.lt.s32.totalorder %s19, 3
      %p236 = pnand %p234, %p235
      %p237 = pneg %p236
      // Predicated region
      $region37: #{tpu_custom_call.1} parent=5 // pred_check
        _
      $region38: #{tpu_custom_call.1} parent=5 // pred_check_branch
        %239 = sbr.rel (%p236) target = $region40
      $region39: #{tpu_custom_call.1} parent=5 // pred_region
        %s240 = ssub.s32 %s19, 1
        %s241 = sand.u32 %s32, 1
        %s242 = scalar_lea.sflag [#allocation3], %s241
        %s243 = sand.u32 %s32, 1
        %s244 = smul.addr %s243, 8
        %s245 = scalar_lea.vmem [#allocation2], %s244
        // Predicated region
        $region41: #{tpu_custom_call.1} parent=39 // pred_check
          %p246 = pneg %p45
        $region42: #{tpu_custom_call.1} parent=39 // pred_check_branch
          %248 = sbr.rel (%p246) target = $region44
        $region43: #{tpu_custom_call.1} parent=39 // pred_region
          %249 = dma.done %s242, 128
        $region44: #{tpu_custom_call.1} parent=39 // pred_fallthru
          _
        // Predicated region
        $region45: #{tpu_custom_call.1} parent=39 // pred_check
          %p250 = pneg %p66
        $region46: #{tpu_custom_call.1} parent=39 // pred_check_branch
          %252 = sbr.rel (%p250) target = $region48
        $region47: #{tpu_custom_call.1} parent=39 // pred_region
          %253 = dma.done [#allocation6], 1024
        $region48: #{tpu_custom_call.1} parent=39 // pred_fallthru
          _
        // Predicated region
        $region49: #{tpu_custom_call.1} parent=39 // pred_check
          %p254 = pneg %p87
        $region50: #{tpu_custom_call.1} parent=39 // pred_check_branch
          %256 = sbr.rel (%p254) target = $region52
        $region51: #{tpu_custom_call.1} parent=39 // pred_region
          %257 = dma.done [#allocation6], 3072
        $region52: #{tpu_custom_call.1} parent=39 // pred_fallthru
          _
        // Predicated region
        $region53: #{tpu_custom_call.1} parent=39 // pred_check
          %p258 = pneg %p108
        $region54: #{tpu_custom_call.1} parent=39 // pred_check_branch
          %260 = sbr.rel (%p258) target = $region56
        $region55: #{tpu_custom_call.1} parent=39 // pred_region
          %261 = dma.done [#allocation9], 256
        $region56: #{tpu_custom_call.1} parent=39 // pred_fallthru
          _
        %s262 = sand.u32 %s32, 1
        %s263 = scalar_lea.sflag [#allocation3], %s262
        %s264 = sand.u32 %s32, 1
        %s265 = smul.addr %s264, 8
        %s266 = scalar_lea.vmem [#allocation2], %s265
        %p267 = pneg %p45
        %p268 = pneg %p42
        %p269 = pneg %p66
        %p270 = pneg %p63
        %p271 = pneg %p87
        %p272 = pneg %p84
        %p273 = pneg %p108
        %p274 = pneg %p105
        %p275 = pneg %p129
        %p276 = pneg %p126
        %p277 = pneg %p155
        %p278 = pneg %p152
        %s279 = sand.u32 %s142, 1
        %s280 = scalar_lea.sflag [#allocation4], %s279
        %s281 = sand.u32 %s142, 1
        %s282 = smul.addr %s281, 8
        %s283 = scalar_lea.vmem [#allocation10], %s282
        %v284 = vld [vmem:[%s245] sm:$0xff]
        %v285 = vld [vmem:[#allocation8] sm:$0x1]
        %v286 = vld [vmem:[#allocation8 + $0x1] sm:$0x1]
        %v287 = vld [vmem:[#allocation8 + $0x2] sm:$0x1]
        %v288 = vld [vmem:[#allocation8 + $0x3] sm:$0x1]
        %v289 = vld [vmem:[#allocation8 + $0x4] sm:$0x1]
        %v290 = vld [vmem:[#allocation8 + $0x5] sm:$0x1]
        %v291 = vld [vmem:[#allocation8 + $0x6] sm:$0x1]
        %v292 = vld [vmem:[#allocation8 + $0x7] sm:$0x1]
        %v293 = vld [vmem:[#allocation8 + $0x8] sm:$0x1]
        %v294 = vld [vmem:[#allocation8 + $0x9] sm:$0x1]
        %v295 = vld [vmem:[#allocation5] sm:$0xff]
        %v296 = vld [vmem:[#allocation5 + $0x8] sm:$0xff]
        %v297 = vld [vmem:[#allocation5 + $0x10] sm:$0xff]
        %v298 = vld [vmem:[#allocation5 + $0x18] sm:$0xff]
        %v299 = vld [vmem:[#allocation5 + $0x20] sm:$0xff]
        %v300 = vld [vmem:[#allocation5 + $0x28] sm:$0xff]
        %v301 = vld [vmem:[#allocation5 + $0x30] sm:$0xff]
        %v302 = vld [vmem:[#allocation5 + $0x38] sm:$0xff]
        %v303 = vld [vmem:[#allocation7] sm:$0xff]
        %v304 = vld [vmem:[#allocation7 + $0x8] sm:$0xff]
        %v305 = vld [vmem:[#allocation7 + $0x10] sm:$0xff]
        %v306 = vld [vmem:[#allocation7 + $0x18] sm:$0xff]
        %v307 = vld [vmem:[#allocation7 + $0x20] sm:$0xff]
        %v308 = vld [vmem:[#allocation7 + $0x28] sm:$0xff]
        %v309 = vld [vmem:[#allocation7 + $0x30] sm:$0xff]
        %v310 = vld [vmem:[#allocation7 + $0x38] sm:$0xff]
        %v311 = vld [vmem:[#allocation7 + $0x40] sm:$0xff]
        %v312 = vld [vmem:[#allocation7 + $0x48] sm:$0xff]
        %v313 = vld [vmem:[#allocation7 + $0x50] sm:$0xff]
        %v314 = vld [vmem:[#allocation7 + $0x58] sm:$0xff]
        %v315 = vld [vmem:[#allocation7 + $0x60] sm:$0xff]
        %v316 = vld [vmem:[#allocation7 + $0x68] sm:$0xff]
        %v317 = vld [vmem:[#allocation7 + $0x70] sm:$0xff]
        %v318 = vld [vmem:[#allocation7 + $0x78] sm:$0xff]
        %v319 = vld [vmem:[#allocation7 + $0x80] sm:$0xff]
        %v320 = vld [vmem:[#allocation7 + $0x88] sm:$0xff]
        %v321 = vld [vmem:[#allocation7 + $0x90] sm:$0xff]
        %v322 = vld [vmem:[#allocation7 + $0x98] sm:$0xff]
        %v323 = vld [vmem:[#allocation7 + $0xa0] sm:$0xff]
        %v324 = vld [vmem:[#allocation7 + $0xa8] sm:$0xff]
        %v325 = vld [vmem:[#allocation7 + $0xb0] sm:$0xff]
        %v326 = vld [vmem:[#allocation7 + $0xb8] sm:$0xff]
        %vm327 = vcmask 261120
        %v328 = vsel %vm327, %v284, 0.0
        %329 = vadd.xlane.f32.xlu0 %v328
        %v330 = vpop.xlane.xlu0 %329
        %v331 = vrcp.pop 32.0
        %v332 = vmul.f32 %v330, %v331
        %v333 = vsub.f32 %v284, %v332
        %v334 = vmul.f32 %v333, %v333
        %v335 = vsel %vm327, %v334, 0.0
        %336 = vadd.xlane.f32.xlu0 %v335
        %v337 = vpop.xlane.xlu0 %336
        %v338 = vmul.f32 %v337, %v331
        %v339 = vadd.f32 %v338, 1e-05
        %v340 = vrsqrt.pop %v339
        %v341 = vmul.f32 %v333, %v340
        %v342 = vlaneseq
        %v343 = vshrl.u32 %v342, 7
        %v344 = vsub.s32 0, %v343
        %v345 = vrot.slane %v285, %v344
        %v346 = vmul.f32 %v341, %v345
        %v347 = vlaneseq
        %v348 = vshrl.u32 %v347, 7
        %v349 = vsub.s32 0, %v348
        %v350 = vrot.slane %v286, %v349
        %v351 = vadd.f32 %v346, %v350
        %v352 = vlaneseq
        %v353 = vshrl.u32 %v352, 7
        %v354 = vsub.s32 0, %v353
        %v355 = vrot.slane %v287, %v354
        %v357 = vsel %vm327, %v351, 0
        %359 = vmatprep.subr.mxu0 0.0
        %360 = vmatpush1.msra.mxu0 %v295
        %361 = vmatprep.subr.mxu0 0.0
        %362 = vmatpush1.msra.mxu0 %v296
        %363 = vmatprep.subr.mxu0 0.0
        %364 = vmatpush1.msra.mxu0 %v297
        %365 = vmatprep.subr.mxu0 0.0
        %366 = vmatpush1.msra.mxu0 %v298
        %367 = vmatprep.subr.mxu0 0.0
        %368 = vmatpush1.msra.mxu0 0.0
        %369 = vmatprep.subr.mxu0 0.0
        %370 = vmatpush1.msra.mxu0 0.0
        %371 = vmatprep.subr.mxu0 0.0
        %372 = vmatpush1.msra.mxu0 0.0
        %373 = vmatprep.subr.mxu0 0.0
        %374 = vmatpush1.msra.mxu0 0.0
        %375 = vmatprep.subr.mxu0 0.0
        %376 = vmatpush1.msra.mxu0 0.0
        %377 = vmatprep.subr.mxu0 0.0
        %378 = vmatpush1.msra.mxu0 0.0
        %379 = vmatprep.subr.mxu0 0.0
        %380 = vmatpush1.msra.mxu0 0.0
        %381 = vmatprep.subr.mxu0 0.0
        %382 = vmatpush1.msra.mxu0 0.0
        %383 = vmatprep.subr.mxu0 0.0
        %384 = vmatpush1.msra.mxu0 0.0
        %385 = vmatprep.subr.mxu0 0.0
        %386 = vmatpush1.msra.mxu0 0.0
        %387 = vmatprep.subr.mxu0 0.0
        %388 = vmatpush1.msra.mxu0 0.0
        %389 = vmatprep.subr.mxu0 0.0
        %390 = vmatpush1.msra.mxu0 0.0
        %391 = vmatprep.subr.mxu0 0.0
        %392 = vmatpush1.msra.mxu0 0.0
        %393 = vmatprep.subr.mxu0 0.0
        %394 = vmatpush1.msra.mxu0 0.0
        %395 = vmatprep.subr.mxu0 0.0
        %396 = vmatpush1.msra.mxu0 0.0
        %397 = vmatprep.subr.mxu0 0.0
        %398 = vmatpush1.msra.mxu0 0.0
        %399 = vmatprep.subr.mxu0 0.0
        %400 = vmatpush1.msra.mxu0 0.0
        %401 = vmatprep.subr.mxu0 0.0
        %402 = vmatpush1.msra.mxu0 0.0
        %403 = vmatprep.subr.mxu0 0.0
        %404 = vmatpush1.msra.mxu0 0.0
        %405 = vmatprep.subr.mxu0 0.0
        %406 = vmatpush1.msra.mxu0 0.0
        %407 = vmatprep.subr.mxu0 0.0
        %408 = vmatpush1.msra.mxu0 0.0
        %409 = vmatprep.subr.mxu0 0.0
        %410 = vmatpush1.msra.mxu0 0.0
        %411 = vmatprep.subr.mxu0 0.0
        %412 = vmatpush1.msra.mxu0 0.0
        %413 = vmatprep.subr.mxu0 0.0
        %414 = vmatpush1.msra.mxu0 0.0
        %415 = vmatprep.subr.mxu0 0.0
        %416 = vmatpush1.msra.mxu0 0.0
        %417 = vmatprep.subr.mxu0 0.0
        %418 = vmatpush1.msra.mxu0 0.0
        %419 = vmatprep.subr.mxu0 0.0
        %420 = vmatpush1.msra.mxu0 0.0
        %421 = vmatprep.subr.mxu0 0.0
        %422 = vmatpush1.msra.mxu0 0.0
        %423 = vmatprep.mubr.f32.mxu0 0.0
        %424 = vmatmul.mubr.f32.gmra.mrb[0].mxu0 %v357
        %v425 = vpop.f32.mrb[0].mxu0
        %v426 = vadd.f32 %v355, %v425
        %v427 = vpop.f32.mrb[0].mxu0
        %428 = vdwg.mxu0
        %v429 = vlaneseq
        %v430 = vshrl.u32 %v429, 7
        %v431 = vsub.s32 0, %v430
        %v432 = vrot.slane %v288, %v431
        %vm433 = vcmask 130048
        %v435 = vsel %vm433, %v426, 0
        %437 = vmatprep.subr.mxu0 0.0
        %438 = vmatpush1.msra.mxu0 %v299
        %439 = vmatprep.subr.mxu0 0.0
        %440 = vmatpush1.msra.mxu0 %v300
        %441 = vmatprep.subr.mxu0 0.0
        %442 = vmatpush1.msra.mxu0 0.0
        %443 = vmatprep.subr.mxu0 0.0
        %444 = vmatpush1.msra.mxu0 0.0
        %445 = vmatprep.subr.mxu0 0.0
        %446 = vmatpush1.msra.mxu0 0.0
        %447 = vmatprep.subr.mxu0 0.0
        %448 = vmatpush1.msra.mxu0 0.0
        %449 = vmatprep.subr.mxu0 0.0
        %450 = vmatpush1.msra.mxu0 0.0
        %451 = vmatprep.subr.mxu0 0.0
        %452 = vmatpush1.msra.mxu0 0.0
        %453 = vmatprep.subr.mxu0 0.0
        %454 = vmatpush1.msra.mxu0 0.0
        %455 = vmatprep.subr.mxu0 0.0
        %456 = vmatpush1.msra.mxu0 0.0
        %457 = vmatprep.subr.mxu0 0.0
        %458 = vmatpush1.msra.mxu0 0.0
        %459 = vmatprep.subr.mxu0 0.0
        %460 = vmatpush1.msra.mxu0 0.0
        %461 = vmatprep.subr.mxu0 0.0
        %462 = vmatpush1.msra.mxu0 0.0
        %463 = vmatprep.subr.mxu0 0.0
        %464 = vmatpush1.msra.mxu0 0.0
        %465 = vmatprep.subr.mxu0 0.0
        %466 = vmatpush1.msra.mxu0 0.0
        %467 = vmatprep.subr.mxu0 0.0
        %468 = vmatpush1.msra.mxu0 0.0
        %469 = vmatprep.subr.mxu0 0.0
        %470 = vmatpush1.msra.mxu0 0.0
        %471 = vmatprep.subr.mxu0 0.0
        %472 = vmatpush1.msra.mxu0 0.0
        %473 = vmatprep.subr.mxu0 0.0
        %474 = vmatpush1.msra.mxu0 0.0
        %475 = vmatprep.subr.mxu0 0.0
        %476 = vmatpush1.msra.mxu0 0.0
        %477 = vmatprep.subr.mxu0 0.0
        %478 = vmatpush1.msra.mxu0 0.0
        %479 = vmatprep.subr.mxu0 0.0
        %480 = vmatpush1.msra.mxu0 0.0
        %481 = vmatprep.subr.mxu0 0.0
        %482 = vmatpush1.msra.mxu0 0.0
        %483 = vmatprep.subr.mxu0 0.0
        %484 = vmatpush1.msra.mxu0 0.0
        %485 = vmatprep.subr.mxu0 0.0
        %486 = vmatpush1.msra.mxu0 0.0
        %487 = vmatprep.subr.mxu0 0.0
        %488 = vmatpush1.msra.mxu0 0.0
        %489 = vmatprep.subr.mxu0 0.0
        %490 = vmatpush1.msra.mxu0 0.0
        %491 = vmatprep.subr.mxu0 0.0
        %492 = vmatpush1.msra.mxu0 0.0
        %493 = vmatprep.subr.mxu0 0.0
        %494 = vmatpush1.msra.mxu0 0.0
        %495 = vmatprep.subr.mxu0 0.0
        %496 = vmatpush1.msra.mxu0 0.0
        %497 = vmatprep.subr.mxu0 0.0
        %498 = vmatpush1.msra.mxu0 0.0
        %499 = vmatprep.subr.mxu0 0.0
        %500 = vmatpush1.msra.mxu0 0.0
        %501 = vmatprep.mubr.f32.mxu0 0.0
        %502 = vmatmul.mubr.f32.gmra.mrb[0].mxu0 %v435
        %v503 = vpop.f32.mrb[0].mxu0
        %v504 = vadd.f32 %v432, %v503
        %v505 = vpop.f32.mrb[0].mxu0
        %506 = vdwg.mxu0
        %v507 = vlaneseq
        %v508 = vshrl.u32 %v507, 7
        %v509 = vsub.s32 0, %v508
        %v510 = vrot.slane %v289, %v509
        %511 = vrot.lane.b32.xlu0 %v426, 112
        %v512 = vpop.permute.xlu0 %511
        %v513 = vsel %vm433, %v512, 0
        %515 = vmatprep.subr.mxu0 0.0
        %516 = vmatpush1.msra.mxu0 %v301
        %517 = vmatprep.subr.mxu0 0.0
        %518 = vmatpush1.msra.mxu0 %v302
        %519 = vmatprep.subr.mxu0 0.0
        %520 = vmatpush1.msra.mxu0 0.0
        %521 = vmatprep.subr.mxu0 0.0
        %522 = vmatpush1.msra.mxu0 0.0
        %523 = vmatprep.subr.mxu0 0.0
        %524 = vmatpush1.msra.mxu0 0.0
        %525 = vmatprep.subr.mxu0 0.0
        %526 = vmatpush1.msra.mxu0 0.0
        %527 = vmatprep.subr.mxu0 0.0
        %528 = vmatpush1.msra.mxu0 0.0
        %529 = vmatprep.subr.mxu0 0.0
        %530 = vmatpush1.msra.mxu0 0.0
        %531 = vmatprep.subr.mxu0 0.0
        %532 = vmatpush1.msra.mxu0 0.0
        %533 = vmatprep.subr.mxu0 0.0
        %534 = vmatpush1.msra.mxu0 0.0
        %535 = vmatprep.subr.mxu0 0.0
        %536 = vmatpush1.msra.mxu0 0.0
        %537 = vmatprep.subr.mxu0 0.0
        %538 = vmatpush1.msra.mxu0 0.0
        %539 = vmatprep.subr.mxu0 0.0
        %540 = vmatpush1.msra.mxu0 0.0
        %541 = vmatprep.subr.mxu0 0.0
        %542 = vmatpush1.msra.mxu0 0.0
        %543 = vmatprep.subr.mxu0 0.0
        %544 = vmatpush1.msra.mxu0 0.0
        %545 = vmatprep.subr.mxu0 0.0
        %546 = vmatpush1.msra.mxu0 0.0
        %547 = vmatprep.subr.mxu0 0.0
        %548 = vmatpush1.msra.mxu0 0.0
        %549 = vmatprep.subr.mxu0 0.0
        %550 = vmatpush1.msra.mxu0 0.0
        %551 = vmatprep.subr.mxu0 0.0
        %552 = vmatpush1.msra.mxu0 0.0
        %553 = vmatprep.subr.mxu0 0.0
        %554 = vmatpush1.msra.mxu0 0.0
        %555 = vmatprep.subr.mxu0 0.0
        %556 = vmatpush1.msra.mxu0 0.0
        %557 = vmatprep.subr.mxu0 0.0
        %558 = vmatpush1.msra.mxu0 0.0
        %559 = vmatprep.subr.mxu0 0.0
        %560 = vmatpush1.msra.mxu0 0.0
        %561 = vmatprep.subr.mxu0 0.0
        %562 = vmatpush1.msra.mxu0 0.0
        %563 = vmatprep.subr.mxu0 0.0
        %564 = vmatpush1.msra.mxu0 0.0
        %565 = vmatprep.subr.mxu0 0.0
        %566 = vmatpush1.msra.mxu0 0.0
        %567 = vmatprep.subr.mxu0 0.0
        %568 = vmatpush1.msra.mxu0 0.0
        %569 = vmatprep.subr.mxu0 0.0
        %570 = vmatpush1.msra.mxu0 0.0
        %571 = vmatprep.subr.mxu0 0.0
        %572 = vmatpush1.msra.mxu0 0.0
        %573 = vmatprep.subr.mxu0 0.0
        %574 = vmatpush1.msra.mxu0 0.0
        %575 = vmatprep.subr.mxu0 0.0
        %576 = vmatpush1.msra.mxu0 0.0
        %577 = vmatprep.subr.mxu0 0.0
        %578 = vmatpush1.msra.mxu0 0.0
        %579 = vmatprep.mubr.f32.mxu0 0.0
        %580 = vmatmul.mubr.f32.gmra.mrb[0].mxu0 %v513
        %v581 = vpop.f32.mrb[0].mxu0
        %v582 = vadd.f32 %v510, %v581
        %v583 = vpop.f32.mrb[0].mxu0
        %584 = vdwg.mxu0
        %586 = vrot.lane.b32.xlu0 %v504, 120
        %v587 = vpop.permute.xlu0 %586
        %588 = vrot.lane.b32.xlu0 %v504, 112
        %v589 = vpop.permute.xlu0 %588
        %590 = vrot.lane.b32.xlu0 %v504, 104
        %v591 = vpop.permute.xlu0 %590
        %593 = vrot.lane.b32.xlu0 %v582, 120
        %v594 = vpop.permute.xlu0 %593
        %596 = vrot.lane.b32.xlu0 %v582, 112
        %v597 = vpop.permute.xlu0 %596
        %599 = vrot.lane.b32.xlu0 %v582, 104
        %v600 = vpop.permute.xlu0 %599
        %v602 = vld [vmem:[%s4] sm:$0xff]
        %604 = vrot.lane.b32.xlu0 %v602, 32
        %v605 = vpop.permute.xlu0 %604
        %v607 = vmul.f32 %v504, %v605
        %609 = vrot.lane.b32.xlu0 %v607, 112
        %v610 = vpop.permute.xlu0 %609
        %v612 = vsub.f32 %v607, %v610
        %613 = vrot.lane.b32.xlu0 %v602, 48
        %v614 = vpop.permute.xlu0 %613
        %v616 = vmul.f32 %v504, %v614
        %617 = vrot.lane.b32.xlu0 %v602, 16
        %v618 = vpop.permute.xlu0 %617
        %v620 = vmul.f32 %v504, %v618
        %622 = vrot.lane.b32.xlu0 %v620, 16
        %v623 = vpop.permute.xlu0 %622
        %v625 = vadd.f32 %v616, %v623
        %v626 = vmul.f32 %v426, %v605
        %627 = vrot.lane.b32.xlu0 %v602, 20
        %v628 = vpop.permute.xlu0 %627
        %v630 = vmul.f32 %v426, %v628
        %632 = vrot.lane.b32.xlu0 %v630, 124
        %v633 = vpop.permute.xlu0 %632
        %v635 = vsub.f32 %v626, %v633
        %636 = vrot.lane.b32.xlu0 %v602, 36
        %v637 = vpop.permute.xlu0 %636
        %v639 = vmul.f32 %v426, %v637
        %v640 = vmul.f32 %v426, %v618
        %642 = vrot.lane.b32.xlu0 %v640, 4
        %v643 = vpop.permute.xlu0 %642
        %v645 = vadd.f32 %v639, %v643
        %647 = vrot.lane.b32.xlu0 %v612, 124
        %v648 = vpop.permute.xlu0 %647
        %649 = vrot.lane.b32.xlu0 %v612, 120
        %v650 = vpop.permute.xlu0 %649
        %651 = vrot.lane.b32.xlu0 %v612, 116
        %v652 = vpop.permute.xlu0 %651
        %653 = vrot.lane.b32.xlu0 %v612, 96
        %v654 = vpop.permute.xlu0 %653
        %655 = vrot.lane.b32.xlu0 %v648, 96
        %v656 = vpop.permute.xlu0 %655
        %657 = vrot.lane.b32.xlu0 %v650, 96
        %v658 = vpop.permute.xlu0 %657
        %659 = vrot.lane.b32.xlu0 %v652, 96
        %v660 = vpop.permute.xlu0 %659
        %v665 = vcombine.low %v654, %v658
        %v666 = vcombine.high %v654, %v658
        %v668 = vunpack.c.l.s4 1983009808
        %v669 = vunpack.c.0.s8 %v668
        %v670 = vlaneseq
        %v671 = vshrl.u32 %v670, 7
        %v672 = vsub.s32 %v669, %v671
        %v673 = vrot.slane %v665, %v672
        %v675 = vunpack.c.l.s4 1983009808
        %v676 = vunpack.c.0.s8 %v675
        %v677 = vlaneseq
        %v678 = vshrl.u32 %v677, 7
        %v679 = vsub.s32 %v676, %v678
        %v680 = vrot.slane %v666, %v679
        %v681 = vcombine.low %v656, %v660
        %v682 = vcombine.high %v656, %v660
        %v684 = vunpack.c.l.s4 1983009808
        %v685 = vunpack.c.0.s8 %v684
        %v686 = vlaneseq
        %v687 = vshrl.u32 %v686, 7
        %v688 = vsub.s32 %v685, %v687
        %v689 = vrot.slane %v681, %v688
        %v691 = vunpack.c.l.s4 1983009808
        %v692 = vunpack.c.0.s8 %v691
        %v693 = vlaneseq
        %v694 = vshrl.u32 %v693, 7
        %v695 = vsub.s32 %v692, %v694
        %v696 = vrot.slane %v682, %v695
        %v697 = vcombine.low %v673, %v689
        %v698 = vcombine.high %v673, %v689
        %v700 = vunpack.c.l.s4 1934713408
        %v701 = vunpack.c.0.s8 %v700
        %v702 = vlaneseq
        %v703 = vshrl.u32 %v702, 7
        %v704 = vsub.s32 %v701, %v703
        %v705 = vrot.slane %v697, %v704
        %v707 = vunpack.c.l.s4 1934713408
        %v708 = vunpack.c.0.s8 %v707
        %v709 = vlaneseq
        %v710 = vshrl.u32 %v709, 7
        %v711 = vsub.s32 %v708, %v710
        %v712 = vrot.slane %v698, %v711
        %v713 = vcombine.low %v680, %v696
        %v714 = vcombine.high %v680, %v696
        %v716 = vunpack.c.l.s4 1934713408
        %v717 = vunpack.c.0.s8 %v716
        %v718 = vlaneseq
        %v719 = vshrl.u32 %v718, 7
        %v720 = vsub.s32 %v717, %v719
        %v721 = vrot.slane %v713, %v720
        %v723 = vunpack.c.l.s4 1934713408
        %v724 = vunpack.c.0.s8 %v723
        %v725 = vlaneseq
        %v726 = vshrl.u32 %v725, 7
        %v727 = vsub.s32 %v724, %v726
        %v728 = vrot.slane %v714, %v727
        %v729 = vcombine.high %v705, 0.0
        %v730 = vcombine.high %v712, 0.0
        %v731 = vcombine.high %v721, 0.0
        %v732 = vcombine.high %v728, 0.0
        %734 = vrot.lane.b32.xlu0 %v625, 124
        %v735 = vpop.permute.xlu0 %734
        %736 = vrot.lane.b32.xlu0 %v625, 120
        %v737 = vpop.permute.xlu0 %736
        %738 = vrot.lane.b32.xlu0 %v625, 116
        %v739 = vpop.permute.xlu0 %738
        %740 = vrot.lane.b32.xlu0 %v625, 80
        %v741 = vpop.permute.xlu0 %740
        %742 = vrot.lane.b32.xlu0 %v735, 80
        %v743 = vpop.permute.xlu0 %742
        %744 = vrot.lane.b32.xlu0 %v737, 80
        %v745 = vpop.permute.xlu0 %744
        %746 = vrot.lane.b32.xlu0 %v739, 80
        %v747 = vpop.permute.xlu0 %746
        %v752 = vcombine.low %v741, %v745
        %v753 = vcombine.high %v741, %v745
        %v755 = vunpack.c.l.s4 1983009808
        %v756 = vunpack.c.0.s8 %v755
        %v757 = vlaneseq
        %v758 = vshrl.u32 %v757, 7
        %v759 = vsub.s32 %v756, %v758
        %v760 = vrot.slane %v752, %v759
        %v762 = vunpack.c.l.s4 1983009808
        %v763 = vunpack.c.0.s8 %v762
        %v764 = vlaneseq
        %v765 = vshrl.u32 %v764, 7
        %v766 = vsub.s32 %v763, %v765
        %v767 = vrot.slane %v753, %v766
        %v768 = vcombine.low %v743, %v747
        %v769 = vcombine.high %v743, %v747
        %v771 = vunpack.c.l.s4 1983009808
        %v772 = vunpack.c.0.s8 %v771
        %v773 = vlaneseq
        %v774 = vshrl.u32 %v773, 7
        %v775 = vsub.s32 %v772, %v774
        %v776 = vrot.slane %v768, %v775
        %v778 = vunpack.c.l.s4 1983009808
        %v779 = vunpack.c.0.s8 %v778
        %v780 = vlaneseq
        %v781 = vshrl.u32 %v780, 7
        %v782 = vsub.s32 %v779, %v781
        %v783 = vrot.slane %v769, %v782
        %v784 = vcombine.low %v760, %v776
        %v785 = vcombine.high %v760, %v776
        %v787 = vunpack.c.l.s4 1934713408
        %v788 = vunpack.c.0.s8 %v787
        %v789 = vlaneseq
        %v790 = vshrl.u32 %v789, 7
        %v791 = vsub.s32 %v788, %v790
        %v792 = vrot.slane %v784, %v791
        %v794 = vunpack.c.l.s4 1934713408
        %v795 = vunpack.c.0.s8 %v794
        %v796 = vlaneseq
        %v797 = vshrl.u32 %v796, 7
        %v798 = vsub.s32 %v795, %v797
        %v799 = vrot.slane %v785, %v798
        %v800 = vcombine.low %v767, %v783
        %v801 = vcombine.high %v767, %v783
        %v803 = vunpack.c.l.s4 1934713408
        %v804 = vunpack.c.0.s8 %v803
        %v805 = vlaneseq
        %v806 = vshrl.u32 %v805, 7
        %v807 = vsub.s32 %v804, %v806
        %v808 = vrot.slane %v800, %v807
        %v810 = vunpack.c.l.s4 1934713408
        %v811 = vunpack.c.0.s8 %v810
        %v812 = vlaneseq
        %v813 = vshrl.u32 %v812, 7
        %v814 = vsub.s32 %v811, %v813
        %v815 = vrot.slane %v801, %v814
        %v816 = vcombine.high %v792, 0.0
        %v817 = vcombine.high %v799, 0.0
        %v818 = vcombine.high %v808, 0.0
        %v819 = vcombine.high %v815, 0.0
        %828 = vrot.lane.b32.xlu0 %v792, 4
        %v829 = vpop.permute.xlu0 %828
        %830 = vrot.lane.b32.xlu0 %v816, 4
        %v831 = vpop.permute.xlu0 %830
        %832 = vrot.lane.b32.xlu0 %v799, 4
        %v833 = vpop.permute.xlu0 %832
        %834 = vrot.lane.b32.xlu0 %v817, 4
        %v835 = vpop.permute.xlu0 %834
        %836 = vrot.lane.b32.xlu0 %v808, 4
        %v837 = vpop.permute.xlu0 %836
        %838 = vrot.lane.b32.xlu0 %v818, 4
        %v839 = vpop.permute.xlu0 %838
        %840 = vrot.lane.b32.xlu0 %v815, 4
        %v841 = vpop.permute.xlu0 %840
        %842 = vrot.lane.b32.xlu0 %v819, 4
        %v843 = vpop.permute.xlu0 %842
        %vm852 = vcmask 31744
        %v853 = vsel %vm852, %v705, %v829
        %v854 = vsel %vm852, %v729, %v831
        %v855 = vsel %vm852, %v712, %v833
        %v856 = vsel %vm852, %v730, %v835
        %v857 = vsel %vm852, %v721, %v837
        %v858 = vsel %vm852, %v731, %v839
        %v859 = vsel %vm852, %v728, %v841
        %v860 = vsel %vm852, %v732, %v843
        %862 = vrot.lane.b32.xlu0 %v635, 96
        %v863 = vpop.permute.xlu0 %862
        %866 = vrot.lane.b32.xlu0 %v645, 96
        %v867 = vpop.permute.xlu0 %866
        %v869 = vsel %vm852, %v863, %v867
        %v870 = vcombine.low 0.0, 0.0
        %v871 = vcombine.high 0.0, 0.0
        %v873 = vunpack.c.l.s4 1983009808
        %v874 = vunpack.c.0.s8 %v873
        %v875 = vlaneseq
        %v876 = vshrl.u32 %v875, 7
        %v877 = vsub.s32 %v874, %v876
        %v878 = vrot.slane %v870, %v877
        %v880 = vunpack.c.l.s4 1983009808
        %v881 = vunpack.c.0.s8 %v880
        %v882 = vlaneseq
        %v883 = vshrl.u32 %v882, 7
        %v884 = vsub.s32 %v881, %v883
        %v885 = vrot.slane %v871, %v884
        %v886 = vcombine.low %v878, %v878
        %v887 = vcombine.high %v878, %v878
        %v889 = vunpack.c.l.s4 1934713408
        %v890 = vunpack.c.0.s8 %v889
        %v891 = vlaneseq
        %v892 = vshrl.u32 %v891, 7
        %v893 = vsub.s32 %v890, %v892
        %v894 = vrot.slane %v886, %v893
        %v896 = vunpack.c.l.s4 1934713408
        %v897 = vunpack.c.0.s8 %v896
        %v898 = vlaneseq
        %v899 = vshrl.u32 %v898, 7
        %v900 = vsub.s32 %v897, %v899
        %v901 = vrot.slane %v887, %v900
        %v902 = vcombine.low %v885, %v885
        %v903 = vcombine.high %v885, %v885
        %v905 = vunpack.c.l.s4 1934713408
        %v906 = vunpack.c.0.s8 %v905
        %v907 = vlaneseq
        %v908 = vshrl.u32 %v907, 7
        %v909 = vsub.s32 %v906, %v908
        %v910 = vrot.slane %v902, %v909
        %v912 = vunpack.c.l.s4 1934713408
        %v913 = vunpack.c.0.s8 %v912
        %v914 = vlaneseq
        %v915 = vshrl.u32 %v914, 7
        %v916 = vsub.s32 %v913, %v915
        %v917 = vrot.slane %v903, %v916
        %v918 = vcombine.low %v894, %v894
        %v919 = vcombine.high %v894, %v894
        %v920 = vcombine.low %v901, %v901
        %v921 = vcombine.high %v901, %v901
        %v922 = vcombine.low %v910, %v910
        %v923 = vcombine.high %v910, %v910
        %v924 = vcombine.low %v917, %v917
        %v925 = vcombine.high %v917, %v917
        %927 = vrot.lane.b32.xlu0 %v919, 4
        %v928 = vpop.permute.xlu0 %927
        %931 = vrot.lane.b32.xlu0 %v920, 8
        %v932 = vpop.permute.xlu0 %931
        %935 = vrot.lane.b32.xlu0 %v921, 12
        %v936 = vpop.permute.xlu0 %935
        %939 = vrot.lane.b32.xlu0 %v922, 16
        %v940 = vpop.permute.xlu0 %939
        %943 = vrot.lane.b32.xlu0 %v923, 20
        %v944 = vpop.permute.xlu0 %943
        %947 = vrot.lane.b32.xlu0 %v924, 24
        %v948 = vpop.permute.xlu0 %947
        %951 = vrot.lane.b32.xlu0 %v925, 28
        %v952 = vpop.permute.xlu0 %951
        %v954 = vsel %vm852, %v918, %v928
        %vm955 = vcmask 64512
        %v956 = vsel %vm955, %v954, %v932
        %vm957 = vcmask 97280
        %v958 = vsel %vm957, %v956, %v936
        %v959 = vsel %vm433, %v958, %v940
        %vm960 = vcmask 162816
        %v961 = vsel %vm960, %v959, %v944
        %vm962 = vcmask 195584
        %v963 = vsel %vm962, %v961, %v948
        %vm964 = vcmask 228352
        %v965 = vsel %vm964, %v963, %v952
        %v974 = vcombine.low %v853, %v854
        %v975 = vcombine.low %v855, %v856
        %v976 = vcombine.low %v857, %v858
        %v977 = vcombine.low %v859, %v860
        %v979 = vsel %vm955, %v869, 0
        %v981 = vsel %vm955, %v974, 0
        %v983 = vsel %vm955, %v975, 0
        %v985 = vsel %vm955, %v976, 0
        %v987 = vsel %vm955, %v977, 0
        %989 = vmatprep.subr.mxu0 0.0
        %990 = vmatpush1.xpose.msra.mxu0 %v981
        %991 = vmatprep.subr.mxu0 0.0
        %992 = vmatpush1.xpose.msra.mxu0 %v983
        %993 = vmatprep.subr.mxu0 0.0
        %994 = vmatpush1.xpose.msra.mxu0 %v985
        %995 = vmatprep.subr.mxu0 0.0
        %996 = vmatpush1.xpose.msra.mxu0 %v987
        %997 = vmatprep.subr.mxu0 0.0
        %998 = vmatpush1.xpose.msra.mxu0 0.0
        %999 = vmatprep.subr.mxu0 0.0
        %1000 = vmatpush1.xpose.msra.mxu0 0.0
        %1001 = vmatprep.subr.mxu0 0.0
        %1002 = vmatpush1.xpose.msra.mxu0 0.0
        %1003 = vmatprep.subr.mxu0 0.0
        %1004 = vmatpush1.xpose.msra.mxu0 0.0
        %1005 = vmatprep.subr.mxu0 0.0
        %1006 = vmatpush1.xpose.msra.mxu0 0.0
        %1007 = vmatprep.subr.mxu0 0.0
        %1008 = vmatpush1.xpose.msra.mxu0 0.0
        %1009 = vmatprep.subr.mxu0 0.0
        %1010 = vmatpush1.xpose.msra.mxu0 0.0
        %1011 = vmatprep.subr.mxu0 0.0
        %1012 = vmatpush1.xpose.msra.mxu0 0.0
        %1013 = vmatprep.subr.mxu0 0.0
        %1014 = vmatpush1.xpose.msra.mxu0 0.0
        %1015 = vmatprep.subr.mxu0 0.0
        %1016 = vmatpush1.xpose.msra.mxu0 0.0
        %1017 = vmatprep.subr.mxu0 0.0
        %1018 = vmatpush1.xpose.msra.mxu0 0.0
        %1019 = vmatprep.subr.mxu0 0.0
        %1020 = vmatpush1.xpose.msra.mxu0 0.0
        %1021 = vmatprep.subr.mxu0 0.0
        %1022 = vmatpush1.xpose.msra.mxu0 0.0
        %1023 = vmatprep.subr.mxu0 0.0
        %1024 = vmatpush1.xpose.msra.mxu0 0.0
        %1025 = vmatprep.subr.mxu0 0.0
        %1026 = vmatpush1.xpose.msra.mxu0 0.0
        %1027 = vmatprep.subr.mxu0 0.0
        %1028 = vmatpush1.xpose.msra.mxu0 0.0
        %1029 = vmatprep.subr.mxu0 0.0
        %1030 = vmatpush1.xpose.msra.mxu0 0.0
        %1031 = vmatprep.subr.mxu0 0.0
        %1032 = vmatpush1.xpose.msra.mxu0 0.0
        %1033 = vmatprep.subr.mxu0 0.0
        %1034 = vmatpush1.xpose.msra.mxu0 0.0
        %1035 = vmatprep.subr.mxu0 0.0
        %1036 = vmatpush1.xpose.msra.mxu0 0.0
        %1037 = vmatprep.subr.mxu0 0.0
        %1038 = vmatpush1.xpose.msra.mxu0 0.0
        %1039 = vmatprep.subr.mxu0 0.0
        %1040 = vmatpush1.xpose.msra.mxu0 0.0
        %1041 = vmatprep.subr.mxu0 0.0
        %1042 = vmatpush1.xpose.msra.mxu0 0.0
        %1043 = vmatprep.subr.mxu0 0.0
        %1044 = vmatpush1.xpose.msra.mxu0 0.0
        %1045 = vmatprep.subr.mxu0 0.0
        %1046 = vmatpush1.xpose.msra.mxu0 0.0
        %1047 = vmatprep.subr.mxu0 0.0
        %1048 = vmatpush1.xpose.msra.mxu0 0.0
        %1049 = vmatprep.subr.mxu0 0.0
        %1050 = vmatpush1.xpose.msra.mxu0 0.0
        %1051 = vmatprep.subr.mxu0 0.0
        %1052 = vmatpush1.xpose.msra.mxu0 0.0
        %1053 = vmatprep.mubr.f32.mxu0 0.0
        %1054 = vmatmul.mubr.f32.gmra.mrb[0].mxu0 %v979
        %v1055 = vpop.f32.mrb[0].mxu0
        %v1056 = vadd.f32 %v965, %v1055
        %v1057 = vpop.f32.mrb[0].mxu0
        %1058 = vdwg.mxu0
        %1060 = vrot.lane.b32.xlu0 %v1056, 124
        %v1061 = vpop.permute.xlu0 %1060
        %1063 = vrot.lane.b32.xlu0 %v1056, 120
        %v1064 = vpop.permute.xlu0 %1063
        %1066 = vrot.lane.b32.xlu0 %v1056, 116
        %v1067 = vpop.permute.xlu0 %1066
        %1069 = vrot.lane.b32.xlu0 %v1056, 112
        %v1070 = vpop.permute.xlu0 %1069
        %1072 = vrot.lane.b32.xlu0 %v1056, 108
        %v1073 = vpop.permute.xlu0 %1072
        %1075 = vrot.lane.b32.xlu0 %v1056, 104
        %v1076 = vpop.permute.xlu0 %1075
        %1078 = vrot.lane.b32.xlu0 %v1056, 100
        %v1079 = vpop.permute.xlu0 %1078
        %v1081 = vcombine.low %v1056, %v1064
        %v1082 = vcombine.high %v1056, %v1064
        %v1084 = vunpack.c.l.s4 1983009808
        %v1085 = vunpack.c.0.s8 %v1084
        %v1086 = vlaneseq
        %v1087 = vshrl.u32 %v1086, 7
        %v1088 = vsub.s32 %v1085, %v1087
        %v1089 = vrot.slane %v1081, %v1088
        %v1091 = vunpack.c.l.s4 1983009808
        %v1092 = vunpack.c.0.s8 %v1091
        %v1093 = vlaneseq
        %v1094 = vshrl.u32 %v1093, 7
        %v1095 = vsub.s32 %v1092, %v1094
        %v1096 = vrot.slane %v1082, %v1095
        %v1097 = vcombine.low %v1061, %v1067
        %v1098 = vcombine.high %v1061, %v1067
        %v1100 = vunpack.c.l.s4 1983009808
        %v1101 = vunpack.c.0.s8 %v1100
        %v1102 = vlaneseq
        %v1103 = vshrl.u32 %v1102, 7
        %v1104 = vsub.s32 %v1101, %v1103
        %v1105 = vrot.slane %v1097, %v1104
        %v1107 = vunpack.c.l.s4 1983009808
        %v1108 = vunpack.c.0.s8 %v1107
        %v1109 = vlaneseq
        %v1110 = vshrl.u32 %v1109, 7
        %v1111 = vsub.s32 %v1108, %v1110
        %v1112 = vrot.slane %v1098, %v1111
        %v1113 = vcombine.low %v1070, %v1076
        %v1114 = vcombine.high %v1070, %v1076
        %v1116 = vunpack.c.l.s4 1983009808
        %v1117 = vunpack.c.0.s8 %v1116
        %v1118 = vlaneseq
        %v1119 = vshrl.u32 %v1118, 7
        %v1120 = vsub.s32 %v1117, %v1119
        %v1121 = vrot.slane %v1113, %v1120
        %v1123 = vunpack.c.l.s4 1983009808
        %v1124 = vunpack.c.0.s8 %v1123
        %v1125 = vlaneseq
        %v1126 = vshrl.u32 %v1125, 7
        %v1127 = vsub.s32 %v1124, %v1126
        %v1128 = vrot.slane %v1114, %v1127
        %v1129 = vcombine.low %v1073, %v1079
        %v1130 = vcombine.high %v1073, %v1079
        %v1132 = vunpack.c.l.s4 1983009808
        %v1133 = vunpack.c.0.s8 %v1132
        %v1134 = vlaneseq
        %v1135 = vshrl.u32 %v1134, 7
        %v1136 = vsub.s32 %v1133, %v1135
        %v1137 = vrot.slane %v1129, %v1136
        %v1139 = vunpack.c.l.s4 1983009808
        %v1140 = vunpack.c.0.s8 %v1139
        %v1141 = vlaneseq
        %v1142 = vshrl.u32 %v1141, 7
        %v1143 = vsub.s32 %v1140, %v1142
        %v1144 = vrot.slane %v1130, %v1143
        %v1145 = vcombine.low %v1089, %v1105
        %v1146 = vcombine.high %v1089, %v1105
        %v1148 = vunpack.c.l.s4 1934713408
        %v1149 = vunpack.c.0.s8 %v1148
        %v1150 = vlaneseq
        %v1151 = vshrl.u32 %v1150, 7
        %v1152 = vsub.s32 %v1149, %v1151
        %v1153 = vrot.slane %v1145, %v1152
        %v1155 = vunpack.c.l.s4 1934713408
        %v1156 = vunpack.c.0.s8 %v1155
        %v1157 = vlaneseq
        %v1158 = vshrl.u32 %v1157, 7
        %v1159 = vsub.s32 %v1156, %v1158
        %v1160 = vrot.slane %v1146, %v1159
        %v1161 = vcombine.low %v1096, %v1112
        %v1162 = vcombine.high %v1096, %v1112
        %v1164 = vunpack.c.l.s4 1934713408
        %v1165 = vunpack.c.0.s8 %v1164
        %v1166 = vlaneseq
        %v1167 = vshrl.u32 %v1166, 7
        %v1168 = vsub.s32 %v1165, %v1167
        %v1169 = vrot.slane %v1161, %v1168
        %v1171 = vunpack.c.l.s4 1934713408
        %v1172 = vunpack.c.0.s8 %v1171
        %v1173 = vlaneseq
        %v1174 = vshrl.u32 %v1173, 7
        %v1175 = vsub.s32 %v1172, %v1174
        %v1176 = vrot.slane %v1162, %v1175
        %v1177 = vcombine.low %v1121, %v1137
        %v1178 = vcombine.high %v1121, %v1137
        %v1180 = vunpack.c.l.s4 1934713408
        %v1181 = vunpack.c.0.s8 %v1180
        %v1182 = vlaneseq
        %v1183 = vshrl.u32 %v1182, 7
        %v1184 = vsub.s32 %v1181, %v1183
        %v1185 = vrot.slane %v1177, %v1184
        %v1187 = vunpack.c.l.s4 1934713408
        %v1188 = vunpack.c.0.s8 %v1187
        %v1189 = vlaneseq
        %v1190 = vshrl.u32 %v1189, 7
        %v1191 = vsub.s32 %v1188, %v1190
        %v1192 = vrot.slane %v1178, %v1191
        %v1193 = vcombine.low %v1128, %v1144
        %v1194 = vcombine.high %v1128, %v1144
        %v1196 = vunpack.c.l.s4 1934713408
        %v1197 = vunpack.c.0.s8 %v1196
        %v1198 = vlaneseq
        %v1199 = vshrl.u32 %v1198, 7
        %v1200 = vsub.s32 %v1197, %v1199
        %v1201 = vrot.slane %v1193, %v1200
        %v1203 = vunpack.c.l.s4 1934713408
        %v1204 = vunpack.c.0.s8 %v1203
        %v1205 = vlaneseq
        %v1206 = vshrl.u32 %v1205, 7
        %v1207 = vsub.s32 %v1204, %v1206
        %v1208 = vrot.slane %v1194, %v1207
        %v1209 = vcombine.low %v1153, %v1185
        %v1210 = vcombine.high %v1153, %v1185
        %v1211 = vcombine.low %v1160, %v1192
        %v1212 = vcombine.high %v1160, %v1192
        %v1213 = vcombine.low %v1169, %v1201
        %v1214 = vcombine.high %v1169, %v1201
        %v1215 = vcombine.low %v1176, %v1208
        %v1216 = vcombine.high %v1176, %v1208
        %1217 = vxpose.xlu0.b32.start [1/16] %v1209, 128
        %1218 = vxpose.xlu0.b32.cont [2/16] 0.0, 128
        %1219 = vxpose.xlu0.b32.cont [3/16] 0.0, 128
        %1220 = vxpose.xlu0.b32.cont [4/16] 0.0, 128
        %1221 = vxpose.xlu0.b32.cont [5/16] 0.0, 128
        %1222 = vxpose.xlu0.b32.cont [6/16] 0.0, 128
        %1223 = vxpose.xlu0.b32.cont [7/16] 0.0, 128
        %1224 = vxpose.xlu0.b32.cont [8/16] 0.0, 128
        %1225 = vxpose.xlu0.b32.cont [9/16] 0.0, 128
        %1226 = vxpose.xlu0.b32.cont [10/16] 0.0, 128
        %1227 = vxpose.xlu0.b32.cont [11/16] 0.0, 128
        %1228 = vxpose.xlu0.b32.cont [12/16] 0.0, 128
        %1229 = vxpose.xlu0.b32.cont [13/16] 0.0, 128
        %1230 = vxpose.xlu0.b32.cont [14/16] 0.0, 128
        %1231 = vxpose.xlu0.b32.cont [15/16] 0.0, 128
        %1232 = vxpose.xlu0.b32.end [16/16] 0.0, 128
        %v1233 = vpop.trf.xlu0
        %v1234 = vpop.trf.xlu0
        %v1235 = vpop.trf.xlu0
        %v1236 = vpop.trf.xlu0
        %v1237 = vpop.trf.xlu0
        %v1238 = vpop.trf.xlu0
        %v1239 = vpop.trf.xlu0
        %v1240 = vpop.trf.xlu0
        %v1241 = vpop.trf.xlu0
        %v1242 = vpop.trf.xlu0
        %v1243 = vpop.trf.xlu0
        %v1244 = vpop.trf.xlu0
        %v1245 = vpop.trf.xlu0
        %v1246 = vpop.trf.xlu0
        %v1247 = vpop.trf.xlu0
        %v1248 = vpop.trf.xlu0
        %1249 = vxpose.xlu0.b32.start [1/16] %v1210, 128
        %1250 = vxpose.xlu0.b32.cont [2/16] 0.0, 128
        %1251 = vxpose.xlu0.b32.cont [3/16] 0.0, 128
        %1252 = vxpose.xlu0.b32.cont [4/16] 0.0, 128
        %1253 = vxpose.xlu0.b32.cont [5/16] 0.0, 128
        %1254 = vxpose.xlu0.b32.cont [6/16] 0.0, 128
        %1255 = vxpose.xlu0.b32.cont [7/16] 0.0, 128
        %1256 = vxpose.xlu0.b32.cont [8/16] 0.0, 128
        %1257 = vxpose.xlu0.b32.cont [9/16] 0.0, 128
        %1258 = vxpose.xlu0.b32.cont [10/16] 0.0, 128
        %1259 = vxpose.xlu0.b32.cont [11/16] 0.0, 128
        %1260 = vxpose.xlu0.b32.cont [12/16] 0.0, 128
        %1261 = vxpose.xlu0.b32.cont [13/16] 0.0, 128
        %1262 = vxpose.xlu0.b32.cont [14/16] 0.0, 128
        %1263 = vxpose.xlu0.b32.cont [15/16] 0.0, 128
        %1264 = vxpose.xlu0.b32.end [16/16] 0.0, 128
        %v1265 = vpop.trf.xlu0
        %v1266 = vpop.trf.xlu0
        %v1267 = vpop.trf.xlu0
        %v1268 = vpop.trf.xlu0
        %v1269 = vpop.trf.xlu0
        %v1270 = vpop.trf.xlu0
        %v1271 = vpop.trf.xlu0
        %v1272 = vpop.trf.xlu0
        %v1273 = vpop.trf.xlu0
        %v1274 = vpop.trf.xlu0
        %v1275 = vpop.trf.xlu0
        %v1276 = vpop.trf.xlu0
        %v1277 = vpop.trf.xlu0
        %v1278 = vpop.trf.xlu0
        %v1279 = vpop.trf.xlu0
        %v1280 = vpop.trf.xlu0
        %1281 = vxpose.xlu0.b32.start [1/16] %v1211, 128
        %1282 = vxpose.xlu0.b32.cont [2/16] 0.0, 128
        %1283 = vxpose.xlu0.b32.cont [3/16] 0.0, 128
        %1284 = vxpose.xlu0.b32.cont [4/16] 0.0, 128
        %1285 = vxpose.xlu0.b32.cont [5/16] 0.0, 128
        %1286 = vxpose.xlu0.b32.cont [6/16] 0.0, 128
        %1287 = vxpose.xlu0.b32.cont [7/16] 0.0, 128
        %1288 = vxpose.xlu0.b32.cont [8/16] 0.0, 128
        %1289 = vxpose.xlu0.b32.cont [9/16] 0.0, 128
        %1290 = vxpose.xlu0.b32.cont [10/16] 0.0, 128
        %1291 = vxpose.xlu0.b32.cont [11/16] 0.0, 128
        %1292 = vxpose.xlu0.b32.cont [12/16] 0.0, 128
        %1293 = vxpose.xlu0.b32.cont [13/16] 0.0, 128
        %1294 = vxpose.xlu0.b32.cont [14/16] 0.0, 128
        %1295 = vxpose.xlu0.b32.cont [15/16] 0.0, 128
        %1296 = vxpose.xlu0.b32.end [16/16] 0.0, 128
        %v1297 = vpop.trf.xlu0
        %v1298 = vpop.trf.xlu0
        %v1299 = vpop.trf.xlu0
        %v1300 = vpop.trf.xlu0
        %v1301 = vpop.trf.xlu0
        %v1302 = vpop.trf.xlu0
        %v1303 = vpop.trf.xlu0
        %v1304 = vpop.trf.xlu0
        %v1305 = vpop.trf.xlu0
        %v1306 = vpop.trf.xlu0
        %v1307 = vpop.trf.xlu0
        %v1308 = vpop.trf.xlu0
        %v1309 = vpop.trf.xlu0
        %v1310 = vpop.trf.xlu0
        %v1311 = vpop.trf.xlu0
        %v1312 = vpop.trf.xlu0
        %1313 = vxpose.xlu0.b32.start [1/16] %v1212, 128
        %1314 = vxpose.xlu0.b32.cont [2/16] 0.0, 128
        %1315 = vxpose.xlu0.b32.cont [3/16] 0.0, 128
        %1316 = vxpose.xlu0.b32.cont [4/16] 0.0, 128
        %1317 = vxpose.xlu0.b32.cont [5/16] 0.0, 128
        %1318 = vxpose.xlu0.b32.cont [6/16] 0.0, 128
        %1319 = vxpose.xlu0.b32.cont [7/16] 0.0, 128
        %1320 = vxpose.xlu0.b32.cont [8/16] 0.0, 128
        %1321 = vxpose.xlu0.b32.cont [9/16] 0.0, 128
        %1322 = vxpose.xlu0.b32.cont [10/16] 0.0, 128
        %1323 = vxpose.xlu0.b32.cont [11/16] 0.0, 128
        %1324 = vxpose.xlu0.b32.cont [12/16] 0.0, 128
        %1325 = vxpose.xlu0.b32.cont [13/16] 0.0, 128
        %1326 = vxpose.xlu0.b32.cont [14/16] 0.0, 128
        %1327 = vxpose.xlu0.b32.cont [15/16] 0.0, 128
        %1328 = vxpose.xlu0.b32.end [16/16] 0.0, 128
        %v1329 = vpop.trf.xlu0
        %v1330 = vpop.trf.xlu0
        %v1331 = vpop.trf.xlu0
        %v1332 = vpop.trf.xlu0
        %v1333 = vpop.trf.xlu0
        %v1334 = vpop.trf.xlu0
        %v1335 = vpop.trf.xlu0
        %v1336 = vpop.trf.xlu0
        %v1337 = vpop.trf.xlu0
        %v1338 = vpop.trf.xlu0
        %v1339 = vpop.trf.xlu0
        %v1340 = vpop.trf.xlu0
        %v1341 = vpop.trf.xlu0
        %v1342 = vpop.trf.xlu0
        %v1343 = vpop.trf.xlu0
        %v1344 = vpop.trf.xlu0
        %1345 = vxpose.xlu0.b32.start [1/16] %v1213, 128
        %1346 = vxpose.xlu0.b32.cont [2/16] 0.0, 128
        %1347 = vxpose.xlu0.b32.cont [3/16] 0.0, 128
        %1348 = vxpose.xlu0.b32.cont [4/16] 0.0, 128
        %1349 = vxpose.xlu0.b32.cont [5/16] 0.0, 128
        %1350 = vxpose.xlu0.b32.cont [6/16] 0.0, 128
        %1351 = vxpose.xlu0.b32.cont [7/16] 0.0, 128
        %1352 = vxpose.xlu0.b32.cont [8/16] 0.0, 128
        %1353 = vxpose.xlu0.b32.cont [9/16] 0.0, 128
        %1354 = vxpose.xlu0.b32.cont [10/16] 0.0, 128
        %1355 = vxpose.xlu0.b32.cont [11/16] 0.0, 128
        %1356 = vxpose.xlu0.b32.cont [12/16] 0.0, 128
        %1357 = vxpose.xlu0.b32.cont [13/16] 0.0, 128
        %1358 = vxpose.xlu0.b32.cont [14/16] 0.0, 128
        %1359 = vxpose.xlu0.b32.cont [15/16] 0.0, 128
        %1360 = vxpose.xlu0.b32.end [16/16] 0.0, 128
        %v1361 = vpop.trf.xlu0
        %v1362 = vpop.trf.xlu0
        %v1363 = vpop.trf.xlu0
        %v1364 = vpop.trf.xlu0
        %v1365 = vpop.trf.xlu0
        %v1366 = vpop.trf.xlu0
        %v1367 = vpop.trf.xlu0
        %v1368 = vpop.trf.xlu0
        %v1369 = vpop.trf.xlu0
        %v1370 = vpop.trf.xlu0
        %v1371 = vpop.trf.xlu0
        %v1372 = vpop.trf.xlu0
        %v1373 = vpop.trf.xlu0
        %v1374 = vpop.trf.xlu0
        %v1375 = vpop.trf.xlu0
        %v1376 = vpop.trf.xlu0
        %1377 = vxpose.xlu0.b32.start [1/16] %v1214, 128
        %1378 = vxpose.xlu0.b32.cont [2/16] 0.0, 128
        %1379 = vxpose.xlu0.b32.cont [3/16] 0.0, 128
        %1380 = vxpose.xlu0.b32.cont [4/16] 0.0, 128
        %1381 = vxpose.xlu0.b32.cont [5/16] 0.0, 128
        %1382 = vxpose.xlu0.b32.cont [6/16] 0.0, 128
        %1383 = vxpose.xlu0.b32.cont [7/16] 0.0, 128
        %1384 = vxpose.xlu0.b32.cont [8/16] 0.0, 128
        %1385 = vxpose.xlu0.b32.cont [9/16] 0.0, 128
        %1386 = vxpose.xlu0.b32.cont [10/16] 0.0, 128
        %1387 = vxpose.xlu0.b32.cont [11/16] 0.0, 128
        %1388 = vxpose.xlu0.b32.cont [12/16] 0.0, 128
        %1389 = vxpose.xlu0.b32.cont [13/16] 0.0, 128
        %1390 = vxpose.xlu0.b32.cont [14/16] 0.0, 128
        %1391 = vxpose.xlu0.b32.cont [15/16] 0.0, 128
        %1392 = vxpose.xlu0.b32.end [16/16] 0.0, 128
        %v1393 = vpop.trf.xlu0
        %v1394 = vpop.trf.xlu0
        %v1395 = vpop.trf.xlu0
        %v1396 = vpop.trf.xlu0
        %v1397 = vpop.trf.xlu0
        %v1398 = vpop.trf.xlu0
        %v1399 = vpop.trf.xlu0
        %v1400 = vpop.trf.xlu0
        %v1401 = vpop.trf.xlu0
        %v1402 = vpop.trf.xlu0
        %v1403 = vpop.trf.xlu0
        %v1404 = vpop.trf.xlu0
        %v1405 = vpop.trf.xlu0
        %v1406 = vpop.trf.xlu0
        %v1407 = vpop.trf.xlu0
        %v1408 = vpop.trf.xlu0
        %1409 = vxpose.xlu0.b32.start [1/16] %v1215, 128
        %1410 = vxpose.xlu0.b32.cont [2/16] 0.0, 128
        %1411 = vxpose.xlu0.b32.cont [3/16] 0.0, 128
        %1412 = vxpose.xlu0.b32.cont [4/16] 0.0, 128
        %1413 = vxpose.xlu0.b32.cont [5/16] 0.0, 128
        %1414 = vxpose.xlu0.b32.cont [6/16] 0.0, 128
        %1415 = vxpose.xlu0.b32.cont [7/16] 0.0, 128
        %1416 = vxpose.xlu0.b32.cont [8/16] 0.0, 128
        %1417 = vxpose.xlu0.b32.cont [9/16] 0.0, 128
        %1418 = vxpose.xlu0.b32.cont [10/16] 0.0, 128
        %1419 = vxpose.xlu0.b32.cont [11/16] 0.0, 128
        %1420 = vxpose.xlu0.b32.cont [12/16] 0.0, 128
        %1421 = vxpose.xlu0.b32.cont [13/16] 0.0, 128
        %1422 = vxpose.xlu0.b32.cont [14/16] 0.0, 128
        %1423 = vxpose.xlu0.b32.cont [15/16] 0.0, 128
        %1424 = vxpose.xlu0.b32.end [16/16] 0.0, 128
        %v1425 = vpop.trf.xlu0
        %v1426 = vpop.trf.xlu0
        %v1427 = vpop.trf.xlu0
        %v1428 = vpop.trf.xlu0
        %v1429 = vpop.trf.xlu0
        %v1430 = vpop.trf.xlu0
        %v1431 = vpop.trf.xlu0
        %v1432 = vpop.trf.xlu0
        %v1433 = vpop.trf.xlu0
        %v1434 = vpop.trf.xlu0
        %v1435 = vpop.trf.xlu0
        %v1436 = vpop.trf.xlu0
        %v1437 = vpop.trf.xlu0
        %v1438 = vpop.trf.xlu0
        %v1439 = vpop.trf.xlu0
        %v1440 = vpop.trf.xlu0
        %1441 = vxpose.xlu0.b32.start [1/16] %v1216, 128
        %1442 = vxpose.xlu0.b32.cont [2/16] 0.0, 128
        %1443 = vxpose.xlu0.b32.cont [3/16] 0.0, 128
        %1444 = vxpose.xlu0.b32.cont [4/16] 0.0, 128
        %1445 = vxpose.xlu0.b32.cont [5/16] 0.0, 128
        %1446 = vxpose.xlu0.b32.cont [6/16] 0.0, 128
        %1447 = vxpose.xlu0.b32.cont [7/16] 0.0, 128
        %1448 = vxpose.xlu0.b32.cont [8/16] 0.0, 128
        %1449 = vxpose.xlu0.b32.cont [9/16] 0.0, 128
        %1450 = vxpose.xlu0.b32.cont [10/16] 0.0, 128
        %1451 = vxpose.xlu0.b32.cont [11/16] 0.0, 128
        %1452 = vxpose.xlu0.b32.cont [12/16] 0.0, 128
        %1453 = vxpose.xlu0.b32.cont [13/16] 0.0, 128
        %1454 = vxpose.xlu0.b32.cont [14/16] 0.0, 128
        %1455 = vxpose.xlu0.b32.cont [15/16] 0.0, 128
        %1456 = vxpose.xlu0.b32.end [16/16] 0.0, 128
        %v1457 = vpop.trf.xlu0
        %v1458 = vpop.trf.xlu0
        %v1459 = vpop.trf.xlu0
        %v1460 = vpop.trf.xlu0
        %v1461 = vpop.trf.xlu0
        %v1462 = vpop.trf.xlu0
        %v1463 = vpop.trf.xlu0
        %v1464 = vpop.trf.xlu0
        %v1465 = vpop.trf.xlu0
        %v1466 = vpop.trf.xlu0
        %v1467 = vpop.trf.xlu0
        %v1468 = vpop.trf.xlu0
        %v1469 = vpop.trf.xlu0
        %v1470 = vpop.trf.xlu0
        %v1471 = vpop.trf.xlu0
        %v1472 = vpop.trf.xlu0
        %v1473 = vcombine.low %v1233, %v1297
        %v1475 = vunpack.c.l.s4 1983009808
        %v1476 = vunpack.c.0.s8 %v1475
        %v1477 = vlaneseq
        %v1478 = vshrl.u32 %v1477, 7
        %v1479 = vsub.s32 %v1476, %v1478
        %v1480 = vrot.slane %v1473, %v1479
        %v1481 = vcombine.low %v1265, %v1329
        %v1483 = vunpack.c.l.s4 1983009808
        %v1484 = vunpack.c.0.s8 %v1483
        %v1485 = vlaneseq
        %v1486 = vshrl.u32 %v1485, 7
        %v1487 = vsub.s32 %v1484, %v1486
        %v1488 = vrot.slane %v1481, %v1487
        %v1489 = vcombine.low %v1361, %v1425
        %v1491 = vunpack.c.l.s4 1983009808
        %v1492 = vunpack.c.0.s8 %v1491
        %v1493 = vlaneseq
        %v1494 = vshrl.u32 %v1493, 7
        %v1495 = vsub.s32 %v1492, %v1494
        %v1496 = vrot.slane %v1489, %v1495
        %v1497 = vcombine.low %v1393, %v1457
        %v1499 = vunpack.c.l.s4 1983009808
        %v1500 = vunpack.c.0.s8 %v1499
        %v1501 = vlaneseq
        %v1502 = vshrl.u32 %v1501, 7
        %v1503 = vsub.s32 %v1500, %v1502
        %v1504 = vrot.slane %v1497, %v1503
        %v1505 = vcombine.low %v1480, %v1488
        %v1506 = vcombine.high %v1480, %v1488
        %v1508 = vunpack.c.l.s4 1934713408
        %v1509 = vunpack.c.0.s8 %v1508
        %v1510 = vlaneseq
        %v1511 = vshrl.u32 %v1510, 7
        %v1512 = vsub.s32 %v1509, %v1511
        %v1513 = vrot.slane %v1505, %v1512
        %v1515 = vunpack.c.l.s4 1934713408
        %v1516 = vunpack.c.0.s8 %v1515
        %v1517 = vlaneseq
        %v1518 = vshrl.u32 %v1517, 7
        %v1519 = vsub.s32 %v1516, %v1518
        %v1520 = vrot.slane %v1506, %v1519
        %v1521 = vcombine.low %v1496, %v1504
        %v1522 = vcombine.high %v1496, %v1504
        %v1524 = vunpack.c.l.s4 1934713408
        %v1525 = vunpack.c.0.s8 %v1524
        %v1526 = vlaneseq
        %v1527 = vshrl.u32 %v1526, 7
        %v1528 = vsub.s32 %v1525, %v1527
        %v1529 = vrot.slane %v1521, %v1528
        %v1531 = vunpack.c.l.s4 1934713408
        %v1532 = vunpack.c.0.s8 %v1531
        %v1533 = vlaneseq
        %v1534 = vshrl.u32 %v1533, 7
        %v1535 = vsub.s32 %v1532, %v1534
        %v1536 = vrot.slane %v1522, %v1535
        %v1537 = vcombine.low %v1513, %v1529
        %v1538 = vcombine.high %v1513, %v1529
        %v1539 = vcombine.low %v1520, %v1536
        %v1540 = vcombine.high %v1520, %v1536
        %1541 = vxpose.xlu0.b32.start [1/16] %v1537, 128
        %1542 = vxpose.xlu0.b32.cont [2/16] 0.0, 128
        %1543 = vxpose.xlu0.b32.cont [3/16] 0.0, 128
        %1544 = vxpose.xlu0.b32.cont [4/16] 0.0, 128
        %1545 = vxpose.xlu0.b32.cont [5/16] 0.0, 128
        %1546 = vxpose.xlu0.b32.cont [6/16] 0.0, 128
        %1547 = vxpose.xlu0.b32.cont [7/16] 0.0, 128
        %1548 = vxpose.xlu0.b32.cont [8/16] 0.0, 128
        %1549 = vxpose.xlu0.b32.cont [9/16] 0.0, 128
        %1550 = vxpose.xlu0.b32.cont [10/16] 0.0, 128
        %1551 = vxpose.xlu0.b32.cont [11/16] 0.0, 128
        %1552 = vxpose.xlu0.b32.cont [12/16] 0.0, 128
        %1553 = vxpose.xlu0.b32.cont [13/16] 0.0, 128
        %1554 = vxpose.xlu0.b32.cont [14/16] 0.0, 128
        %1555 = vxpose.xlu0.b32.cont [15/16] 0.0, 128
        %1556 = vxpose.xlu0.b32.end [16/16] 0.0, 128
        %v1557 = vpop.trf.xlu0
        %v1558 = vpop.trf.xlu0
        %v1559 = vpop.trf.xlu0
        %v1560 = vpop.trf.xlu0
        %v1561 = vpop.trf.xlu0
        %v1562 = vpop.trf.xlu0
        %v1563 = vpop.trf.xlu0
        %v1564 = vpop.trf.xlu0
        %v1565 = vpop.trf.xlu0
        %v1566 = vpop.trf.xlu0
        %v1567 = vpop.trf.xlu0
        %v1568 = vpop.trf.xlu0
        %v1569 = vpop.trf.xlu0
        %v1570 = vpop.trf.xlu0
        %v1571 = vpop.trf.xlu0
        %v1572 = vpop.trf.xlu0
        %1573 = vxpose.xlu0.b32.start [1/16] %v1538, 128
        %1574 = vxpose.xlu0.b32.cont [2/16] 0.0, 128
        %1575 = vxpose.xlu0.b32.cont [3/16] 0.0, 128
        %1576 = vxpose.xlu0.b32.cont [4/16] 0.0, 128
        %1577 = vxpose.xlu0.b32.cont [5/16] 0.0, 128
        %1578 = vxpose.xlu0.b32.cont [6/16] 0.0, 128
        %1579 = vxpose.xlu0.b32.cont [7/16] 0.0, 128
        %1580 = vxpose.xlu0.b32.cont [8/16] 0.0, 128
        %1581 = vxpose.xlu0.b32.cont [9/16] 0.0, 128
        %1582 = vxpose.xlu0.b32.cont [10/16] 0.0, 128
        %1583 = vxpose.xlu0.b32.cont [11/16] 0.0, 128
        %1584 = vxpose.xlu0.b32.cont [12/16] 0.0, 128
        %1585 = vxpose.xlu0.b32.cont [13/16] 0.0, 128
        %1586 = vxpose.xlu0.b32.cont [14/16] 0.0, 128
        %1587 = vxpose.xlu0.b32.cont [15/16] 0.0, 128
        %1588 = vxpose.xlu0.b32.end [16/16] 0.0, 128
        %v1589 = vpop.trf.xlu0
        %v1590 = vpop.trf.xlu0
        %v1591 = vpop.trf.xlu0
        %v1592 = vpop.trf.xlu0
        %v1593 = vpop.trf.xlu0
        %v1594 = vpop.trf.xlu0
        %v1595 = vpop.trf.xlu0
        %v1596 = vpop.trf.xlu0
        %v1597 = vpop.trf.xlu0
        %v1598 = vpop.trf.xlu0
        %v1599 = vpop.trf.xlu0
        %v1600 = vpop.trf.xlu0
        %v1601 = vpop.trf.xlu0
        %v1602 = vpop.trf.xlu0
        %v1603 = vpop.trf.xlu0
        %v1604 = vpop.trf.xlu0
        %1605 = vxpose.xlu0.b32.start [1/16] %v1539, 128
        %1606 = vxpose.xlu0.b32.cont [2/16] 0.0, 128
        %1607 = vxpose.xlu0.b32.cont [3/16] 0.0, 128
        %1608 = vxpose.xlu0.b32.cont [4/16] 0.0, 128
        %1609 = vxpose.xlu0.b32.cont [5/16] 0.0, 128
        %1610 = vxpose.xlu0.b32.cont [6/16] 0.0, 128
        %1611 = vxpose.xlu0.b32.cont [7/16] 0.0, 128
        %1612 = vxpose.xlu0.b32.cont [8/16] 0.0, 128
        %1613 = vxpose.xlu0.b32.cont [9/16] 0.0, 128
        %1614 = vxpose.xlu0.b32.cont [10/16] 0.0, 128
        %1615 = vxpose.xlu0.b32.cont [11/16] 0.0, 128
        %1616 = vxpose.xlu0.b32.cont [12/16] 0.0, 128
        %1617 = vxpose.xlu0.b32.cont [13/16] 0.0, 128
        %1618 = vxpose.xlu0.b32.cont [14/16] 0.0, 128
        %1619 = vxpose.xlu0.b32.cont [15/16] 0.0, 128
        %1620 = vxpose.xlu0.b32.end [16/16] 0.0, 128
        %v1621 = vpop.trf.xlu0
        %v1622 = vpop.trf.xlu0
        %v1623 = vpop.trf.xlu0
        %v1624 = vpop.trf.xlu0
        %v1625 = vpop.trf.xlu0
        %v1626 = vpop.trf.xlu0
        %v1627 = vpop.trf.xlu0
        %v1628 = vpop.trf.xlu0
        %v1629 = vpop.trf.xlu0
        %v1630 = vpop.trf.xlu0
        %v1631 = vpop.trf.xlu0
        %v1632 = vpop.trf.xlu0
        %v1633 = vpop.trf.xlu0
        %v1634 = vpop.trf.xlu0
        %v1635 = vpop.trf.xlu0
        %v1636 = vpop.trf.xlu0
        %1637 = vxpose.xlu0.b32.start [1/16] %v1540, 128
        %1638 = vxpose.xlu0.b32.cont [2/16] 0.0, 128
        %1639 = vxpose.xlu0.b32.cont [3/16] 0.0, 128
        %1640 = vxpose.xlu0.b32.cont [4/16] 0.0, 128
        %1641 = vxpose.xlu0.b32.cont [5/16] 0.0, 128
        %1642 = vxpose.xlu0.b32.cont [6/16] 0.0, 128
        %1643 = vxpose.xlu0.b32.cont [7/16] 0.0, 128
        %1644 = vxpose.xlu0.b32.cont [8/16] 0.0, 128
        %1645 = vxpose.xlu0.b32.cont [9/16] 0.0, 128
        %1646 = vxpose.xlu0.b32.cont [10/16] 0.0, 128
        %1647 = vxpose.xlu0.b32.cont [11/16] 0.0, 128
        %1648 = vxpose.xlu0.b32.cont [12/16] 0.0, 128
        %1649 = vxpose.xlu0.b32.cont [13/16] 0.0, 128
        %1650 = vxpose.xlu0.b32.cont [14/16] 0.0, 128
        %1651 = vxpose.xlu0.b32.cont [15/16] 0.0, 128
        %1652 = vxpose.xlu0.b32.end [16/16] 0.0, 128
        %v1653 = vpop.trf.xlu0
        %v1654 = vpop.trf.xlu0
        %v1655 = vpop.trf.xlu0
        %v1656 = vpop.trf.xlu0
        %v1657 = vpop.trf.xlu0
        %v1658 = vpop.trf.xlu0
        %v1659 = vpop.trf.xlu0
        %v1660 = vpop.trf.xlu0
        %v1661 = vpop.trf.xlu0
        %v1662 = vpop.trf.xlu0
        %v1663 = vpop.trf.xlu0
        %v1664 = vpop.trf.xlu0
        %v1665 = vpop.trf.xlu0
        %v1666 = vpop.trf.xlu0
        %v1667 = vpop.trf.xlu0
        %v1668 = vpop.trf.xlu0
        %1669 = vxpose.xlu0.b32.start [1/16] %v582, 128
        %1670 = vxpose.xlu0.b32.cont [2/16] 0.0, 128
        %1671 = vxpose.xlu0.b32.cont [3/16] 0.0, 128
        %1672 = vxpose.xlu0.b32.cont [4/16] 0.0, 128
        %1673 = vxpose.xlu0.b32.cont [5/16] 0.0, 128
        %1674 = vxpose.xlu0.b32.cont [6/16] 0.0, 128
        %1675 = vxpose.xlu0.b32.cont [7/16] 0.0, 128
        %1676 = vxpose.xlu0.b32.cont [8/16] 0.0, 128
        %1677 = vxpose.xlu0.b32.cont [9/16] 0.0, 128
        %1678 = vxpose.xlu0.b32.cont [10/16] 0.0, 128
        %1679 = vxpose.xlu0.b32.cont [11/16] 0.0, 128
        %1680 = vxpose.xlu0.b32.cont [12/16] 0.0, 128
        %1681 = vxpose.xlu0.b32.cont [13/16] 0.0, 128
        %1682 = vxpose.xlu0.b32.cont [14/16] 0.0, 128
        %1683 = vxpose.xlu0.b32.cont [15/16] 0.0, 128
        %1684 = vxpose.xlu0.b32.end [16/16] 0.0, 128
        %v1685 = vpop.trf.xlu0
        %v1686 = vpop.trf.xlu0
        %v1687 = vpop.trf.xlu0
        %v1688 = vpop.trf.xlu0
        %v1689 = vpop.trf.xlu0
        %v1690 = vpop.trf.xlu0
        %v1691 = vpop.trf.xlu0
        %v1692 = vpop.trf.xlu0
        %v1693 = vpop.trf.xlu0
        %v1694 = vpop.trf.xlu0
        %v1695 = vpop.trf.xlu0
        %v1696 = vpop.trf.xlu0
        %v1697 = vpop.trf.xlu0
        %v1698 = vpop.trf.xlu0
        %v1699 = vpop.trf.xlu0
        %v1700 = vpop.trf.xlu0
        %1701 = vxpose.xlu0.b32.start [1/16] %v594, 128
        %1702 = vxpose.xlu0.b32.cont [2/16] 0.0, 128
        %1703 = vxpose.xlu0.b32.cont [3/16] 0.0, 128
        %1704 = vxpose.xlu0.b32.cont [4/16] 0.0, 128
        %1705 = vxpose.xlu0.b32.cont [5/16] 0.0, 128
        %1706 = vxpose.xlu0.b32.cont [6/16] 0.0, 128
        %1707 = vxpose.xlu0.b32.cont [7/16] 0.0, 128
        %1708 = vxpose.xlu0.b32.cont [8/16] 0.0, 128
        %1709 = vxpose.xlu0.b32.cont [9/16] 0.0, 128
        %1710 = vxpose.xlu0.b32.cont [10/16] 0.0, 128
        %1711 = vxpose.xlu0.b32.cont [11/16] 0.0, 128
        %1712 = vxpose.xlu0.b32.cont [12/16] 0.0, 128
        %1713 = vxpose.xlu0.b32.cont [13/16] 0.0, 128
        %1714 = vxpose.xlu0.b32.cont [14/16] 0.0, 128
        %1715 = vxpose.xlu0.b32.cont [15/16] 0.0, 128
        %1716 = vxpose.xlu0.b32.end [16/16] 0.0, 128
        %v1717 = vpop.trf.xlu0
        %v1718 = vpop.trf.xlu0
        %v1719 = vpop.trf.xlu0
        %v1720 = vpop.trf.xlu0
        %v1721 = vpop.trf.xlu0
        %v1722 = vpop.trf.xlu0
        %v1723 = vpop.trf.xlu0
        %v1724 = vpop.trf.xlu0
        %v1725 = vpop.trf.xlu0
        %v1726 = vpop.trf.xlu0
        %v1727 = vpop.trf.xlu0
        %v1728 = vpop.trf.xlu0
        %v1729 = vpop.trf.xlu0
        %v1730 = vpop.trf.xlu0
        %v1731 = vpop.trf.xlu0
        %v1732 = vpop.trf.xlu0
        %1733 = vxpose.xlu0.b32.start [1/16] %v597, 128
        %1734 = vxpose.xlu0.b32.cont [2/16] 0.0, 128
        %1735 = vxpose.xlu0.b32.cont [3/16] 0.0, 128
        %1736 = vxpose.xlu0.b32.cont [4/16] 0.0, 128
        %1737 = vxpose.xlu0.b32.cont [5/16] 0.0, 128
        %1738 = vxpose.xlu0.b32.cont [6/16] 0.0, 128
        %1739 = vxpose.xlu0.b32.cont [7/16] 0.0, 128
        %1740 = vxpose.xlu0.b32.cont [8/16] 0.0, 128
        %1741 = vxpose.xlu0.b32.cont [9/16] 0.0, 128
        %1742 = vxpose.xlu0.b32.cont [10/16] 0.0, 128
        %1743 = vxpose.xlu0.b32.cont [11/16] 0.0, 128
        %1744 = vxpose.xlu0.b32.cont [12/16] 0.0, 128
        %1745 = vxpose.xlu0.b32.cont [13/16] 0.0, 128
        %1746 = vxpose.xlu0.b32.cont [14/16] 0.0, 128
        %1747 = vxpose.xlu0.b32.cont [15/16] 0.0, 128
        %1748 = vxpose.xlu0.b32.end [16/16] 0.0, 128
        %v1749 = vpop.trf.xlu0
        %v1750 = vpop.trf.xlu0
        %v1751 = vpop.trf.xlu0
        %v1752 = vpop.trf.xlu0
        %v1753 = vpop.trf.xlu0
        %v1754 = vpop.trf.xlu0
        %v1755 = vpop.trf.xlu0
        %v1756 = vpop.trf.xlu0
        %v1757 = vpop.trf.xlu0
        %v1758 = vpop.trf.xlu0
        %v1759 = vpop.trf.xlu0
        %v1760 = vpop.trf.xlu0
        %v1761 = vpop.trf.xlu0
        %v1762 = vpop.trf.xlu0
        %v1763 = vpop.trf.xlu0
        %v1764 = vpop.trf.xlu0
        %1765 = vxpose.xlu0.b32.start [1/16] %v600, 128
        %1766 = vxpose.xlu0.b32.cont [2/16] 0.0, 128
        %1767 = vxpose.xlu0.b32.cont [3/16] 0.0, 128
        %1768 = vxpose.xlu0.b32.cont [4/16] 0.0, 128
        %1769 = vxpose.xlu0.b32.cont [5/16] 0.0, 128
        %1770 = vxpose.xlu0.b32.cont [6/16] 0.0, 128
        %1771 = vxpose.xlu0.b32.cont [7/16] 0.0, 128
        %1772 = vxpose.xlu0.b32.cont [8/16] 0.0, 128
        %1773 = vxpose.xlu0.b32.cont [9/16] 0.0, 128
        %1774 = vxpose.xlu0.b32.cont [10/16] 0.0, 128
        %1775 = vxpose.xlu0.b32.cont [11/16] 0.0, 128
        %1776 = vxpose.xlu0.b32.cont [12/16] 0.0, 128
        %1777 = vxpose.xlu0.b32.cont [13/16] 0.0, 128
        %1778 = vxpose.xlu0.b32.cont [14/16] 0.0, 128
        %1779 = vxpose.xlu0.b32.cont [15/16] 0.0, 128
        %1780 = vxpose.xlu0.b32.end [16/16] 0.0, 128
        %v1781 = vpop.trf.xlu0
        %v1782 = vpop.trf.xlu0
        %v1783 = vpop.trf.xlu0
        %v1784 = vpop.trf.xlu0
        %v1785 = vpop.trf.xlu0
        %v1786 = vpop.trf.xlu0
        %v1787 = vpop.trf.xlu0
        %v1788 = vpop.trf.xlu0
        %v1789 = vpop.trf.xlu0
        %v1790 = vpop.trf.xlu0
        %v1791 = vpop.trf.xlu0
        %v1792 = vpop.trf.xlu0
        %v1793 = vpop.trf.xlu0
        %v1794 = vpop.trf.xlu0
        %v1795 = vpop.trf.xlu0
        %v1796 = vpop.trf.xlu0
        %v1797 = vsel %vm955, %v504, 0
        %1799 = vmatprep.subr.mxu0 0.0
        %1800 = vmatpush1.msra.mxu0 %v1685
        %1801 = vmatprep.subr.mxu0 0.0
        %1802 = vmatpush1.msra.mxu0 0.0
        %1803 = vmatprep.subr.mxu0 0.0
        %1804 = vmatpush1.msra.mxu0 0.0
        %1805 = vmatprep.subr.mxu0 0.0
        %1806 = vmatpush1.msra.mxu0 0.0
        %1807 = vmatprep.subr.mxu0 0.0
        %1808 = vmatpush1.msra.mxu0 0.0
        %1809 = vmatprep.subr.mxu0 0.0
        %1810 = vmatpush1.msra.mxu0 0.0
        %1811 = vmatprep.subr.mxu0 0.0
        %1812 = vmatpush1.msra.mxu0 0.0
        %1813 = vmatprep.subr.mxu0 0.0
        %1814 = vmatpush1.msra.mxu0 0.0
        %1815 = vmatprep.subr.mxu0 0.0
        %1816 = vmatpush1.msra.mxu0 0.0
        %1817 = vmatprep.subr.mxu0 0.0
        %1818 = vmatpush1.msra.mxu0 0.0
        %1819 = vmatprep.subr.mxu0 0.0
        %1820 = vmatpush1.msra.mxu0 0.0
        %1821 = vmatprep.subr.mxu0 0.0
        %1822 = vmatpush1.msra.mxu0 0.0
        %1823 = vmatprep.subr.mxu0 0.0
        %1824 = vmatpush1.msra.mxu0 0.0
        %1825 = vmatprep.subr.mxu0 0.0
        %1826 = vmatpush1.msra.mxu0 0.0
        %1827 = vmatprep.subr.mxu0 0.0
        %1828 = vmatpush1.msra.mxu0 0.0
        %1829 = vmatprep.subr.mxu0 0.0
        %1830 = vmatpush1.msra.mxu0 0.0
        %1831 = vmatprep.subr.mxu0 0.0
        %1832 = vmatpush1.msra.mxu0 0.0
        %1833 = vmatprep.subr.mxu0 0.0
        %1834 = vmatpush1.msra.mxu0 0.0
        %1835 = vmatprep.subr.mxu0 0.0
        %1836 = vmatpush1.msra.mxu0 0.0
        %1837 = vmatprep.subr.mxu0 0.0
        %1838 = vmatpush1.msra.mxu0 0.0
        %1839 = vmatprep.subr.mxu0 0.0
        %1840 = vmatpush1.msra.mxu0 0.0
        %1841 = vmatprep.subr.mxu0 0.0
        %1842 = vmatpush1.msra.mxu0 0.0
        %1843 = vmatprep.subr.mxu0 0.0
        %1844 = vmatpush1.msra.mxu0 0.0
        %1845 = vmatprep.subr.mxu0 0.0
        %1846 = vmatpush1.msra.mxu0 0.0
        %1847 = vmatprep.subr.mxu0 0.0
        %1848 = vmatpush1.msra.mxu0 0.0
        %1849 = vmatprep.subr.mxu0 0.0
        %1850 = vmatpush1.msra.mxu0 0.0
        %1851 = vmatprep.subr.mxu0 0.0
        %1852 = vmatpush1.msra.mxu0 0.0
        %1853 = vmatprep.subr.mxu0 0.0
        %1854 = vmatpush1.msra.mxu0 0.0
        %1855 = vmatprep.subr.mxu0 0.0
        %1856 = vmatpush1.msra.mxu0 0.0
        %1857 = vmatprep.subr.mxu0 0.0
        %1858 = vmatpush1.msra.mxu0 0.0
        %1859 = vmatprep.subr.mxu0 0.0
        %1860 = vmatpush1.msra.mxu0 0.0
        %1861 = vmatprep.subr.mxu0 0.0
        %1862 = vmatpush1.msra.mxu0 0.0
        %1863 = vmatprep.mubr.f32.mxu0 0.0
        %1864 = vmatmul.mubr.f32.gmra.mrb[0].mxu0 %v1797
        %v1865 = vpop.f32.mrb[0].mxu0
        %v1866 = vadd.f32 %v1557, %v1865
        %v1867 = vpop.f32.mrb[0].mxu0
        %1868 = vdwg.mxu0
        %v1869 = vsel %vm955, %v587, 0
        %1871 = vmatprep.subr.mxu0 0.0
        %1872 = vmatpush1.msra.mxu0 %v1717
        %1873 = vmatprep.subr.mxu0 0.0
        %1874 = vmatpush1.msra.mxu0 0.0
        %1875 = vmatprep.subr.mxu0 0.0
        %1876 = vmatpush1.msra.mxu0 0.0
        %1877 = vmatprep.subr.mxu0 0.0
        %1878 = vmatpush1.msra.mxu0 0.0
        %1879 = vmatprep.subr.mxu0 0.0
        %1880 = vmatpush1.msra.mxu0 0.0
        %1881 = vmatprep.subr.mxu0 0.0
        %1882 = vmatpush1.msra.mxu0 0.0
        %1883 = vmatprep.subr.mxu0 0.0
        %1884 = vmatpush1.msra.mxu0 0.0
        %1885 = vmatprep.subr.mxu0 0.0
        %1886 = vmatpush1.msra.mxu0 0.0
        %1887 = vmatprep.subr.mxu0 0.0
        %1888 = vmatpush1.msra.mxu0 0.0
        %1889 = vmatprep.subr.mxu0 0.0
        %1890 = vmatpush1.msra.mxu0 0.0
        %1891 = vmatprep.subr.mxu0 0.0
        %1892 = vmatpush1.msra.mxu0 0.0
        %1893 = vmatprep.subr.mxu0 0.0
        %1894 = vmatpush1.msra.mxu0 0.0
        %1895 = vmatprep.subr.mxu0 0.0
        %1896 = vmatpush1.msra.mxu0 0.0
        %1897 = vmatprep.subr.mxu0 0.0
        %1898 = vmatpush1.msra.mxu0 0.0
        %1899 = vmatprep.subr.mxu0 0.0
        %1900 = vmatpush1.msra.mxu0 0.0
        %1901 = vmatprep.subr.mxu0 0.0
        %1902 = vmatpush1.msra.mxu0 0.0
        %1903 = vmatprep.subr.mxu0 0.0
        %1904 = vmatpush1.msra.mxu0 0.0
        %1905 = vmatprep.subr.mxu0 0.0
        %1906 = vmatpush1.msra.mxu0 0.0
        %1907 = vmatprep.subr.mxu0 0.0
        %1908 = vmatpush1.msra.mxu0 0.0
        %1909 = vmatprep.subr.mxu0 0.0
        %1910 = vmatpush1.msra.mxu0 0.0
        %1911 = vmatprep.subr.mxu0 0.0
        %1912 = vmatpush1.msra.mxu0 0.0
        %1913 = vmatprep.subr.mxu0 0.0
        %1914 = vmatpush1.msra.mxu0 0.0
        %1915 = vmatprep.subr.mxu0 0.0
        %1916 = vmatpush1.msra.mxu0 0.0
        %1917 = vmatprep.subr.mxu0 0.0
        %1918 = vmatpush1.msra.mxu0 0.0
        %1919 = vmatprep.subr.mxu0 0.0
        %1920 = vmatpush1.msra.mxu0 0.0
        %1921 = vmatprep.subr.mxu0 0.0
        %1922 = vmatpush1.msra.mxu0 0.0
        %1923 = vmatprep.subr.mxu0 0.0
        %1924 = vmatpush1.msra.mxu0 0.0
        %1925 = vmatprep.subr.mxu0 0.0
        %1926 = vmatpush1.msra.mxu0 0.0
        %1927 = vmatprep.subr.mxu0 0.0
        %1928 = vmatpush1.msra.mxu0 0.0
        %1929 = vmatprep.subr.mxu0 0.0
        %1930 = vmatpush1.msra.mxu0 0.0
        %1931 = vmatprep.subr.mxu0 0.0
        %1932 = vmatpush1.msra.mxu0 0.0
        %1933 = vmatprep.subr.mxu0 0.0
        %1934 = vmatpush1.msra.mxu0 0.0
        %1935 = vmatprep.mubr.f32.mxu0 0.0
        %1936 = vmatmul.mubr.f32.gmra.mrb[0].mxu0 %v1869
        %v1937 = vpop.f32.mrb[0].mxu0
        %v1938 = vadd.f32 %v1589, %v1937
        %v1939 = vpop.f32.mrb[0].mxu0
        %1940 = vdwg.mxu0
        %v1941 = vsel %vm955, %v589, 0
        %1943 = vmatprep.subr.mxu0 0.0
        %1944 = vmatpush1.msra.mxu0 %v1749
        %1945 = vmatprep.subr.mxu0 0.0
        %1946 = vmatpush1.msra.mxu0 0.0
        %1947 = vmatprep.subr.mxu0 0.0
        %1948 = vmatpush1.msra.mxu0 0.0
        %1949 = vmatprep.subr.mxu0 0.0
        %1950 = vmatpush1.msra.mxu0 0.0
        %1951 = vmatprep.subr.mxu0 0.0
        %1952 = vmatpush1.msra.mxu0 0.0
        %1953 = vmatprep.subr.mxu0 0.0
        %1954 = vmatpush1.msra.mxu0 0.0
        %1955 = vmatprep.subr.mxu0 0.0
        %1956 = vmatpush1.msra.mxu0 0.0
        %1957 = vmatprep.subr.mxu0 0.0
        %1958 = vmatpush1.msra.mxu0 0.0
        %1959 = vmatprep.subr.mxu0 0.0
        %1960 = vmatpush1.msra.mxu0 0.0
        %1961 = vmatprep.subr.mxu0 0.0
        %1962 = vmatpush1.msra.mxu0 0.0
        %1963 = vmatprep.subr.mxu0 0.0
        %1964 = vmatpush1.msra.mxu0 0.0
        %1965 = vmatprep.subr.mxu0 0.0
        %1966 = vmatpush1.msra.mxu0 0.0
        %1967 = vmatprep.subr.mxu0 0.0
        %1968 = vmatpush1.msra.mxu0 0.0
        %1969 = vmatprep.subr.mxu0 0.0
        %1970 = vmatpush1.msra.mxu0 0.0
        %1971 = vmatprep.subr.mxu0 0.0
        %1972 = vmatpush1.msra.mxu0 0.0
        %1973 = vmatprep.subr.mxu0 0.0
        %1974 = vmatpush1.msra.mxu0 0.0
        %1975 = vmatprep.subr.mxu0 0.0
        %1976 = vmatpush1.msra.mxu0 0.0
        %1977 = vmatprep.subr.mxu0 0.0
        %1978 = vmatpush1.msra.mxu0 0.0
        %1979 = vmatprep.subr.mxu0 0.0
        %1980 = vmatpush1.msra.mxu0 0.0
        %1981 = vmatprep.subr.mxu0 0.0
        %1982 = vmatpush1.msra.mxu0 0.0
        %1983 = vmatprep.subr.mxu0 0.0
        %1984 = vmatpush1.msra.mxu0 0.0
        %1985 = vmatprep.subr.mxu0 0.0
        %1986 = vmatpush1.msra.mxu0 0.0
        %1987 = vmatprep.subr.mxu0 0.0
        %1988 = vmatpush1.msra.mxu0 0.0
        %1989 = vmatprep.subr.mxu0 0.0
        %1990 = vmatpush1.msra.mxu0 0.0
        %1991 = vmatprep.subr.mxu0 0.0
        %1992 = vmatpush1.msra.mxu0 0.0
        %1993 = vmatprep.subr.mxu0 0.0
        %1994 = vmatpush1.msra.mxu0 0.0
        %1995 = vmatprep.subr.mxu0 0.0
        %1996 = vmatpush1.msra.mxu0 0.0
        %1997 = vmatprep.subr.mxu0 0.0
        %1998 = vmatpush1.msra.mxu0 0.0
        %1999 = vmatprep.subr.mxu0 0.0
        %2000 = vmatpush1.msra.mxu0 0.0
        %2001 = vmatprep.subr.mxu0 0.0
        %2002 = vmatpush1.msra.mxu0 0.0
        %2003 = vmatprep.subr.mxu0 0.0
        %2004 = vmatpush1.msra.mxu0 0.0
        %2005 = vmatprep.subr.mxu0 0.0
        %2006 = vmatpush1.msra.mxu0 0.0
        %2007 = vmatprep.mubr.f32.mxu0 0.0
        %2008 = vmatmul.mubr.f32.gmra.mrb[0].mxu0 %v1941
        %v2009 = vpop.f32.mrb[0].mxu0
        %v2010 = vadd.f32 %v1621, %v2009
        %v2011 = vpop.f32.mrb[0].mxu0
        %2012 = vdwg.mxu0
        %v2013 = vsel %vm955, %v591, 0
        %2015 = vmatprep.subr.mxu0 0.0
        %2016 = vmatpush1.msra.mxu0 %v1781
        %2017 = vmatprep.subr.mxu0 0.0
        %2018 = vmatpush1.msra.mxu0 0.0
        %2019 = vmatprep.subr.mxu0 0.0
        %2020 = vmatpush1.msra.mxu0 0.0
        %2021 = vmatprep.subr.mxu0 0.0
        %2022 = vmatpush1.msra.mxu0 0.0
        %2023 = vmatprep.subr.mxu0 0.0
        %2024 = vmatpush1.msra.mxu0 0.0
        %2025 = vmatprep.subr.mxu0 0.0
        %2026 = vmatpush1.msra.mxu0 0.0
        %2027 = vmatprep.subr.mxu0 0.0
        %2028 = vmatpush1.msra.mxu0 0.0
        %2029 = vmatprep.subr.mxu0 0.0
        %2030 = vmatpush1.msra.mxu0 0.0
        %2031 = vmatprep.subr.mxu0 0.0
        %2032 = vmatpush1.msra.mxu0 0.0
        %2033 = vmatprep.subr.mxu0 0.0
        %2034 = vmatpush1.msra.mxu0 0.0
        %2035 = vmatprep.subr.mxu0 0.0
        %2036 = vmatpush1.msra.mxu0 0.0
        %2037 = vmatprep.subr.mxu0 0.0
        %2038 = vmatpush1.msra.mxu0 0.0
        %2039 = vmatprep.subr.mxu0 0.0
        %2040 = vmatpush1.msra.mxu0 0.0
        %2041 = vmatprep.subr.mxu0 0.0
        %2042 = vmatpush1.msra.mxu0 0.0
        %2043 = vmatprep.subr.mxu0 0.0
        %2044 = vmatpush1.msra.mxu0 0.0
        %2045 = vmatprep.subr.mxu0 0.0
        %2046 = vmatpush1.msra.mxu0 0.0
        %2047 = vmatprep.subr.mxu0 0.0
        %2048 = vmatpush1.msra.mxu0 0.0
        %2049 = vmatprep.subr.mxu0 0.0
        %2050 = vmatpush1.msra.mxu0 0.0
        %2051 = vmatprep.subr.mxu0 0.0
        %2052 = vmatpush1.msra.mxu0 0.0
        %2053 = vmatprep.subr.mxu0 0.0
        %2054 = vmatpush1.msra.mxu0 0.0
        %2055 = vmatprep.subr.mxu0 0.0
        %2056 = vmatpush1.msra.mxu0 0.0
        %2057 = vmatprep.subr.mxu0 0.0
        %2058 = vmatpush1.msra.mxu0 0.0
        %2059 = vmatprep.subr.mxu0 0.0
        %2060 = vmatpush1.msra.mxu0 0.0
        %2061 = vmatprep.subr.mxu0 0.0
        %2062 = vmatpush1.msra.mxu0 0.0
        %2063 = vmatprep.subr.mxu0 0.0
        %2064 = vmatpush1.msra.mxu0 0.0
        %2065 = vmatprep.subr.mxu0 0.0
        %2066 = vmatpush1.msra.mxu0 0.0
        %2067 = vmatprep.subr.mxu0 0.0
        %2068 = vmatpush1.msra.mxu0 0.0
        %2069 = vmatprep.subr.mxu0 0.0
        %2070 = vmatpush1.msra.mxu0 0.0
        %2071 = vmatprep.subr.mxu0 0.0
        %2072 = vmatpush1.msra.mxu0 0.0
        %2073 = vmatprep.subr.mxu0 0.0
        %2074 = vmatpush1.msra.mxu0 0.0
        %2075 = vmatprep.subr.mxu0 0.0
        %2076 = vmatpush1.msra.mxu0 0.0
        %2077 = vmatprep.subr.mxu0 0.0
        %2078 = vmatpush1.msra.mxu0 0.0
        %2079 = vmatprep.mubr.f32.mxu0 0.0
        %2080 = vmatmul.mubr.f32.gmra.mrb[0].mxu0 %v2013
        %v2081 = vpop.f32.mrb[0].mxu0
        %v2082 = vadd.f32 %v1653, %v2081
        %v2083 = vpop.f32.mrb[0].mxu0
        %2084 = vdwg.mxu0
        %v2085 = vsel %vm955, %v1866, -inf
        %2086 = vmax.xlane.f32.xlu0 %v2085
        %v2087 = vpop.xlane.xlu0 %2086
        %v2088 = vsel %vm955, %v1938, -inf
        %2089 = vmax.xlane.f32.xlu0 %v2088
        %v2090 = vpop.xlane.xlu0 %2089
        %v2091 = vsel %vm955, %v2010, -inf
        %2092 = vmax.xlane.f32.xlu0 %v2091
        %v2093 = vpop.xlane.xlu0 %2092
        %v2094 = vsel %vm955, %v2082, -inf
        %2095 = vmax.xlane.f32.xlu0 %v2094
        %v2096 = vpop.xlane.xlu0 %2095
        %v2097 = vsub.f32 %v1866, %v2087
        %v2098 = vsub.f32 %v1938, %v2090
        %v2099 = vsub.f32 %v2010, %v2093
        %v2100 = vsub.f32 %v2082, %v2096
        %v2101 = vmul.f32 %v2097, 1.442695
        %v2102 = vpow.pop %v2101
        %v2103 = vmul.f32 %v2098, 1.442695
        %v2104 = vpow.pop %v2103
        %v2105 = vmul.f32 %v2099, 1.442695
        %v2106 = vpow.pop %v2105
        %v2107 = vmul.f32 %v2100, 1.442695
        %v2108 = vpow.pop %v2107
        %v2109 = vsel %vm955, %v2102, 0.0
        %2110 = vadd.xlane.f32.xlu0 %v2109
        %v2111 = vpop.xlane.xlu0 %2110
        %v2112 = vsel %vm955, %v2104, 0.0
        %2113 = vadd.xlane.f32.xlu0 %v2112
        %v2114 = vpop.xlane.xlu0 %2113
        %v2115 = vsel %vm955, %v2106, 0.0
        %2116 = vadd.xlane.f32.xlu0 %v2115
        %v2117 = vpop.xlane.xlu0 %2116
        %v2118 = vsel %vm955, %v2108, 0.0
        %2119 = vadd.xlane.f32.xlu0 %v2118
        %v2120 = vpop.xlane.xlu0 %2119
        %v2121 = vrcp.pop %v2111
        %v2122 = vrcp.pop %v2114
        %v2123 = vrcp.pop %v2117
        %v2124 = vrcp.pop %v2120
        %v2125 = vmul.f32 %v2102, %v2121
        %v2126 = vmul.f32 %v2104, %v2122
        %v2127 = vmul.f32 %v2106, %v2123
        %v2128 = vmul.f32 %v2108, %v2124
        %2129 = vrot.lane.b32.xlu0 %v582, 96
        %v2130 = vpop.permute.xlu0 %2129
        %2131 = vrot.lane.b32.xlu0 %v594, 96
        %v2132 = vpop.permute.xlu0 %2131
        %2133 = vrot.lane.b32.xlu0 %v597, 96
        %v2134 = vpop.permute.xlu0 %2133
        %2135 = vrot.lane.b32.xlu0 %v600, 96
        %v2136 = vpop.permute.xlu0 %2135
        %2141 = vxpose.xlu0.b32.start [1/16] %v2130, 128
        %2142 = vxpose.xlu0.b32.cont [2/16] 0.0, 128
        %2143 = vxpose.xlu0.b32.cont [3/16] 0.0, 128
        %2144 = vxpose.xlu0.b32.cont [4/16] 0.0, 128
        %2145 = vxpose.xlu0.b32.cont [5/16] 0.0, 128
        %2146 = vxpose.xlu0.b32.cont [6/16] 0.0, 128
        %2147 = vxpose.xlu0.b32.cont [7/16] 0.0, 128
        %2148 = vxpose.xlu0.b32.cont [8/16] 0.0, 128
        %2149 = vxpose.xlu0.b32.cont [9/16] 0.0, 128
        %2150 = vxpose.xlu0.b32.cont [10/16] 0.0, 128
        %2151 = vxpose.xlu0.b32.cont [11/16] 0.0, 128
        %2152 = vxpose.xlu0.b32.cont [12/16] 0.0, 128
        %2153 = vxpose.xlu0.b32.cont [13/16] 0.0, 128
        %2154 = vxpose.xlu0.b32.cont [14/16] 0.0, 128
        %2155 = vxpose.xlu0.b32.cont [15/16] 0.0, 128
        %2156 = vxpose.xlu0.b32.end [16/16] 0.0, 128
        %v2157 = vpop.trf.xlu0
        %v2158 = vpop.trf.xlu0
        %v2159 = vpop.trf.xlu0
        %v2160 = vpop.trf.xlu0
        %v2161 = vpop.trf.xlu0
        %v2162 = vpop.trf.xlu0
        %v2163 = vpop.trf.xlu0
        %v2164 = vpop.trf.xlu0
        %v2165 = vpop.trf.xlu0
        %v2166 = vpop.trf.xlu0
        %v2167 = vpop.trf.xlu0
        %v2168 = vpop.trf.xlu0
        %v2169 = vpop.trf.xlu0
        %v2170 = vpop.trf.xlu0
        %v2171 = vpop.trf.xlu0
        %v2172 = vpop.trf.xlu0
        %2173 = vxpose.xlu0.b32.start [1/16] %v2132, 128
        %2174 = vxpose.xlu0.b32.cont [2/16] 0.0, 128
        %2175 = vxpose.xlu0.b32.cont [3/16] 0.0, 128
        %2176 = vxpose.xlu0.b32.cont [4/16] 0.0, 128
        %2177 = vxpose.xlu0.b32.cont [5/16] 0.0, 128
        %2178 = vxpose.xlu0.b32.cont [6/16] 0.0, 128
        %2179 = vxpose.xlu0.b32.cont [7/16] 0.0, 128
        %2180 = vxpose.xlu0.b32.cont [8/16] 0.0, 128
        %2181 = vxpose.xlu0.b32.cont [9/16] 0.0, 128
        %2182 = vxpose.xlu0.b32.cont [10/16] 0.0, 128
        %2183 = vxpose.xlu0.b32.cont [11/16] 0.0, 128
        %2184 = vxpose.xlu0.b32.cont [12/16] 0.0, 128
        %2185 = vxpose.xlu0.b32.cont [13/16] 0.0, 128
        %2186 = vxpose.xlu0.b32.cont [14/16] 0.0, 128
        %2187 = vxpose.xlu0.b32.cont [15/16] 0.0, 128
        %2188 = vxpose.xlu0.b32.end [16/16] 0.0, 128
        %v2189 = vpop.trf.xlu0
        %v2190 = vpop.trf.xlu0
        %v2191 = vpop.trf.xlu0
        %v2192 = vpop.trf.xlu0
        %v2193 = vpop.trf.xlu0
        %v2194 = vpop.trf.xlu0
        %v2195 = vpop.trf.xlu0
        %v2196 = vpop.trf.xlu0
        %v2197 = vpop.trf.xlu0
        %v2198 = vpop.trf.xlu0
        %v2199 = vpop.trf.xlu0
        %v2200 = vpop.trf.xlu0
        %v2201 = vpop.trf.xlu0
        %v2202 = vpop.trf.xlu0
        %v2203 = vpop.trf.xlu0
        %v2204 = vpop.trf.xlu0
        %2205 = vxpose.xlu0.b32.start [1/16] %v2134, 128
        %2206 = vxpose.xlu0.b32.cont [2/16] 0.0, 128
        %2207 = vxpose.xlu0.b32.cont [3/16] 0.0, 128
        %2208 = vxpose.xlu0.b32.cont [4/16] 0.0, 128
        %2209 = vxpose.xlu0.b32.cont [5/16] 0.0, 128
        %2210 = vxpose.xlu0.b32.cont [6/16] 0.0, 128
        %2211 = vxpose.xlu0.b32.cont [7/16] 0.0, 128
        %2212 = vxpose.xlu0.b32.cont [8/16] 0.0, 128
        %2213 = vxpose.xlu0.b32.cont [9/16] 0.0, 128
        %2214 = vxpose.xlu0.b32.cont [10/16] 0.0, 128
        %2215 = vxpose.xlu0.b32.cont [11/16] 0.0, 128
        %2216 = vxpose.xlu0.b32.cont [12/16] 0.0, 128
        %2217 = vxpose.xlu0.b32.cont [13/16] 0.0, 128
        %2218 = vxpose.xlu0.b32.cont [14/16] 0.0, 128
        %2219 = vxpose.xlu0.b32.cont [15/16] 0.0, 128
        %2220 = vxpose.xlu0.b32.end [16/16] 0.0, 128
        %v2221 = vpop.trf.xlu0
        %v2222 = vpop.trf.xlu0
        %v2223 = vpop.trf.xlu0
        %v2224 = vpop.trf.xlu0
        %v2225 = vpop.trf.xlu0
        %v2226 = vpop.trf.xlu0
        %v2227 = vpop.trf.xlu0
        %v2228 = vpop.trf.xlu0
        %v2229 = vpop.trf.xlu0
        %v2230 = vpop.trf.xlu0
        %v2231 = vpop.trf.xlu0
        %v2232 = vpop.trf.xlu0
        %v2233 = vpop.trf.xlu0
        %v2234 = vpop.trf.xlu0
        %v2235 = vpop.trf.xlu0
        %v2236 = vpop.trf.xlu0
        %2237 = vxpose.xlu0.b32.start [1/16] %v2136, 128
        %2238 = vxpose.xlu0.b32.cont [2/16] 0.0, 128
        %2239 = vxpose.xlu0.b32.cont [3/16] 0.0, 128
        %2240 = vxpose.xlu0.b32.cont [4/16] 0.0, 128
        %2241 = vxpose.xlu0.b32.cont [5/16] 0.0, 128
        %2242 = vxpose.xlu0.b32.cont [6/16] 0.0, 128
        %2243 = vxpose.xlu0.b32.cont [7/16] 0.0, 128
        %2244 = vxpose.xlu0.b32.cont [8/16] 0.0, 128
        %2245 = vxpose.xlu0.b32.cont [9/16] 0.0, 128
        %2246 = vxpose.xlu0.b32.cont [10/16] 0.0, 128
        %2247 = vxpose.xlu0.b32.cont [11/16] 0.0, 128
        %2248 = vxpose.xlu0.b32.cont [12/16] 0.0, 128
        %2249 = vxpose.xlu0.b32.cont [13/16] 0.0, 128
        %2250 = vxpose.xlu0.b32.cont [14/16] 0.0, 128
        %2251 = vxpose.xlu0.b32.cont [15/16] 0.0, 128
        %2252 = vxpose.xlu0.b32.end [16/16] 0.0, 128
        %v2253 = vpop.trf.xlu0
        %v2254 = vpop.trf.xlu0
        %v2255 = vpop.trf.xlu0
        %v2256 = vpop.trf.xlu0
        %v2257 = vpop.trf.xlu0
        %v2258 = vpop.trf.xlu0
        %v2259 = vpop.trf.xlu0
        %v2260 = vpop.trf.xlu0
        %v2261 = vpop.trf.xlu0
        %v2262 = vpop.trf.xlu0
        %v2263 = vpop.trf.xlu0
        %v2264 = vpop.trf.xlu0
        %v2265 = vpop.trf.xlu0
        %v2266 = vpop.trf.xlu0
        %v2267 = vpop.trf.xlu0
        %v2268 = vpop.trf.xlu0
        %v2270 = vsel %vm955, %v2157, 0
        %v2273 = vsel %vm955, %v2125, 0
        %2275 = vmatprep.subr.mxu0 0.0
        %2276 = vmatpush1.xpose.msra.mxu0 %v2273
        %2277 = vmatprep.subr.mxu0 0.0
        %2278 = vmatpush1.xpose.msra.mxu0 0.0
        %2279 = vmatprep.subr.mxu0 0.0
        %2280 = vmatpush1.xpose.msra.mxu0 0.0
        %2281 = vmatprep.subr.mxu0 0.0
        %2282 = vmatpush1.xpose.msra.mxu0 0.0
        %2283 = vmatprep.subr.mxu0 0.0
        %2284 = vmatpush1.xpose.msra.mxu0 0.0
        %2285 = vmatprep.subr.mxu0 0.0
        %2286 = vmatpush1.xpose.msra.mxu0 0.0
        %2287 = vmatprep.subr.mxu0 0.0
        %2288 = vmatpush1.xpose.msra.mxu0 0.0
        %2289 = vmatprep.subr.mxu0 0.0
        %2290 = vmatpush1.xpose.msra.mxu0 0.0
        %2291 = vmatprep.subr.mxu0 0.0
        %2292 = vmatpush1.xpose.msra.mxu0 0.0
        %2293 = vmatprep.subr.mxu0 0.0
        %2294 = vmatpush1.xpose.msra.mxu0 0.0
        %2295 = vmatprep.subr.mxu0 0.0
        %2296 = vmatpush1.xpose.msra.mxu0 0.0
        %2297 = vmatprep.subr.mxu0 0.0
        %2298 = vmatpush1.xpose.msra.mxu0 0.0
        %2299 = vmatprep.subr.mxu0 0.0
        %2300 = vmatpush1.xpose.msra.mxu0 0.0
        %2301 = vmatprep.subr.mxu0 0.0
        %2302 = vmatpush1.xpose.msra.mxu0 0.0
        %2303 = vmatprep.subr.mxu0 0.0
        %2304 = vmatpush1.xpose.msra.mxu0 0.0
        %2305 = vmatprep.subr.mxu0 0.0
        %2306 = vmatpush1.xpose.msra.mxu0 0.0
        %2307 = vmatprep.subr.mxu0 0.0
        %2308 = vmatpush1.xpose.msra.mxu0 0.0
        %2309 = vmatprep.subr.mxu0 0.0
        %2310 = vmatpush1.xpose.msra.mxu0 0.0
        %2311 = vmatprep.subr.mxu0 0.0
        %2312 = vmatpush1.xpose.msra.mxu0 0.0
        %2313 = vmatprep.subr.mxu0 0.0
        %2314 = vmatpush1.xpose.msra.mxu0 0.0
        %2315 = vmatprep.subr.mxu0 0.0
        %2316 = vmatpush1.xpose.msra.mxu0 0.0
        %2317 = vmatprep.subr.mxu0 0.0
        %2318 = vmatpush1.xpose.msra.mxu0 0.0
        %2319 = vmatprep.subr.mxu0 0.0
        %2320 = vmatpush1.xpose.msra.mxu0 0.0
        %2321 = vmatprep.subr.mxu0 0.0
        %2322 = vmatpush1.xpose.msra.mxu0 0.0
        %2323 = vmatprep.subr.mxu0 0.0
        %2324 = vmatpush1.xpose.msra.mxu0 0.0
        %2325 = vmatprep.subr.mxu0 0.0
        %2326 = vmatpush1.xpose.msra.mxu0 0.0
        %2327 = vmatprep.subr.mxu0 0.0
        %2328 = vmatpush1.xpose.msra.mxu0 0.0
        %2329 = vmatprep.subr.mxu0 0.0
        %2330 = vmatpush1.xpose.msra.mxu0 0.0
        %2331 = vmatprep.subr.mxu0 0.0
        %2332 = vmatpush1.xpose.msra.mxu0 0.0
        %2333 = vmatprep.subr.mxu0 0.0
        %2334 = vmatpush1.xpose.msra.mxu0 0.0
        %2335 = vmatprep.subr.mxu0 0.0
        %2336 = vmatpush1.xpose.msra.mxu0 0.0
        %2337 = vmatprep.subr.mxu0 0.0
        %2338 = vmatpush1.xpose.msra.mxu0 0.0
        %2339 = vmatprep.mubr.f32.mxu0 0.0
        %2340 = vmatmul.mubr.f32.gmra.mrb[0].mxu0 %v2270
        %v2341 = vpop.f32.mrb[0].mxu0
        %v2342 = vadd.f32 0.0, %v2341
        %v2343 = vpop.f32.mrb[0].mxu0
        %2344 = vdwg.mxu0
        %v2346 = vsel %vm955, %v2189, 0
        %v2349 = vsel %vm955, %v2126, 0
        %2351 = vmatprep.subr.mxu0 0.0
        %2352 = vmatpush1.xpose.msra.mxu0 %v2349
        %2353 = vmatprep.subr.mxu0 0.0
        %2354 = vmatpush1.xpose.msra.mxu0 0.0
        %2355 = vmatprep.subr.mxu0 0.0
        %2356 = vmatpush1.xpose.msra.mxu0 0.0
        %2357 = vmatprep.subr.mxu0 0.0
        %2358 = vmatpush1.xpose.msra.mxu0 0.0
        %2359 = vmatprep.subr.mxu0 0.0
        %2360 = vmatpush1.xpose.msra.mxu0 0.0
        %2361 = vmatprep.subr.mxu0 0.0
        %2362 = vmatpush1.xpose.msra.mxu0 0.0
        %2363 = vmatprep.subr.mxu0 0.0
        %2364 = vmatpush1.xpose.msra.mxu0 0.0
        %2365 = vmatprep.subr.mxu0 0.0
        %2366 = vmatpush1.xpose.msra.mxu0 0.0
        %2367 = vmatprep.subr.mxu0 0.0
        %2368 = vmatpush1.xpose.msra.mxu0 0.0
        %2369 = vmatprep.subr.mxu0 0.0
        %2370 = vmatpush1.xpose.msra.mxu0 0.0
        %2371 = vmatprep.subr.mxu0 0.0
        %2372 = vmatpush1.xpose.msra.mxu0 0.0
        %2373 = vmatprep.subr.mxu0 0.0
        %2374 = vmatpush1.xpose.msra.mxu0 0.0
        %2375 = vmatprep.subr.mxu0 0.0
        %2376 = vmatpush1.xpose.msra.mxu0 0.0
        %2377 = vmatprep.subr.mxu0 0.0
        %2378 = vmatpush1.xpose.msra.mxu0 0.0
        %2379 = vmatprep.subr.mxu0 0.0
        %2380 = vmatpush1.xpose.msra.mxu0 0.0
        %2381 = vmatprep.subr.mxu0 0.0
        %2382 = vmatpush1.xpose.msra.mxu0 0.0
        %2383 = vmatprep.subr.mxu0 0.0
        %2384 = vmatpush1.xpose.msra.mxu0 0.0
        %2385 = vmatprep.subr.mxu0 0.0
        %2386 = vmatpush1.xpose.msra.mxu0 0.0
        %2387 = vmatprep.subr.mxu0 0.0
        %2388 = vmatpush1.xpose.msra.mxu0 0.0
        %2389 = vmatprep.subr.mxu0 0.0
        %2390 = vmatpush1.xpose.msra.mxu0 0.0
        %2391 = vmatprep.subr.mxu0 0.0
        %2392 = vmatpush1.xpose.msra.mxu0 0.0
        %2393 = vmatprep.subr.mxu0 0.0
        %2394 = vmatpush1.xpose.msra.mxu0 0.0
        %2395 = vmatprep.subr.mxu0 0.0
        %2396 = vmatpush1.xpose.msra.mxu0 0.0
        %2397 = vmatprep.subr.mxu0 0.0
        %2398 = vmatpush1.xpose.msra.mxu0 0.0
        %2399 = vmatprep.subr.mxu0 0.0
        %2400 = vmatpush1.xpose.msra.mxu0 0.0
        %2401 = vmatprep.subr.mxu0 0.0
        %2402 = vmatpush1.xpose.msra.mxu0 0.0
        %2403 = vmatprep.subr.mxu0 0.0
        %2404 = vmatpush1.xpose.msra.mxu0 0.0
        %2405 = vmatprep.subr.mxu0 0.0
        %2406 = vmatpush1.xpose.msra.mxu0 0.0
        %2407 = vmatprep.subr.mxu0 0.0
        %2408 = vmatpush1.xpose.msra.mxu0 0.0
        %2409 = vmatprep.subr.mxu0 0.0
        %2410 = vmatpush1.xpose.msra.mxu0 0.0
        %2411 = vmatprep.subr.mxu0 0.0
        %2412 = vmatpush1.xpose.msra.mxu0 0.0
        %2413 = vmatprep.subr.mxu0 0.0
        %2414 = vmatpush1.xpose.msra.mxu0 0.0
        %2415 = vmatprep.mubr.f32.mxu0 0.0
        %2416 = vmatmul.mubr.f32.gmra.mrb[0].mxu0 %v2346
        %v2417 = vpop.f32.mrb[0].mxu0
        %v2418 = vadd.f32 0.0, %v2417
        %v2419 = vpop.f32.mrb[0].mxu0
        %2420 = vdwg.mxu0
        %v2422 = vsel %vm955, %v2221, 0
        %v2425 = vsel %vm955, %v2127, 0
        %2427 = vmatprep.subr.mxu0 0.0
        %2428 = vmatpush1.xpose.msra.mxu0 %v2425
        %2429 = vmatprep.subr.mxu0 0.0
        %2430 = vmatpush1.xpose.msra.mxu0 0.0
        %2431 = vmatprep.subr.mxu0 0.0
        %2432 = vmatpush1.xpose.msra.mxu0 0.0
        %2433 = vmatprep.subr.mxu0 0.0
        %2434 = vmatpush1.xpose.msra.mxu0 0.0
        %2435 = vmatprep.subr.mxu0 0.0
        %2436 = vmatpush1.xpose.msra.mxu0 0.0
        %2437 = vmatprep.subr.mxu0 0.0
        %2438 = vmatpush1.xpose.msra.mxu0 0.0
        %2439 = vmatprep.subr.mxu0 0.0
        %2440 = vmatpush1.xpose.msra.mxu0 0.0
        %2441 = vmatprep.subr.mxu0 0.0
        %2442 = vmatpush1.xpose.msra.mxu0 0.0
        %2443 = vmatprep.subr.mxu0 0.0
        %2444 = vmatpush1.xpose.msra.mxu0 0.0
        %2445 = vmatprep.subr.mxu0 0.0
        %2446 = vmatpush1.xpose.msra.mxu0 0.0
        %2447 = vmatprep.subr.mxu0 0.0
        %2448 = vmatpush1.xpose.msra.mxu0 0.0
        %2449 = vmatprep.subr.mxu0 0.0
        %2450 = vmatpush1.xpose.msra.mxu0 0.0
        %2451 = vmatprep.subr.mxu0 0.0
        %2452 = vmatpush1.xpose.msra.mxu0 0.0
        %2453 = vmatprep.subr.mxu0 0.0
        %2454 = vmatpush1.xpose.msra.mxu0 0.0
        %2455 = vmatprep.subr.mxu0 0.0
        %2456 = vmatpush1.xpose.msra.mxu0 0.0
        %2457 = vmatprep.subr.mxu0 0.0
        %2458 = vmatpush1.xpose.msra.mxu0 0.0
        %2459 = vmatprep.subr.mxu0 0.0
        %2460 = vmatpush1.xpose.msra.mxu0 0.0
        %2461 = vmatprep.subr.mxu0 0.0
        %2462 = vmatpush1.xpose.msra.mxu0 0.0
        %2463 = vmatprep.subr.mxu0 0.0
        %2464 = vmatpush1.xpose.msra.mxu0 0.0
        %2465 = vmatprep.subr.mxu0 0.0
        %2466 = vmatpush1.xpose.msra.mxu0 0.0
        %2467 = vmatprep.subr.mxu0 0.0
        %2468 = vmatpush1.xpose.msra.mxu0 0.0
        %2469 = vmatprep.subr.mxu0 0.0
        %2470 = vmatpush1.xpose.msra.mxu0 0.0
        %2471 = vmatprep.subr.mxu0 0.0
        %2472 = vmatpush1.xpose.msra.mxu0 0.0
        %2473 = vmatprep.subr.mxu0 0.0
        %2474 = vmatpush1.xpose.msra.mxu0 0.0
        %2475 = vmatprep.subr.mxu0 0.0
        %2476 = vmatpush1.xpose.msra.mxu0 0.0
        %2477 = vmatprep.subr.mxu0 0.0
        %2478 = vmatpush1.xpose.msra.mxu0 0.0
        %2479 = vmatprep.subr.mxu0 0.0
        %2480 = vmatpush1.xpose.msra.mxu0 0.0
        %2481 = vmatprep.subr.mxu0 0.0
        %2482 = vmatpush1.xpose.msra.mxu0 0.0
        %2483 = vmatprep.subr.mxu0 0.0
        %2484 = vmatpush1.xpose.msra.mxu0 0.0
        %2485 = vmatprep.subr.mxu0 0.0
        %2486 = vmatpush1.xpose.msra.mxu0 0.0
        %2487 = vmatprep.subr.mxu0 0.0
        %2488 = vmatpush1.xpose.msra.mxu0 0.0
        %2489 = vmatprep.subr.mxu0 0.0
        %2490 = vmatpush1.xpose.msra.mxu0 0.0
        %2491 = vmatprep.mubr.f32.mxu0 0.0
        %2492 = vmatmul.mubr.f32.gmra.mrb[0].mxu0 %v2422
        %v2493 = vpop.f32.mrb[0].mxu0
        %v2494 = vadd.f32 0.0, %v2493
        %v2495 = vpop.f32.mrb[0].mxu0
        %2496 = vdwg.mxu0
        %v2498 = vsel %vm955, %v2253, 0
        %v2501 = vsel %vm955, %v2128, 0
        %2503 = vmatprep.subr.mxu0 0.0
        %2504 = vmatpush1.xpose.msra.mxu0 %v2501
        %2505 = vmatprep.subr.mxu0 0.0
        %2506 = vmatpush1.xpose.msra.mxu0 0.0
        %2507 = vmatprep.subr.mxu0 0.0
        %2508 = vmatpush1.xpose.msra.mxu0 0.0
        %2509 = vmatprep.subr.mxu0 0.0
        %2510 = vmatpush1.xpose.msra.mxu0 0.0
        %2511 = vmatprep.subr.mxu0 0.0
        %2512 = vmatpush1.xpose.msra.mxu0 0.0
        %2513 = vmatprep.subr.mxu0 0.0
        %2514 = vmatpush1.xpose.msra.mxu0 0.0
        %2515 = vmatprep.subr.mxu0 0.0
        %2516 = vmatpush1.xpose.msra.mxu0 0.0
        %2517 = vmatprep.subr.mxu0 0.0
        %2518 = vmatpush1.xpose.msra.mxu0 0.0
        %2519 = vmatprep.subr.mxu0 0.0
        %2520 = vmatpush1.xpose.msra.mxu0 0.0
        %2521 = vmatprep.subr.mxu0 0.0
        %2522 = vmatpush1.xpose.msra.mxu0 0.0
        %2523 = vmatprep.subr.mxu0 0.0
        %2524 = vmatpush1.xpose.msra.mxu0 0.0
        %2525 = vmatprep.subr.mxu0 0.0
        %2526 = vmatpush1.xpose.msra.mxu0 0.0
        %2527 = vmatprep.subr.mxu0 0.0
        %2528 = vmatpush1.xpose.msra.mxu0 0.0
        %2529 = vmatprep.subr.mxu0 0.0
        %2530 = vmatpush1.xpose.msra.mxu0 0.0
        %2531 = vmatprep.subr.mxu0 0.0
        %2532 = vmatpush1.xpose.msra.mxu0 0.0
        %2533 = vmatprep.subr.mxu0 0.0
        %2534 = vmatpush1.xpose.msra.mxu0 0.0
        %2535 = vmatprep.subr.mxu0 0.0
        %2536 = vmatpush1.xpose.msra.mxu0 0.0
        %2537 = vmatprep.subr.mxu0 0.0
        %2538 = vmatpush1.xpose.msra.mxu0 0.0
        %2539 = vmatprep.subr.mxu0 0.0
        %2540 = vmatpush1.xpose.msra.mxu0 0.0
        %2541 = vmatprep.subr.mxu0 0.0
        %2542 = vmatpush1.xpose.msra.mxu0 0.0
        %2543 = vmatprep.subr.mxu0 0.0
        %2544 = vmatpush1.xpose.msra.mxu0 0.0
        %2545 = vmatprep.subr.mxu0 0.0
        %2546 = vmatpush1.xpose.msra.mxu0 0.0
        %2547 = vmatprep.subr.mxu0 0.0
        %2548 = vmatpush1.xpose.msra.mxu0 0.0
        %2549 = vmatprep.subr.mxu0 0.0
        %2550 = vmatpush1.xpose.msra.mxu0 0.0
        %2551 = vmatprep.subr.mxu0 0.0
        %2552 = vmatpush1.xpose.msra.mxu0 0.0
        %2553 = vmatprep.subr.mxu0 0.0
        %2554 = vmatpush1.xpose.msra.mxu0 0.0
        %2555 = vmatprep.subr.mxu0 0.0
        %2556 = vmatpush1.xpose.msra.mxu0 0.0
        %2557 = vmatprep.subr.mxu0 0.0
        %2558 = vmatpush1.xpose.msra.mxu0 0.0
        %2559 = vmatprep.subr.mxu0 0.0
        %2560 = vmatpush1.xpose.msra.mxu0 0.0
        %2561 = vmatprep.subr.mxu0 0.0
        %2562 = vmatpush1.xpose.msra.mxu0 0.0
        %2563 = vmatprep.subr.mxu0 0.0
        %2564 = vmatpush1.xpose.msra.mxu0 0.0
        %2565 = vmatprep.subr.mxu0 0.0
        %2566 = vmatpush1.xpose.msra.mxu0 0.0
        %2567 = vmatprep.mubr.f32.mxu0 0.0
        %2568 = vmatmul.mubr.f32.gmra.mrb[0].mxu0 %v2498
        %v2569 = vpop.f32.mrb[0].mxu0
        %v2570 = vadd.f32 0.0, %v2569
        %v2571 = vpop.f32.mrb[0].mxu0
        %2572 = vdwg.mxu0
        %2573 = vxpose.xlu0.b32.start [1/16] %v2342, 128
        %2574 = vxpose.xlu0.b32.cont [2/16] 0.0, 128
        %2575 = vxpose.xlu0.b32.cont [3/16] 0.0, 128
        %2576 = vxpose.xlu0.b32.cont [4/16] 0.0, 128
        %2577 = vxpose.xlu0.b32.cont [5/16] 0.0, 128
        %2578 = vxpose.xlu0.b32.cont [6/16] 0.0, 128
        %2579 = vxpose.xlu0.b32.cont [7/16] 0.0, 128
        %2580 = vxpose.xlu0.b32.cont [8/16] 0.0, 128
        %2581 = vxpose.xlu0.b32.cont [9/16] 0.0, 128
        %2582 = vxpose.xlu0.b32.cont [10/16] 0.0, 128
        %2583 = vxpose.xlu0.b32.cont [11/16] 0.0, 128
        %2584 = vxpose.xlu0.b32.cont [12/16] 0.0, 128
        %2585 = vxpose.xlu0.b32.cont [13/16] 0.0, 128
        %2586 = vxpose.xlu0.b32.cont [14/16] 0.0, 128
        %2587 = vxpose.xlu0.b32.cont [15/16] 0.0, 128
        %2588 = vxpose.xlu0.b32.end [16/16] 0.0, 128
        %v2589 = vpop.trf.xlu0
        %v2590 = vpop.trf.xlu0
        %v2591 = vpop.trf.xlu0
        %v2592 = vpop.trf.xlu0
        %v2593 = vpop.trf.xlu0
        %v2594 = vpop.trf.xlu0
        %v2595 = vpop.trf.xlu0
        %v2596 = vpop.trf.xlu0
        %v2597 = vpop.trf.xlu0
        %v2598 = vpop.trf.xlu0
        %v2599 = vpop.trf.xlu0
        %v2600 = vpop.trf.xlu0
        %v2601 = vpop.trf.xlu0
        %v2602 = vpop.trf.xlu0
        %v2603 = vpop.trf.xlu0
        %v2604 = vpop.trf.xlu0
        %2605 = vxpose.xlu0.b32.start [1/16] %v2418, 128
        %2606 = vxpose.xlu0.b32.cont [2/16] 0.0, 128
        %2607 = vxpose.xlu0.b32.cont [3/16] 0.0, 128
        %2608 = vxpose.xlu0.b32.cont [4/16] 0.0, 128
        %2609 = vxpose.xlu0.b32.cont [5/16] 0.0, 128
        %2610 = vxpose.xlu0.b32.cont [6/16] 0.0, 128
        %2611 = vxpose.xlu0.b32.cont [7/16] 0.0, 128
        %2612 = vxpose.xlu0.b32.cont [8/16] 0.0, 128
        %2613 = vxpose.xlu0.b32.cont [9/16] 0.0, 128
        %2614 = vxpose.xlu0.b32.cont [10/16] 0.0, 128
        %2615 = vxpose.xlu0.b32.cont [11/16] 0.0, 128
        %2616 = vxpose.xlu0.b32.cont [12/16] 0.0, 128
        %2617 = vxpose.xlu0.b32.cont [13/16] 0.0, 128
        %2618 = vxpose.xlu0.b32.cont [14/16] 0.0, 128
        %2619 = vxpose.xlu0.b32.cont [15/16] 0.0, 128
        %2620 = vxpose.xlu0.b32.end [16/16] 0.0, 128
        %v2621 = vpop.trf.xlu0
        %v2622 = vpop.trf.xlu0
        %v2623 = vpop.trf.xlu0
        %v2624 = vpop.trf.xlu0
        %v2625 = vpop.trf.xlu0
        %v2626 = vpop.trf.xlu0
        %v2627 = vpop.trf.xlu0
        %v2628 = vpop.trf.xlu0
        %v2629 = vpop.trf.xlu0
        %v2630 = vpop.trf.xlu0
        %v2631 = vpop.trf.xlu0
        %v2632 = vpop.trf.xlu0
        %v2633 = vpop.trf.xlu0
        %v2634 = vpop.trf.xlu0
        %v2635 = vpop.trf.xlu0
        %v2636 = vpop.trf.xlu0
        %2637 = vxpose.xlu0.b32.start [1/16] %v2494, 128
        %2638 = vxpose.xlu0.b32.cont [2/16] 0.0, 128
        %2639 = vxpose.xlu0.b32.cont [3/16] 0.0, 128
        %2640 = vxpose.xlu0.b32.cont [4/16] 0.0, 128
        %2641 = vxpose.xlu0.b32.cont [5/16] 0.0, 128
        %2642 = vxpose.xlu0.b32.cont [6/16] 0.0, 128
        %2643 = vxpose.xlu0.b32.cont [7/16] 0.0, 128
        %2644 = vxpose.xlu0.b32.cont [8/16] 0.0, 128
        %2645 = vxpose.xlu0.b32.cont [9/16] 0.0, 128
        %2646 = vxpose.xlu0.b32.cont [10/16] 0.0, 128
        %2647 = vxpose.xlu0.b32.cont [11/16] 0.0, 128
        %2648 = vxpose.xlu0.b32.cont [12/16] 0.0, 128
        %2649 = vxpose.xlu0.b32.cont [13/16] 0.0, 128
        %2650 = vxpose.xlu0.b32.cont [14/16] 0.0, 128
        %2651 = vxpose.xlu0.b32.cont [15/16] 0.0, 128
        %2652 = vxpose.xlu0.b32.end [16/16] 0.0, 128
        %v2653 = vpop.trf.xlu0
        %v2654 = vpop.trf.xlu0
        %v2655 = vpop.trf.xlu0
        %v2656 = vpop.trf.xlu0
        %v2657 = vpop.trf.xlu0
        %v2658 = vpop.trf.xlu0
        %v2659 = vpop.trf.xlu0
        %v2660 = vpop.trf.xlu0
        %v2661 = vpop.trf.xlu0
        %v2662 = vpop.trf.xlu0
        %v2663 = vpop.trf.xlu0
        %v2664 = vpop.trf.xlu0
        %v2665 = vpop.trf.xlu0
        %v2666 = vpop.trf.xlu0
        %v2667 = vpop.trf.xlu0
        %v2668 = vpop.trf.xlu0
        %2669 = vxpose.xlu0.b32.start [1/16] %v2570, 128
        %2670 = vxpose.xlu0.b32.cont [2/16] 0.0, 128
        %2671 = vxpose.xlu0.b32.cont [3/16] 0.0, 128
        %2672 = vxpose.xlu0.b32.cont [4/16] 0.0, 128
        %2673 = vxpose.xlu0.b32.cont [5/16] 0.0, 128
        %2674 = vxpose.xlu0.b32.cont [6/16] 0.0, 128
        %2675 = vxpose.xlu0.b32.cont [7/16] 0.0, 128
        %2676 = vxpose.xlu0.b32.cont [8/16] 0.0, 128
        %2677 = vxpose.xlu0.b32.cont [9/16] 0.0, 128
        %2678 = vxpose.xlu0.b32.cont [10/16] 0.0, 128
        %2679 = vxpose.xlu0.b32.cont [11/16] 0.0, 128
        %2680 = vxpose.xlu0.b32.cont [12/16] 0.0, 128
        %2681 = vxpose.xlu0.b32.cont [13/16] 0.0, 128
        %2682 = vxpose.xlu0.b32.cont [14/16] 0.0, 128
        %2683 = vxpose.xlu0.b32.cont [15/16] 0.0, 128
        %2684 = vxpose.xlu0.b32.end [16/16] 0.0, 128
        %v2685 = vpop.trf.xlu0
        %v2686 = vpop.trf.xlu0
        %v2687 = vpop.trf.xlu0
        %v2688 = vpop.trf.xlu0
        %v2689 = vpop.trf.xlu0
        %v2690 = vpop.trf.xlu0
        %v2691 = vpop.trf.xlu0
        %v2692 = vpop.trf.xlu0
        %v2693 = vpop.trf.xlu0
        %v2694 = vpop.trf.xlu0
        %v2695 = vpop.trf.xlu0
        %v2696 = vpop.trf.xlu0
        %v2697 = vpop.trf.xlu0
        %v2698 = vpop.trf.xlu0
        %v2699 = vpop.trf.xlu0
        %v2700 = vpop.trf.xlu0
        %v2701 = vcombine.low %v2589, %v2653
        %v2702 = vcombine.high %v2589, %v2653
        %v2704 = vunpack.c.l.s4 1983009808
        %v2705 = vunpack.c.0.s8 %v2704
        %v2706 = vlaneseq
        %v2707 = vshrl.u32 %v2706, 7
        %v2708 = vsub.s32 %v2705, %v2707
        %v2709 = vrot.slane %v2701, %v2708
        %v2711 = vunpack.c.l.s4 1983009808
        %v2712 = vunpack.c.0.s8 %v2711
        %v2713 = vlaneseq
        %v2714 = vshrl.u32 %v2713, 7
        %v2715 = vsub.s32 %v2712, %v2714
        %v2716 = vrot.slane %v2702, %v2715
        %v2717 = vcombine.low %v2621, %v2685
        %v2718 = vcombine.high %v2621, %v2685
        %v2720 = vunpack.c.l.s4 1983009808
        %v2721 = vunpack.c.0.s8 %v2720
        %v2722 = vlaneseq
        %v2723 = vshrl.u32 %v2722, 7
        %v2724 = vsub.s32 %v2721, %v2723
        %v2725 = vrot.slane %v2717, %v2724
        %v2727 = vunpack.c.l.s4 1983009808
        %v2728 = vunpack.c.0.s8 %v2727
        %v2729 = vlaneseq
        %v2730 = vshrl.u32 %v2729, 7
        %v2731 = vsub.s32 %v2728, %v2730
        %v2732 = vrot.slane %v2718, %v2731
        %v2733 = vcombine.low %v2709, %v2725
        %v2734 = vcombine.high %v2709, %v2725
        %v2736 = vunpack.c.l.s4 1934713408
        %v2737 = vunpack.c.0.s8 %v2736
        %v2738 = vlaneseq
        %v2739 = vshrl.u32 %v2738, 7
        %v2740 = vsub.s32 %v2737, %v2739
        %v2741 = vrot.slane %v2733, %v2740
        %v2743 = vunpack.c.l.s4 1934713408
        %v2744 = vunpack.c.0.s8 %v2743
        %v2745 = vlaneseq
        %v2746 = vshrl.u32 %v2745, 7
        %v2747 = vsub.s32 %v2744, %v2746
        %v2748 = vrot.slane %v2734, %v2747
        %v2749 = vcombine.low %v2716, %v2732
        %v2750 = vcombine.high %v2716, %v2732
        %v2752 = vunpack.c.l.s4 1934713408
        %v2753 = vunpack.c.0.s8 %v2752
        %v2754 = vlaneseq
        %v2755 = vshrl.u32 %v2754, 7
        %v2756 = vsub.s32 %v2753, %v2755
        %v2757 = vrot.slane %v2749, %v2756
        %v2759 = vunpack.c.l.s4 1934713408
        %v2760 = vunpack.c.0.s8 %v2759
        %v2761 = vlaneseq
        %v2762 = vshrl.u32 %v2761, 7
        %v2763 = vsub.s32 %v2760, %v2762
        %v2764 = vrot.slane %v2750, %v2763
        %v2765 = vcombine.high %v2741, 0.0
        %v2766 = vcombine.high %v2748, 0.0
        %v2767 = vcombine.high %v2757, 0.0
        %v2768 = vcombine.high %v2764, 0.0
        %v2769 = vcombine.low %v2741, %v2748
        %v2771 = vunpack.c.l.s4 1983009808
        %v2772 = vunpack.c.0.s8 %v2771
        %v2773 = vlaneseq
        %v2774 = vshrl.u32 %v2773, 7
        %v2775 = vsub.s32 %v2772, %v2774
        %v2776 = vrot.slane %v2769, %v2775
        %v2777 = vcombine.low %v2765, %v2766
        %v2779 = vunpack.c.l.s4 1983009808
        %v2780 = vunpack.c.0.s8 %v2779
        %v2781 = vlaneseq
        %v2782 = vshrl.u32 %v2781, 7
        %v2783 = vsub.s32 %v2780, %v2782
        %v2784 = vrot.slane %v2777, %v2783
        %v2785 = vcombine.low %v2757, %v2764
        %v2787 = vunpack.c.l.s4 1983009808
        %v2788 = vunpack.c.0.s8 %v2787
        %v2789 = vlaneseq
        %v2790 = vshrl.u32 %v2789, 7
        %v2791 = vsub.s32 %v2788, %v2790
        %v2792 = vrot.slane %v2785, %v2791
        %v2793 = vcombine.low %v2767, %v2768
        %v2795 = vunpack.c.l.s4 1983009808
        %v2796 = vunpack.c.0.s8 %v2795
        %v2797 = vlaneseq
        %v2798 = vshrl.u32 %v2797, 7
        %v2799 = vsub.s32 %v2796, %v2798
        %v2800 = vrot.slane %v2793, %v2799
        %v2801 = vcombine.low %v2776, %v2784
        %v2802 = vcombine.high %v2776, %v2784
        %v2804 = vunpack.c.l.s4 1934713408
        %v2805 = vunpack.c.0.s8 %v2804
        %v2806 = vlaneseq
        %v2807 = vshrl.u32 %v2806, 7
        %v2808 = vsub.s32 %v2805, %v2807
        %v2809 = vrot.slane %v2801, %v2808
        %v2811 = vunpack.c.l.s4 1934713408
        %v2812 = vunpack.c.0.s8 %v2811
        %v2813 = vlaneseq
        %v2814 = vshrl.u32 %v2813, 7
        %v2815 = vsub.s32 %v2812, %v2814
        %v2816 = vrot.slane %v2802, %v2815
        %v2817 = vcombine.low %v2792, %v2800
        %v2818 = vcombine.high %v2792, %v2800
        %v2820 = vunpack.c.l.s4 1934713408
        %v2821 = vunpack.c.0.s8 %v2820
        %v2822 = vlaneseq
        %v2823 = vshrl.u32 %v2822, 7
        %v2824 = vsub.s32 %v2821, %v2823
        %v2825 = vrot.slane %v2817, %v2824
        %v2827 = vunpack.c.l.s4 1934713408
        %v2828 = vunpack.c.0.s8 %v2827
        %v2829 = vlaneseq
        %v2830 = vshrl.u32 %v2829, 7
        %v2831 = vsub.s32 %v2828, %v2830
        %v2832 = vrot.slane %v2818, %v2831
        %v2833 = vcombine.low %v2809, %v2825
        %v2834 = vcombine.high %v2809, %v2825
        %v2835 = vcombine.low %v2816, %v2832
        %v2836 = vcombine.high %v2816, %v2832
        %2838 = vrot.lane.b32.xlu0 %v2834, 8
        %v2839 = vpop.permute.xlu0 %2838
        %2842 = vrot.lane.b32.xlu0 %v2835, 16
        %v2843 = vpop.permute.xlu0 %2842
        %2846 = vrot.lane.b32.xlu0 %v2836, 24
        %v2847 = vpop.permute.xlu0 %2846
        %v2849 = vsel %vm955, %v2833, %v2839
        %v2850 = vsel %vm433, %v2849, %v2843
        %v2851 = vsel %vm962, %v2850, %v2847
        %v2852 = vlaneseq
        %v2853 = vshrl.u32 %v2852, 7
        %v2854 = vsub.s32 0, %v2853
        %v2855 = vrot.slane %v290, %v2854
        %v2857 = vsel %vm327, %v2851, 0
        %2859 = vmatprep.subr.mxu0 0.0
        %2860 = vmatpush1.msra.mxu0 %v303
        %2861 = vmatprep.subr.mxu0 0.0
        %2862 = vmatpush1.msra.mxu0 %v304
        %2863 = vmatprep.subr.mxu0 0.0
        %2864 = vmatpush1.msra.mxu0 %v305
        %2865 = vmatprep.subr.mxu0 0.0
        %2866 = vmatpush1.msra.mxu0 %v306
        %2867 = vmatprep.subr.mxu0 0.0
        %2868 = vmatpush1.msra.mxu0 0.0
        %2869 = vmatprep.subr.mxu0 0.0
        %2870 = vmatpush1.msra.mxu0 0.0
        %2871 = vmatprep.subr.mxu0 0.0
        %2872 = vmatpush1.msra.mxu0 0.0
        %2873 = vmatprep.subr.mxu0 0.0
        %2874 = vmatpush1.msra.mxu0 0.0
        %2875 = vmatprep.subr.mxu0 0.0
        %2876 = vmatpush1.msra.mxu0 0.0
        %2877 = vmatprep.subr.mxu0 0.0
        %2878 = vmatpush1.msra.mxu0 0.0
        %2879 = vmatprep.subr.mxu0 0.0
        %2880 = vmatpush1.msra.mxu0 0.0
        %2881 = vmatprep.subr.mxu0 0.0
        %2882 = vmatpush1.msra.mxu0 0.0
        %2883 = vmatprep.subr.mxu0 0.0
        %2884 = vmatpush1.msra.mxu0 0.0
        %2885 = vmatprep.subr.mxu0 0.0
        %2886 = vmatpush1.msra.mxu0 0.0
        %2887 = vmatprep.subr.mxu0 0.0
        %2888 = vmatpush1.msra.mxu0 0.0
        %2889 = vmatprep.subr.mxu0 0.0
        %2890 = vmatpush1.msra.mxu0 0.0
        %2891 = vmatprep.subr.mxu0 0.0
        %2892 = vmatpush1.msra.mxu0 0.0
        %2893 = vmatprep.subr.mxu0 0.0
        %2894 = vmatpush1.msra.mxu0 0.0
        %2895 = vmatprep.subr.mxu0 0.0
        %2896 = vmatpush1.msra.mxu0 0.0
        %2897 = vmatprep.subr.mxu0 0.0
        %2898 = vmatpush1.msra.mxu0 0.0
        %2899 = vmatprep.subr.mxu0 0.0
        %2900 = vmatpush1.msra.mxu0 0.0
        %2901 = vmatprep.subr.mxu0 0.0
        %2902 = vmatpush1.msra.mxu0 0.0
        %2903 = vmatprep.subr.mxu0 0.0
        %2904 = vmatpush1.msra.mxu0 0.0
        %2905 = vmatprep.subr.mxu0 0.0
        %2906 = vmatpush1.msra.mxu0 0.0
        %2907 = vmatprep.subr.mxu0 0.0
        %2908 = vmatpush1.msra.mxu0 0.0
        %2909 = vmatprep.subr.mxu0 0.0
        %2910 = vmatpush1.msra.mxu0 0.0
        %2911 = vmatprep.subr.mxu0 0.0
        %2912 = vmatpush1.msra.mxu0 0.0
        %2913 = vmatprep.subr.mxu0 0.0
        %2914 = vmatpush1.msra.mxu0 0.0
        %2915 = vmatprep.subr.mxu0 0.0
        %2916 = vmatpush1.msra.mxu0 0.0
        %2917 = vmatprep.subr.mxu0 0.0
        %2918 = vmatpush1.msra.mxu0 0.0
        %2919 = vmatprep.subr.mxu0 0.0
        %2920 = vmatpush1.msra.mxu0 0.0
        %2921 = vmatprep.subr.mxu0 0.0
        %2922 = vmatpush1.msra.mxu0 0.0
        %2923 = vmatprep.mubr.f32.mxu0 0.0
        %2924 = vmatmul.mubr.f32.gmra.mrb[0].mxu0 %v2857
        %v2925 = vpop.f32.mrb[0].mxu0
        %v2926 = vadd.f32 %v2855, %v2925
        %v2927 = vpop.f32.mrb[0].mxu0
        %2928 = vdwg.mxu0
        %v2929 = vadd.f32 %v284, %v2926
        %v2930 = vsel %vm327, %v2929, 0.0
        %2931 = vadd.xlane.f32.xlu0 %v2930
        %v2932 = vpop.xlane.xlu0 %2931
        %v2933 = vmul.f32 %v2932, %v331
        %v2934 = vsub.f32 %v2929, %v2933
        %v2935 = vmul.f32 %v2934, %v2934
        %v2936 = vsel %vm327, %v2935, 0.0
        %2937 = vadd.xlane.f32.xlu0 %v2936
        %v2938 = vpop.xlane.xlu0 %2937
        %v2939 = vmul.f32 %v2938, %v331
        %v2940 = vadd.f32 %v2939, 1e-05
        %v2941 = vrsqrt.pop %v2940
        %v2942 = vmul.f32 %v2934, %v2941
        %v2943 = vlaneseq
        %v2944 = vshrl.u32 %v2943, 7
        %v2945 = vsub.s32 0, %v2944
        %v2946 = vrot.slane %v291, %v2945
        %v2947 = vmul.f32 %v2942, %v2946
        %v2948 = vlaneseq
        %v2949 = vshrl.u32 %v2948, 7
        %v2950 = vsub.s32 0, %v2949
        %v2951 = vrot.slane %v292, %v2950
        %v2952 = vadd.f32 %v2947, %v2951
        %v2953 = vlaneseq
        %v2954 = vshrl.u32 %v2953, 7
        %v2955 = vsub.s32 0, %v2954
        %v2956 = vrot.slane %v293, %v2955
        %v2958 = vsel %vm327, %v2952, 0
        %2960 = vmatprep.subr.mxu0 0.0
        %2961 = vmatpush1.msra.mxu0 %v307
        %2962 = vmatprep.subr.mxu0 0.0
        %2963 = vmatpush1.msra.mxu0 %v308
        %2964 = vmatprep.subr.mxu0 0.0
        %2965 = vmatpush1.msra.mxu0 %v309
        %2966 = vmatprep.subr.mxu0 0.0
        %2967 = vmatpush1.msra.mxu0 %v310
        %2968 = vmatprep.subr.mxu0 0.0
        %2969 = vmatpush1.msra.mxu0 0.0
        %2970 = vmatprep.subr.mxu0 0.0
        %2971 = vmatpush1.msra.mxu0 0.0
        %2972 = vmatprep.subr.mxu0 0.0
        %2973 = vmatpush1.msra.mxu0 0.0
        %2974 = vmatprep.subr.mxu0 0.0
        %2975 = vmatpush1.msra.mxu0 0.0
        %2976 = vmatprep.subr.mxu0 0.0
        %2977 = vmatpush1.msra.mxu0 0.0
        %2978 = vmatprep.subr.mxu0 0.0
        %2979 = vmatpush1.msra.mxu0 0.0
        %2980 = vmatprep.subr.mxu0 0.0
        %2981 = vmatpush1.msra.mxu0 0.0
        %2982 = vmatprep.subr.mxu0 0.0
        %2983 = vmatpush1.msra.mxu0 0.0
        %2984 = vmatprep.subr.mxu0 0.0
        %2985 = vmatpush1.msra.mxu0 0.0
        %2986 = vmatprep.subr.mxu0 0.0
        %2987 = vmatpush1.msra.mxu0 0.0
        %2988 = vmatprep.subr.mxu0 0.0
        %2989 = vmatpush1.msra.mxu0 0.0
        %2990 = vmatprep.subr.mxu0 0.0
        %2991 = vmatpush1.msra.mxu0 0.0
        %2992 = vmatprep.subr.mxu0 0.0
        %2993 = vmatpush1.msra.mxu0 0.0
        %2994 = vmatprep.subr.mxu0 0.0
        %2995 = vmatpush1.msra.mxu0 0.0
        %2996 = vmatprep.subr.mxu0 0.0
        %2997 = vmatpush1.msra.mxu0 0.0
        %2998 = vmatprep.subr.mxu0 0.0
        %2999 = vmatpush1.msra.mxu0 0.0
        %3000 = vmatprep.subr.mxu0 0.0
        %3001 = vmatpush1.msra.mxu0 0.0
        %3002 = vmatprep.subr.mxu0 0.0
        %3003 = vmatpush1.msra.mxu0 0.0
        %3004 = vmatprep.subr.mxu0 0.0
        %3005 = vmatpush1.msra.mxu0 0.0
        %3006 = vmatprep.subr.mxu0 0.0
        %3007 = vmatpush1.msra.mxu0 0.0
        %3008 = vmatprep.subr.mxu0 0.0
        %3009 = vmatpush1.msra.mxu0 0.0
        %3010 = vmatprep.subr.mxu0 0.0
        %3011 = vmatpush1.msra.mxu0 0.0
        %3012 = vmatprep.subr.mxu0 0.0
        %3013 = vmatpush1.msra.mxu0 0.0
        %3014 = vmatprep.subr.mxu0 0.0
        %3015 = vmatpush1.msra.mxu0 0.0
        %3016 = vmatprep.subr.mxu0 0.0
        %3017 = vmatpush1.msra.mxu0 0.0
        %3018 = vmatprep.subr.mxu0 0.0
        %3019 = vmatpush1.msra.mxu0 0.0
        %3020 = vmatprep.subr.mxu0 0.0
        %3021 = vmatpush1.msra.mxu0 0.0
        %3022 = vmatprep.subr.mxu0 0.0
        %3023 = vmatpush1.msra.mxu0 0.0
        %3024 = vmatprep.mubr.f32.mxu0 0.0
        %3025 = vmatmul.mubr.f32.gmra.mrb[0].mxu0 %v2958
        %v3026 = vpop.f32.mrb[0].mxu0
        %v3027 = vadd.f32 %v2956, %v3026
        %v3028 = vpop.f32.mrb[0].mxu0
        %3029 = vdwg.mxu0
        %v3030 = vmul.f32 %v3027, 0.5
        %v3031 = vmul.f32 %v3027, 0.044715
        %v3032 = vmul.f32 %v3031, %v3027
        %v3033 = vmul.f32 %v3032, %v3027
        %v3034 = vadd.f32 %v3027, %v3033
        %v3035 = vmul.f32 %v3034, 0.7978846
        %v3036 = vtanh.pop %v3035
        %v3037 = vadd.f32 %v3036, 1.0
        %v3038 = vmul.f32 %v3030, %v3037
        %v3039 = vlaneseq
        %v3040 = vshrl.u32 %v3039, 7
        %v3041 = vsub.s32 0, %v3040
        %v3042 = vrot.slane %v294, %v3041
        %3043 = vmatprep.subr.mxu0 0.0
        %3044 = vmatpush1.msra.mxu0 %v311
        %3045 = vmatprep.subr.mxu0 0.0
        %3046 = vmatpush1.msra.mxu0 %v312
        %3047 = vmatprep.subr.mxu0 0.0
        %3048 = vmatpush1.msra.mxu0 %v313
        %3049 = vmatprep.subr.mxu0 0.0
        %3050 = vmatpush1.msra.mxu0 %v314
        %3051 = vmatprep.subr.mxu0 0.0
        %3052 = vmatpush1.msra.mxu0 %v315
        %3053 = vmatprep.subr.mxu0 0.0
        %3054 = vmatpush1.msra.mxu0 %v316
        %3055 = vmatprep.subr.mxu0 0.0
        %3056 = vmatpush1.msra.mxu0 %v317
        %3057 = vmatprep.subr.mxu0 0.0
        %3058 = vmatpush1.msra.mxu0 %v318
        %3059 = vmatprep.subr.mxu0 0.0
        %3060 = vmatpush1.msra.mxu0 %v319
        %3061 = vmatprep.subr.mxu0 0.0
        %3062 = vmatpush1.msra.mxu0 %v320
        %3063 = vmatprep.subr.mxu0 0.0
        %3064 = vmatpush1.msra.mxu0 %v321
        %3065 = vmatprep.subr.mxu0 0.0
        %3066 = vmatpush1.msra.mxu0 %v322
        %3067 = vmatprep.subr.mxu0 0.0
        %3068 = vmatpush1.msra.mxu0 %v323
        %3069 = vmatprep.subr.mxu0 0.0
        %3070 = vmatpush1.msra.mxu0 %v324
        %3071 = vmatprep.subr.mxu0 0.0
        %3072 = vmatpush1.msra.mxu0 %v325
        %3073 = vmatprep.subr.mxu0 0.0
        %3074 = vmatpush1.msra.mxu0 %v326
        %3075 = vmatprep.subr.mxu0 0.0
        %3076 = vmatpush1.msra.mxu0 0.0
        %3077 = vmatprep.subr.mxu0 0.0
        %3078 = vmatpush1.msra.mxu0 0.0
        %3079 = vmatprep.subr.mxu0 0.0
        %3080 = vmatpush1.msra.mxu0 0.0
        %3081 = vmatprep.subr.mxu0 0.0
        %3082 = vmatpush1.msra.mxu0 0.0
        %3083 = vmatprep.subr.mxu0 0.0
        %3084 = vmatpush1.msra.mxu0 0.0
        %3085 = vmatprep.subr.mxu0 0.0
        %3086 = vmatpush1.msra.mxu0 0.0
        %3087 = vmatprep.subr.mxu0 0.0
        %3088 = vmatpush1.msra.mxu0 0.0
        %3089 = vmatprep.subr.mxu0 0.0
        %3090 = vmatpush1.msra.mxu0 0.0
        %3091 = vmatprep.subr.mxu0 0.0
        %3092 = vmatpush1.msra.mxu0 0.0
        %3093 = vmatprep.subr.mxu0 0.0
        %3094 = vmatpush1.msra.mxu0 0.0
        %3095 = vmatprep.subr.mxu0 0.0
        %3096 = vmatpush1.msra.mxu0 0.0
        %3097 = vmatprep.subr.mxu0 0.0
        %3098 = vmatpush1.msra.mxu0 0.0
        %3099 = vmatprep.subr.mxu0 0.0
        %3100 = vmatpush1.msra.mxu0 0.0
        %3101 = vmatprep.subr.mxu0 0.0
        %3102 = vmatpush1.msra.mxu0 0.0
        %3103 = vmatprep.subr.mxu0 0.0
        %3104 = vmatpush1.msra.mxu0 0.0
        %3105 = vmatprep.subr.mxu0 0.0
        %3106 = vmatpush1.msra.mxu0 0.0
        %3107 = vmatprep.mubr.f32.mxu0 0.0
        %3108 = vmatmul.mubr.f32.gmra.mrb[0].mxu0 %v3038
        %v3109 = vpop.f32.mrb[0].mxu0
        %v3110 = vadd.f32 %v3042, %v3109
        %v3111 = vpop.f32.mrb[0].mxu0
        %3112 = vdwg.mxu0
        %v3113 = vadd.f32 %v2929, %v3110
        %3114 = vst.msk [vmem:[%s283] sm:$0xff] %vm327, %v3113
        %s3115 = sand.u32 %s142, 1
        %s3116 = scalar_lea.sflag [#allocation4], %s3115
        %s3117 = sand.u32 %s142, 1
        %s3118 = smul.addr %s3117, 8
        %s3119 = scalar_lea.vmem [#allocation10], %s3118
        // Predicated region
        $region57: #{tpu_custom_call.1} parent=39 // pred_check
          %p3120 = pneg %p152
        $region58: #{tpu_custom_call.1} parent=39 // pred_check_branch
          %3122 = sbr.rel (%p3120) target = $region60
        $region59: #{tpu_custom_call.1} parent=39 // pred_region
          %s3124 = ssub.s32 128, 128
          %3125 = vsyncadd %s3116, %s3124
          %s3126 = smul.addr %s24, 128
          %s3127 = scalar_lea.hbm %s5, %s3126
          %s3129 = sshll.u32 %s3119, 4
          %s3130 = int_to_ptr.vmem [resolvable:$true] %s3129
          %3132 = dma.vmem_to_hbm [thread:$0]  %s3130, 128, %s3127, %s3116
        $region60: #{tpu_custom_call.1} parent=39 // pred_fallthru
          _
      $region40: #{tpu_custom_call.1} parent=5 // pred_fallthru
        _
      %p3133 = scmp.le.s32.totalorder 2, %s19
      // Predicated region
      $region61: #{tpu_custom_call.1} parent=5 // pred_check
        %p3134 = pneg %p3133
      $region62: #{tpu_custom_call.1} parent=5 // pred_check_branch
        %3136 = sbr.rel (%p3134) target = $region64
      $region63: #{tpu_custom_call.1} parent=5 // pred_region
        %s3137 = ssub.s32 %s19, 2
        // Predicated region
        $region65: #{tpu_custom_call.1} parent=63 // pred_check
          %p3138 = pneg %p158
        $region66: #{tpu_custom_call.1} parent=63 // pred_check_branch
          %3140 = sbr.rel (%p3138) target = $region68
        $region67: #{tpu_custom_call.1} parent=63 // pred_region
          %s3141 = sand.u32 %s143, 1
          %s3142 = scalar_lea.sflag [#allocation4], %s3141
          %s3143 = sand.u32 %s143, 1
          %s3144 = smul.addr %s3143, 8
          %s3145 = scalar_lea.vmem [#allocation10], %s3144
          %3146 = dma.done %s3142, 128
        $region68: #{tpu_custom_call.1} parent=63 // pred_fallthru
          _
      $region64: #{tpu_custom_call.1} parent=5 // pred_fallthru
        _
    $region6: #{tpu_custom_call.1} parent=1 // loop_footer
      %s23 = sadd.s32 1, %s19
    $region7: #{tpu_custom_call.1} parent=1 // loop_footer_branch
      %18 = sbr.rel target = $region3
    $region8: #{tpu_custom_call.1} parent=1 // loop_exit
      _
    %3147 = vsyncpa [#allocation3], 1
    %s3148 = scalar_lea.sflag [#allocation3], 1
    %3149 = vsyncpa %s3148, 1
    %3150 = vsyncpa [#allocation6], 1
    %3151 = vsyncpa [#allocation9], 1
    %3152 = vsyncpa [#allocation4], 1
    %s3153 = scalar_lea.sflag [#allocation4], 1
    %3154 = vsyncpa %s3153, 1

</llo_original>
